<compile_context>
chip_gen: v7x
topology: tpu7x:2x2x1
jax: 0.10.0
libtpu: 0.0.40
codegen_flags: <defaults>
</compile_context>

<pallas_src>
import functools

import jax
import jax.numpy as jnp
from jax import lax
from jax.experimental import pallas as pl
from jax.experimental.pallas import tpu as pltpu

N_BITS = 8
HALF_LVLS = (2.0 ** N_BITS - 2.0) / 2.0          # 127.0
STEP = 1.0 / HALF_LVLS
BN_EPS = 1e-5
LANE = 128


def _quantize_weight(w):
    # quantize(w, step, half_lvls) * step ; Unite(M2D=0) is identity on levels.
    return jnp.clip(jnp.round(w / STEP), -HALF_LVLS, HALF_LVLS) * STEP


def _round_up(x, m):
    return (x + m - 1) // m * m


def _pick_row_tile(h, target=8):
    """Largest divisor of h that is <= target (row-tile height)."""
    for t in range(min(h, target), 0, -1):
        if h % t == 0:
            return t
    return h


# ---------------------------------------------------------------------------
# Fused kernel: conv1+bn1+relu -> conv2(3x3)+bn2+relu -> conv3+bn3+res+relu
# ---------------------------------------------------------------------------
def fused_bottleneck_kernel(x_ref, w1_ref, b1_ref, w2_ref, b2_ref,
                            w3_ref, b3_ref, o_ref, *, th, hh, ww):
    # x_ref block : (1, 1, th+2, ww+2, cin_p)  zero-padded input slab (+halo)
    # w1          : (cin_p, c1_p)   bf16, quantized, BN1 scale folded
    # w2          : (3, 3, c1_p, c1_p) bf16, quantized, BN2 scale folded
    # w3          : (c1_p, c3_p)    bf16, quantized, BN3 scale folded
    # b1/b2/b3    : (1, c*_p) f32 folded BN biases
    # o_ref block : (1, th, ww, c3_p)
    i = pl.program_id(1)                               # row-tile index
    xs = x_ref[...][0, 0]                              # (th+2, ww+2, cin_p) f32
    hs, ws, cin_p = xs.shape
    c1_p = w1_ref.shape[1]
    c3_p = w3_ref.shape[1]

    # ---- conv1 (1x1) + bn1 + relu, computed on the whole halo slab ----
    x2d = xs.reshape(hs * ws, cin_p).astype(jnp.bfloat16)
    y1 = jnp.dot(x2d, w1_ref[...], preferred_element_type=jnp.float32)
    y1 = jnp.maximum(y1 + b1_ref[...], 0.0).reshape(hs, ws, c1_p)

    # Positions that correspond to conv2's zero padding must be exactly 0
    # (halo rows/cols that fall outside the image).
    row = i * th + lax.broadcasted_iota(jnp.int32, (hs, ws, 1), 0)   # padded row
    col = lax.broadcasted_iota(jnp.int32, (hs, ws, 1), 1)            # padded col
    pad = (row == 0) | (row == hh + 1) | (col == 0) | (col == ww + 1)
    y1 = jnp.where(pad, 0.0, y1).astype(jnp.bfloat16)

    # ---- conv2 (3x3, stride 1, pad 1) + bn2 + relu ----
    acc = jnp.zeros((th * ww, c1_p), jnp.float32)
    for kh in range(3):                                # unrolled 9 MXU matmuls
        for kw in range(3):
            patch = y1[kh:kh + th, kw:kw + ww, :].reshape(th * ww, c1_p)
            acc = acc + jnp.dot(patch, w2_ref[kh, kw],
                                preferred_element_type=jnp.float32)
    y2 = jnp.maximum(acc + b2_ref[...], 0.0).astype(jnp.bfloat16)

    # ---- conv3 (1x1) + bn3 + identity residual + relu ----
    y3 = jnp.dot(y2, w3_ref[...], preferred_element_type=jnp.float32)
    res = xs[1:th + 1, 1:ww + 1, :].reshape(th * ww, c3_p)   # cin_p == c3_p
    y3 = jnp.maximum(y3 + b3_ref[...] + res, 0.0)
    o_ref[...] = y3.reshape(1, th, ww, c3_p)


# ---------------------------------------------------------------------------
# Wrapper: quantize + fold BN, pad channels, build halo'd row tiles, call.
# ---------------------------------------------------------------------------
def _fold_conv_bn(w_oihw, gamma, beta, mean, var):
    """Quantize conv weight (quan_Conv2d path) and fold the BN affine in."""
    wq = _quantize_weight(w_oihw)
    scale = gamma / jnp.sqrt(var + BN_EPS)
    bias = beta - mean * scale
    w_folded = wq * scale[:, None, None, None]    # exact: (x.w)*s == x.(w*s)
    return w_folded, bias


def bottleneck_forward(x_nchw, params, stride=1):
    """Forward of Bottleneck (downsample=None). x_nchw: (N, inplanes, H, W)."""
    assert stride == 1, "downsample=None (identity residual) requires stride=1"
    # TODO(synk): stride>1 / downsample branch not implemented (would need a
    # projection residual, which the reference module delegates to `downsample`).

    x = jnp.transpose(x_nchw, (0, 2, 3, 1)).astype(jnp.float32)   # NHWC
    n, h, w, cin = x.shape
    planes = params["w1"].shape[0]
    cout3 = params["w3"].shape[0]
    assert cin == cout3, "identity residual requires inplanes == planes*expansion"

    cin_p = _round_up(cin, LANE)
    c1_p = _round_up(planes, LANE)
    c3_p = _round_up(cout3, LANE)
    assert cin_p == c3_p

    # ---- hoisted: quantization + BN folding, channel padding, bf16 cast ----
    w1f, b1 = _fold_conv_bn(params["w1"], params["g1"], params["b1"],
                            params["m1"], params["v1"])
    w2f, b2 = _fold_conv_bn(params["w2"], params["g2"], params["b2"],
                            params["m2"], params["v2"])
    w3f, b3 = _fold_conv_bn(params["w3"], params["g3"], params["b3"],
                            params["m3"], params["v3"])

    w1m = jnp.zeros((cin_p, c1_p), jnp.float32).at[:cin, :planes].set(
        w1f.reshape(planes, cin).T).astype(jnp.bfloat16)
    w2m = jnp.zeros((3, 3, c1_p, c1_p), jnp.float32).at[:, :, :planes, :planes].set(
        jnp.transpose(w2f, (2, 3, 1, 0))).astype(jnp.bfloat16)
    w3m = jnp.zeros((c1_p, c3_p), jnp.float32).at[:planes, :cout3].set(
        w3f.reshape(cout3, planes).T).astype(jnp.bfloat16)
    b1p = jnp.zeros((1, c1_p), jnp.float32).at[0, :planes].set(b1)
    b2p = jnp.zeros((1, c1_p), jnp.float32).at[0, :planes].set(b2)
    b3p = jnp.zeros((1, c3_p), jnp.float32).at[0, :cout3].set(b3)

    # ---- halo'd row tiles of the zero-padded input (also the residual src) ----
    th = _pick_row_tile(h, target=8)
    t = h // th
    xp = jnp.pad(x, ((0, 0), (1, 1), (1, 1), (0, cin_p - cin)))   # (n,h+2,w+2,cin_p)
    row_idx = jnp.arange(t)[:, None] * th + jnp.arange(th + 2)[None, :]
    x_tiles = xp[:, row_idx]                                      # (n,t,th+2,w+2,cin_p)

    # ---- cost estimate + VMEM budget ----
    flops = 2 * n * h * w * (cin_p * c1_p + 9 * c1_p * c1_p + c1_p * c3_p)
    bytes_accessed = int(x_tiles.size) * 4 + n * h * w * c3_p * 4 + \
        (int(w1m.size) + int(w2m.size) + int(w3m.size)) * 2
    x_tile_b = (th + 2) * (w + 2) * cin_p * 4
    out_tile_b = th * w * c3_p * 4
    weight_b = (int(w1m.size) + int(w2m.size) + int(w3m.size)) * 2 + \
        (int(b1p.size) + int(b2p.size) + int(b3p.size)) * 4
    vmem_est = (2 * (x_tile_b + out_tile_b) + 2 * weight_b
                + 8 * (th + 2) * (w + 2) * max(c1_p, c3_p) * 4 + (4 << 20))
    vmem_limit = int(min(max(vmem_est, 16 << 20), 48 << 20))

    kernel = functools.partial(fused_bottleneck_kernel, th=th, hh=h, ww=w)
    out = pl.pallas_call(
        kernel,
        out_shape=jax.ShapeDtypeStruct((n, h, w, c3_p), jnp.float32),
        grid=(n, t),
        in_specs=[
            pl.BlockSpec((1, 1, th + 2, w + 2, cin_p),
                         lambda b, i: (b, i, 0, 0, 0)),
            pl.BlockSpec((cin_p, c1_p), lambda b, i: (0, 0)),
            pl.BlockSpec((1, c1_p), lambda b, i: (0, 0)),
            pl.BlockSpec((3, 3, c1_p, c1_p), lambda b, i: (0, 0, 0, 0)),
            pl.BlockSpec((1, c1_p), lambda b, i: (0, 0)),
            pl.BlockSpec((c1_p, c3_p), lambda b, i: (0, 0)),
            pl.BlockSpec((1, c3_p), lambda b, i: (0, 0)),
        ],
        out_specs=pl.BlockSpec((1, th, w, c3_p), lambda b, i: (b, i, 0, 0)),
        compiler_params=pltpu.CompilerParams(
            dimension_semantics=("parallel", "parallel"),
            vmem_limit_bytes=vmem_limit),
        cost_estimate=pl.CostEstimate(flops=flops, transcendentals=0,
                                      bytes_accessed=bytes_accessed),
    )(x_tiles, w1m, b1p, w2m, b2p, w3m, b3p)

    out = out[:, :, :, :cout3]                       # drop channel padding
    return jnp.transpose(out, (0, 3, 1, 2))          # back to NCHW


# ---------------------------------------------------------------------------
# Pure-JAX f32 reference (for the in-script correctness check)
# ---------------------------------------------------------------------------
def _reference_forward(x_nchw, params):
    def conv(x, wt, pad):
        return lax.conv_general_dilated(
            x, wt, window_strides=(1, 1), padding=pad,
            dimension_numbers=("NCHW", "OIHW", "NCHW"),
            precision=lax.Precision.HIGHEST)

    def bn(x, g, b, m, v):
        s = g / jnp.sqrt(v + BN_EPS)
        return x * s[None, :, None, None] + (b - m * s)[None, :, None, None]

    wq1 = _quantize_weight(params["w1"])
    wq2 = _quantize_weight(params["w2"])
    wq3 = _quantize_weight(params["w3"])
    out = jnp.maximum(bn(conv(x_nchw, wq1, "VALID"),
                         params["g1"], params["b1"], params["m1"], params["v1"]), 0.0)
    out = jnp.maximum(bn(conv(out, wq2, ((1, 1), (1, 1))),
                         params["g2"], params["b2"], params["m2"], params["v2"]), 0.0)
    out = bn(conv(out, wq3, "VALID"),
             params["g3"], params["b3"], params["m3"], params["v3"])
    return jnp.maximum(out + x_nchw, 0.0)


# ---------------------------------------------------------------------------
# Deterministic parameter init (shapes from Bottleneck.__init__)
# ---------------------------------------------------------------------------
def init_params(key, inplanes, planes, expansion=4):
    ks = jax.random.split(key, 15)

    def conv_w(k, shape, fan_in):
        bound = 1.0 / jnp.sqrt(jnp.float32(fan_in))
        return jax.random.uniform(k, shape, jnp.float32, -bound, bound)

    def bn(kg, kb, km, kv, c):
        return (1.0 + 0.1 * jax.random.normal(kg, (c,), jnp.float32),
                0.1 * jax.random.normal(kb, (c,), jnp.float32),
                0.1 * jax.random.normal(km, (c,), jnp.float32),
                1.0 + 0.1 * jnp.abs(jax.random.normal(kv, (c,), jnp.float32)))

    p = {}
    p["w1"] = conv_w(ks[0], (planes, inplanes, 1, 1), inplanes)            # conv1
    p["w2"] = conv_w(ks[1], (planes, planes, 3, 3), planes * 9)            # conv2
    p["w3"] = conv_w(ks[2], (planes * expansion, planes, 1, 1), planes)    # conv3
    p["g1"], p["b1"], p["m1"], p["v1"] = bn(ks[3], ks[4], ks[5], ks[6], planes)
    p["g2"], p["b2"], p["m2"], p["v2"] = bn(ks[7], ks[8], ks[9], ks[10], planes)
    p["g3"], p["b3"], p["m3"], p["v3"] = bn(ks[11], ks[12], ks[13], ks[14],
                                            planes * expansion)
    return p


if __name__ == "__main__":
    key = jax.random.PRNGKey(0)
    k_x, k_p = jax.random.split(key)

    inplanes, planes, expansion = 16, 4, 4   # downsample=None => inplanes = planes*4
    N, H, W = 2, 16, 16

    x = jax.random.normal(k_x, (N, inplanes, H, W), jnp.float32)
    params = init_params(k_p, inplanes, planes, expansion)

    out = jax.block_until_ready(bottleneck_forward(x, params, stride=1))
    assert out.shape == (N, planes * expansion, H, W)
    assert bool(jnp.all(out >= 0.0))                     # final ReLU

    ref = _reference_forward(x, params)
    rel_err = jnp.linalg.norm(out - ref) / (jnp.linalg.norm(ref) + 1e-12)
    assert float(rel_err) < 3e-2, float(rel_err)         # bf16 MXU operands

    print("KERNEL_OK")
</pallas_src>

<mosaic_0001>
module attributes {stable_mosaic.version = 11 : i64} {
  func.func @fused_bottleneck_kernel(%arg0: i32, %arg1: i32, %arg2: memref<1x1x10x18x128xf32, #tpu.memory_space<vmem>>, %arg3: memref<128x128xbf16, #tpu.memory_space<vmem>>, %arg4: memref<1x128xf32, #tpu.memory_space<vmem>>, %arg5: memref<3x3x128x128xbf16, #tpu.memory_space<vmem>>, %arg6: memref<1x128xf32, #tpu.memory_space<vmem>>, %arg7: memref<128x128xbf16, #tpu.memory_space<vmem>>, %arg8: memref<1x128xf32, #tpu.memory_space<vmem>>, %arg9: memref<1x8x16x128xf32, #tpu.memory_space<vmem>>) attributes {dimension_semantics = [#tpu.dimension_semantics<parallel>, #tpu.dimension_semantics<parallel>], iteration_bounds = array<i64: 2, 2>, scalar_prefetch = 0 : i64, scratch_operands = 0 : i64, tpu.core_type = #tpu.core_type<tc>, window_params = [{transform_indices = @transform_0, window_bounds = array<i64: 1, 1, 10, 18, 128>}, {pipeline_mode = #tpu.pipeline_mode<synchronous>, transform_indices = @transform_1, window_bounds = array<i64: 128, 128>}, {pipeline_mode = #tpu.pipeline_mode<synchronous>, transform_indices = @transform_2, window_bounds = array<i64: 1, 128>}, {pipeline_mode = #tpu.pipeline_mode<synchronous>, transform_indices = @transform_3, window_bounds = array<i64: 3, 3, 128, 128>}, {pipeline_mode = #tpu.pipeline_mode<synchronous>, transform_indices = @transform_4, window_bounds = array<i64: 1, 128>}, {pipeline_mode = #tpu.pipeline_mode<synchronous>, transform_indices = @transform_5, window_bounds = array<i64: 128, 128>}, {pipeline_mode = #tpu.pipeline_mode<synchronous>, transform_indices = @transform_6, window_bounds = array<i64: 1, 128>}, {transform_indices = @transform_7, window_bounds = array<i64: 1, 8, 16, 128>}]} {
    %c0 = arith.constant 0 : index
    %c0_0 = arith.constant 0 : index
    %c0_1 = arith.constant 0 : index
    %c0_2 = arith.constant 0 : index
    %c0_3 = arith.constant 0 : index
    %0 = vector.load %arg2[%c0, %c0_0, %c0_1, %c0_2, %c0_3] : memref<1x1x10x18x128xf32, #tpu.memory_space<vmem>>, vector<1x1x10x18x128xf32>
    %1 = vector.shape_cast %0 : vector<1x1x10x18x128xf32> to vector<10x18x128xf32>
    %2 = vector.shape_cast %1 : vector<10x18x128xf32> to vector<180x128xf32>
    %3 = arith.truncf %2 : vector<180x128xf32> to vector<180x128xbf16>
    %c0_4 = arith.constant 0 : index
    %c0_5 = arith.constant 0 : index
    %4 = vector.load %arg3[%c0_4, %c0_5] : memref<128x128xbf16, #tpu.memory_space<vmem>>, vector<128x128xbf16>
    %cst = arith.constant dense<0.000000e+00> : vector<180x128xf32>
    %5 = tpu.matmul %3, %4, %cst {dimension_numbers = #tpu.dot_dimension_numbers<[1], [0], [0], [1], [0, 0, 1, 1], [], []>} : vector<180x128xbf16>, vector<128x128xbf16>, vector<180x128xf32> -> vector<180x128xf32>
    %c0_6 = arith.constant 0 : index
    %c0_7 = arith.constant 0 : index
    %6 = vector.load %arg4[%c0_6, %c0_7] : memref<1x128xf32, #tpu.memory_space<vmem>>, vector<1x128xf32>
    %7 = vector.broadcast %6 : vector<1x128xf32> to vector<180x128xf32>
    %8 = arith.addf %5, %7 : vector<180x128xf32>
    %cst_8 = arith.constant 0.000000e+00 : f32
    %9 = vector.broadcast %cst_8 : f32 to vector<180x128xf32>
    %10 = arith.maximumf %8, %9 : vector<180x128xf32>
    %11 = vector.shape_cast %10 : vector<180x128xf32> to vector<10x18x128xf32>
    %c8_i32 = arith.constant 8 : i32
    %12 = arith.muli %arg1, %c8_i32 : i32
    %13 = tpu.iota {dimensions = array<i32: 0>} : vector<10x18x1xi32>
    %14 = vector.broadcast %12 : i32 to vector<10x18x1xi32>
    %15 = arith.addi %14, %13 : vector<10x18x1xi32>
    %16 = tpu.iota {dimensions = array<i32: 1>} : vector<10x18x1xi32>
    %c0_i32 = arith.constant 0 : i32
    %17 = vector.broadcast %c0_i32 : i32 to vector<10x18x1xi32>
    %18 = arith.cmpi eq, %15, %17 : vector<10x18x1xi32>
    %c17_i32 = arith.constant 17 : i32
    %19 = vector.broadcast %c17_i32 : i32 to vector<10x18x1xi32>
    %20 = arith.cmpi eq, %15, %19 : vector<10x18x1xi32>
    %21 = arith.ori %18, %20 : vector<10x18x1xi1>
    %c0_i32_9 = arith.constant 0 : i32
    %22 = vector.broadcast %c0_i32_9 : i32 to vector<10x18x1xi32>
    %23 = arith.cmpi eq, %16, %22 : vector<10x18x1xi32>
    %24 = arith.ori %21, %23 : vector<10x18x1xi1>
    %c17_i32_10 = arith.constant 17 : i32
    %25 = vector.broadcast %c17_i32_10 : i32 to vector<10x18x1xi32>
    %26 = arith.cmpi eq, %16, %25 : vector<10x18x1xi32>
    %27 = arith.ori %24, %26 : vector<10x18x1xi1>
    %cst_11 = arith.constant 0.000000e+00 : f32
    %28 = vector.shape_cast %27 : vector<10x18x1xi1> to vector<10x18x1xi1>
    %29 = vector.broadcast %28 : vector<10x18x1xi1> to vector<10x18x128xi1>
    %30 = vector.broadcast %cst_11 : f32 to vector<10x18x128xf32>
    %31 = arith.select %29, %30, %11 : vector<10x18x128xi1>, vector<10x18x128xf32>
    %32 = arith.truncf %31 : vector<10x18x128xf32> to vector<10x18x128xbf16>
    %cst_12 = arith.constant 0.000000e+00 : f32
    %33 = vector.broadcast %cst_12 : f32 to vector<128x128xf32>
    %34 = vector.extract_strided_slice %32 {offsets = [0, 0, 0], sizes = [8, 16, 128], strides = [1, 1, 1]} : vector<10x18x128xbf16> to vector<8x16x128xbf16>
    %35 = vector.shape_cast %34 : vector<8x16x128xbf16> to vector<128x128xbf16>
    %c0_13 = arith.constant 0 : index
    %c0_14 = arith.constant 0 : index
    %c0_15 = arith.constant 0 : index
    %c0_16 = arith.constant 0 : index
    %36 = vector.load %arg5[%c0_13, %c0_14, %c0_15, %c0_16] : memref<3x3x128x128xbf16, #tpu.memory_space<vmem>>, vector<1x1x128x128xbf16>
    %37 = vector.shape_cast %36 : vector<1x1x128x128xbf16> to vector<128x128xbf16>
    %cst_17 = arith.constant dense<0.000000e+00> : vector<128x128xf32>
    %38 = tpu.matmul %35, %37, %cst_17 {dimension_numbers = #tpu.dot_dimension_numbers<[1], [0], [0], [1], [0, 0, 1, 1], [], []>} : vector<128x128xbf16>, vector<128x128xbf16>, vector<128x128xf32> -> vector<128x128xf32>
    %39 = arith.addf %33, %38 : vector<128x128xf32>
    %40 = vector.extract_strided_slice %32 {offsets = [0, 1, 0], sizes = [8, 16, 128], strides = [1, 1, 1]} : vector<10x18x128xbf16> to vector<8x16x128xbf16>
    %41 = vector.shape_cast %40 : vector<8x16x128xbf16> to vector<128x128xbf16>
    %c0_18 = arith.constant 0 : index
    %c1 = arith.constant 1 : index
    %c0_19 = arith.constant 0 : index
    %c0_20 = arith.constant 0 : index
    %42 = vector.load %arg5[%c0_18, %c1, %c0_19, %c0_20] : memref<3x3x128x128xbf16, #tpu.memory_space<vmem>>, vector<1x1x128x128xbf16>
    %43 = vector.shape_cast %42 : vector<1x1x128x128xbf16> to vector<128x128xbf16>
    %cst_21 = arith.constant dense<0.000000e+00> : vector<128x128xf32>
    %44 = tpu.matmul %41, %43, %cst_21 {dimension_numbers = #tpu.dot_dimension_numbers<[1], [0], [0], [1], [0, 0, 1, 1], [], []>} : vector<128x128xbf16>, vector<128x128xbf16>, vector<128x128xf32> -> vector<128x128xf32>
    %45 = arith.addf %39, %44 : vector<128x128xf32>
    %46 = vector.extract_strided_slice %32 {offsets = [0, 2, 0], sizes = [8, 16, 128], strides = [1, 1, 1]} : vector<10x18x128xbf16> to vector<8x16x128xbf16>
    %47 = vector.shape_cast %46 : vector<8x16x128xbf16> to vector<128x128xbf16>
    %c0_22 = arith.constant 0 : index
    %c2 = arith.constant 2 : index
    %c0_23 = arith.constant 0 : index
    %c0_24 = arith.constant 0 : index
    %48 = vector.load %arg5[%c0_22, %c2, %c0_23, %c0_24] : memref<3x3x128x128xbf16, #tpu.memory_space<vmem>>, vector<1x1x128x128xbf16>
    %49 = vector.shape_cast %48 : vector<1x1x128x128xbf16> to vector<128x128xbf16>
    %cst_25 = arith.constant dense<0.000000e+00> : vector<128x128xf32>
    %50 = tpu.matmul %47, %49, %cst_25 {dimension_numbers = #tpu.dot_dimension_numbers<[1], [0], [0], [1], [0, 0, 1, 1], [], []>} : vector<128x128xbf16>, vector<128x128xbf16>, vector<128x128xf32> -> vector<128x128xf32>
    %51 = arith.addf %45, %50 : vector<128x128xf32>
    %52 = vector.extract_strided_slice %32 {offsets = [1, 0, 0], sizes = [8, 16, 128], strides = [1, 1, 1]} : vector<10x18x128xbf16> to vector<8x16x128xbf16>
    %53 = vector.shape_cast %52 : vector<8x16x128xbf16> to vector<128x128xbf16>
    %c1_26 = arith.constant 1 : index
    %c0_27 = arith.constant 0 : index
    %c0_28 = arith.constant 0 : index
    %c0_29 = arith.constant 0 : index
    %54 = vector.load %arg5[%c1_26, %c0_27, %c0_28, %c0_29] : memref<3x3x128x128xbf16, #tpu.memory_space<vmem>>, vector<1x1x128x128xbf16>
    %55 = vector.shape_cast %54 : vector<1x1x128x128xbf16> to vector<128x128xbf16>
    %cst_30 = arith.constant dense<0.000000e+00> : vector<128x128xf32>
    %56 = tpu.matmul %53, %55, %cst_30 {dimension_numbers = #tpu.dot_dimension_numbers<[1], [0], [0], [1], [0, 0, 1, 1], [], []>} : vector<128x128xbf16>, vector<128x128xbf16>, vector<128x128xf32> -> vector<128x128xf32>
    %57 = arith.addf %51, %56 : vector<128x128xf32>
    %58 = vector.extract_strided_slice %32 {offsets = [1, 1, 0], sizes = [8, 16, 128], strides = [1, 1, 1]} : vector<10x18x128xbf16> to vector<8x16x128xbf16>
    %59 = vector.shape_cast %58 : vector<8x16x128xbf16> to vector<128x128xbf16>
    %c1_31 = arith.constant 1 : index
    %c1_32 = arith.constant 1 : index
    %c0_33 = arith.constant 0 : index
    %c0_34 = arith.constant 0 : index
    %60 = vector.load %arg5[%c1_31, %c1_32, %c0_33, %c0_34] : memref<3x3x128x128xbf16, #tpu.memory_space<vmem>>, vector<1x1x128x128xbf16>
    %61 = vector.shape_cast %60 : vector<1x1x128x128xbf16> to vector<128x128xbf16>
    %cst_35 = arith.constant dense<0.000000e+00> : vector<128x128xf32>
    %62 = tpu.matmul %59, %61, %cst_35 {dimension_numbers = #tpu.dot_dimension_numbers<[1], [0], [0], [1], [0, 0, 1, 1], [], []>} : vector<128x128xbf16>, vector<128x128xbf16>, vector<128x128xf32> -> vector<128x128xf32>
    %63 = arith.addf %57, %62 : vector<128x128xf32>
    %64 = vector.extract_strided_slice %32 {offsets = [1, 2, 0], sizes = [8, 16, 128], strides = [1, 1, 1]} : vector<10x18x128xbf16> to vector<8x16x128xbf16>
    %65 = vector.shape_cast %64 : vector<8x16x128xbf16> to vector<128x128xbf16>
    %c1_36 = arith.constant 1 : index
    %c2_37 = arith.constant 2 : index
    %c0_38 = arith.constant 0 : index
    %c0_39 = arith.constant 0 : index
    %66 = vector.load %arg5[%c1_36, %c2_37, %c0_38, %c0_39] : memref<3x3x128x128xbf16, #tpu.memory_space<vmem>>, vector<1x1x128x128xbf16>
    %67 = vector.shape_cast %66 : vector<1x1x128x128xbf16> to vector<128x128xbf16>
    %cst_40 = arith.constant dense<0.000000e+00> : vector<128x128xf32>
    %68 = tpu.matmul %65, %67, %cst_40 {dimension_numbers = #tpu.dot_dimension_numbers<[1], [0], [0], [1], [0, 0, 1, 1], [], []>} : vector<128x128xbf16>, vector<128x128xbf16>, vector<128x128xf32> -> vector<128x128xf32>
    %69 = arith.addf %63, %68 : vector<128x128xf32>
    %70 = vector.extract_strided_slice %32 {offsets = [2, 0, 0], sizes = [8, 16, 128], strides = [1, 1, 1]} : vector<10x18x128xbf16> to vector<8x16x128xbf16>
    %71 = vector.shape_cast %70 : vector<8x16x128xbf16> to vector<128x128xbf16>
    %c2_41 = arith.constant 2 : index
    %c0_42 = arith.constant 0 : index
    %c0_43 = arith.constant 0 : index
    %c0_44 = arith.constant 0 : index
    %72 = vector.load %arg5[%c2_41, %c0_42, %c0_43, %c0_44] : memref<3x3x128x128xbf16, #tpu.memory_space<vmem>>, vector<1x1x128x128xbf16>
    %73 = vector.shape_cast %72 : vector<1x1x128x128xbf16> to vector<128x128xbf16>
    %cst_45 = arith.constant dense<0.000000e+00> : vector<128x128xf32>
    %74 = tpu.matmul %71, %73, %cst_45 {dimension_numbers = #tpu.dot_dimension_numbers<[1], [0], [0], [1], [0, 0, 1, 1], [], []>} : vector<128x128xbf16>, vector<128x128xbf16>, vector<128x128xf32> -> vector<128x128xf32>
    %75 = arith.addf %69, %74 : vector<128x128xf32>
    %76 = vector.extract_strided_slice %32 {offsets = [2, 1, 0], sizes = [8, 16, 128], strides = [1, 1, 1]} : vector<10x18x128xbf16> to vector<8x16x128xbf16>
    %77 = vector.shape_cast %76 : vector<8x16x128xbf16> to vector<128x128xbf16>
    %c2_46 = arith.constant 2 : index
    %c1_47 = arith.constant 1 : index
    %c0_48 = arith.constant 0 : index
    %c0_49 = arith.constant 0 : index
    %78 = vector.load %arg5[%c2_46, %c1_47, %c0_48, %c0_49] : memref<3x3x128x128xbf16, #tpu.memory_space<vmem>>, vector<1x1x128x128xbf16>
    %79 = vector.shape_cast %78 : vector<1x1x128x128xbf16> to vector<128x128xbf16>
    %cst_50 = arith.constant dense<0.000000e+00> : vector<128x128xf32>
    %80 = tpu.matmul %77, %79, %cst_50 {dimension_numbers = #tpu.dot_dimension_numbers<[1], [0], [0], [1], [0, 0, 1, 1], [], []>} : vector<128x128xbf16>, vector<128x128xbf16>, vector<128x128xf32> -> vector<128x128xf32>
    %81 = arith.addf %75, %80 : vector<128x128xf32>
    %82 = vector.extract_strided_slice %32 {offsets = [2, 2, 0], sizes = [8, 16, 128], strides = [1, 1, 1]} : vector<10x18x128xbf16> to vector<8x16x128xbf16>
    %83 = vector.shape_cast %82 : vector<8x16x128xbf16> to vector<128x128xbf16>
    %c2_51 = arith.constant 2 : index
    %c2_52 = arith.constant 2 : index
    %c0_53 = arith.constant 0 : index
    %c0_54 = arith.constant 0 : index
    %84 = vector.load %arg5[%c2_51, %c2_52, %c0_53, %c0_54] : memref<3x3x128x128xbf16, #tpu.memory_space<vmem>>, vector<1x1x128x128xbf16>
    %85 = vector.shape_cast %84 : vector<1x1x128x128xbf16> to vector<128x128xbf16>
    %cst_55 = arith.constant dense<0.000000e+00> : vector<128x128xf32>
    %86 = tpu.matmul %83, %85, %cst_55 {dimension_numbers = #tpu.dot_dimension_numbers<[1], [0], [0], [1], [0, 0, 1, 1], [], []>} : vector<128x128xbf16>, vector<128x128xbf16>, vector<128x128xf32> -> vector<128x128xf32>
    %87 = arith.addf %81, %86 : vector<128x128xf32>
    %c0_56 = arith.constant 0 : index
    %c0_57 = arith.constant 0 : index
    %88 = vector.load %arg6[%c0_56, %c0_57] : memref<1x128xf32, #tpu.memory_space<vmem>>, vector<1x128xf32>
    %89 = vector.broadcast %88 : vector<1x128xf32> to vector<128x128xf32>
    %90 = arith.addf %87, %89 : vector<128x128xf32>
    %cst_58 = arith.constant 0.000000e+00 : f32
    %91 = vector.broadcast %cst_58 : f32 to vector<128x128xf32>
    %92 = arith.maximumf %90, %91 : vector<128x128xf32>
    %93 = arith.truncf %92 : vector<128x128xf32> to vector<128x128xbf16>
    %c0_59 = arith.constant 0 : index
    %c0_60 = arith.constant 0 : index
    %94 = vector.load %arg7[%c0_59, %c0_60] : memref<128x128xbf16, #tpu.memory_space<vmem>>, vector<128x128xbf16>
    %cst_61 = arith.constant dense<0.000000e+00> : vector<128x128xf32>
    %95 = tpu.matmul %93, %94, %cst_61 {dimension_numbers = #tpu.dot_dimension_numbers<[1], [0], [0], [1], [0, 0, 1, 1], [], []>} : vector<128x128xbf16>, vector<128x128xbf16>, vector<128x128xf32> -> vector<128x128xf32>
    %96 = vector.extract_strided_slice %1 {offsets = [1, 1, 0], sizes = [8, 16, 128], strides = [1, 1, 1]} : vector<10x18x128xf32> to vector<8x16x128xf32>
    %97 = vector.shape_cast %96 : vector<8x16x128xf32> to vector<128x128xf32>
    %c0_62 = arith.constant 0 : index
    %c0_63 = arith.constant 0 : index
    %98 = vector.load %arg8[%c0_62, %c0_63] : memref<1x128xf32, #tpu.memory_space<vmem>>, vector<1x128xf32>
    %99 = vector.broadcast %98 : vector<1x128xf32> to vector<128x128xf32>
    %100 = arith.addf %95, %99 : vector<128x128xf32>
    %101 = arith.addf %100, %97 : vector<128x128xf32>
    %cst_64 = arith.constant 0.000000e+00 : f32
    %102 = vector.broadcast %cst_64 : f32 to vector<128x128xf32>
    %103 = arith.maximumf %101, %102 : vector<128x128xf32>
    %104 = vector.shape_cast %103 : vector<128x128xf32> to vector<1x8x16x128xf32>
    %c0_65 = arith.constant 0 : index
    %c0_66 = arith.constant 0 : index
    %c0_67 = arith.constant 0 : index
    %c0_68 = arith.constant 0 : index
    %105 = vector.load %arg9[%c0_65, %c0_66, %c0_67, %c0_68] : memref<1x8x16x128xf32, #tpu.memory_space<vmem>>, vector<1x8x16x128xf32>
    tpu.vector_store %arg9[%c0_65, %c0_66, %c0_67, %c0_68], %104 {strides = array<i32>} : memref<1x8x16x128xf32, #tpu.memory_space<vmem>>, vector<1x8x16x128xf32>,
    return
  }
  func.func @transform_0(%arg0: i32, %arg1: i32) -> (i32, i32, i32, i32, i32) {
    %c0_i32 = arith.constant 0 : i32
    %c0_i32_0 = arith.constant 0 : i32
    %c0_i32_1 = arith.constant 0 : i32
    %c0_i32_2 = arith.constant 0 : i32
    return %arg0, %arg1, %c0_i32, %c0_i32_0, %c0_i32_1 : i32, i32, i32, i32, i32
  }
  func.func @transform_1(%arg0: i32, %arg1: i32) -> (i32, i32) {
    %c0_i32 = arith.constant 0 : i32
    %c0_i32_0 = arith.constant 0 : i32
    %c0_i32_1 = arith.constant 0 : i32
    return %c0_i32, %c0_i32_0 : i32, i32
  }
  func.func @transform_2(%arg0: i32, %arg1: i32) -> (i32, i32) {
    %c0_i32 = arith.constant 0 : i32
    %c0_i32_0 = arith.constant 0 : i32
    %c0_i32_1 = arith.constant 0 : i32
    return %c0_i32, %c0_i32_0 : i32, i32
  }
  func.func @transform_3(%arg0: i32, %arg1: i32) -> (i32, i32, i32, i32) {
    %c0_i32 = arith.constant 0 : i32
    %c0_i32_0 = arith.constant 0 : i32
    %c0_i32_1 = arith.constant 0 : i32
    %c0_i32_2 = arith.constant 0 : i32
    %c0_i32_3 = arith.constant 0 : i32
    return %c0_i32, %c0_i32_0, %c0_i32_1, %c0_i32_2 : i32, i32, i32, i32
  }
  func.func @transform_4(%arg0: i32, %arg1: i32) -> (i32, i32) {
    %c0_i32 = arith.constant 0 : i32
    %c0_i32_0 = arith.constant 0 : i32
    %c0_i32_1 = arith.constant 0 : i32
    return %c0_i32, %c0_i32_0 : i32, i32
  }
  func.func @transform_5(%arg0: i32, %arg1: i32) -> (i32, i32) {
    %c0_i32 = arith.constant 0 : i32
    %c0_i32_0 = arith.constant 0 : i32
    %c0_i32_1 = arith.constant 0 : i32
    return %c0_i32, %c0_i32_0 : i32, i32
  }
  func.func @transform_6(%arg0: i32, %arg1: i32) -> (i32, i32) {
    %c0_i32 = arith.constant 0 : i32
    %c0_i32_0 = arith.constant 0 : i32
    %c0_i32_1 = arith.constant 0 : i32
    return %c0_i32, %c0_i32_0 : i32, i32
  }
  func.func @transform_7(%arg0: i32, %arg1: i32) -> (i32, i32, i32, i32) {
    %c0_i32 = arith.constant 0 : i32
    %c0_i32_0 = arith.constant 0 : i32
    %c0_i32_1 = arith.constant 0 : i32
    return %arg0, %arg1, %c0_i32, %c0_i32_0 : i32, i32, i32, i32
  }
}

</mosaic_0001>

<llo_original>
// kernel: tpu_custom_call.1
$region0: #{tpu_custom_call.1}
  #allocation0 [shape = 'u32[]', space=smem, size = 0x4, offset = 0x4, fixed_abs, tag = 'smem constant byte address 0x4 - core index']
  #allocation1 [shape = 'u32[144,128]{1,0:T(1,128)}', space=vmem, size = 0x12000, scoped, tag = 'internal scratch']
  %s0 = inlined_call_operand.vmem [shape: f32[2,2,10,18,128], index: 0, kind: input, shape index: {}]
  %s1 = inlined_call_operand.vmem [shape: bf16[128,128], index: 1, kind: input, shape index: {}]
  %s2 = inlined_call_operand.vmem [shape: f32[1,128], index: 2, kind: input, shape index: {}]
  %s3 = inlined_call_operand.vmem [shape: bf16[3,3,128,128], index: 3, kind: input, shape index: {}]
  %s4 = inlined_call_operand.vmem [shape: f32[1,128], index: 4, kind: input, shape index: {}]
  %s5 = inlined_call_operand.vmem [shape: bf16[128,128], index: 5, kind: input, shape index: {}]
  %s6 = inlined_call_operand.vmem [shape: f32[1,128], index: 6, kind: input, shape index: {}]
  %s7 = inlined_call_operand.hbm [shape: f32[2,16,16,128], index: 7, kind: output, shape index: {}]
  %s8 = sld [smem:[#allocation0]]
  $region61: #{tpu_custom_call.1} parent=0
    _
  %s10 = ssub.s32 1, %s8
  %s11 = scalar_select 0, %s10, %s8
  $region1: #{tpu_custom_call.1} parent=0
    #allocation2 [shape = 'u8[131072]{0}', space=vmem, size = 0x20000, scoped, tag = 'output window, operand 0']
    #allocation3 [shape = 's32[2]{0}', space=sflag, size = 0x8, scoped, tag = 'scoped memory for tpu_custom_call.1']
    %12 = vsyncpa [#allocation3], 0
    %s13 = scalar_lea.sflag [#allocation3], 1
    %14 = vsyncpa %s13, 0
    loop: start=0, step=1, limit=6
    $region2: #{tpu_custom_call.1} parent=1 // loop_pre_header
      _
    $region3: #{tpu_custom_call.1} parent=1 // loop_header
      %s16 = sphi 0, %s20
      %p17 = scmp.ge.s32.totalorder %s16, 6
      %s23 = sphi 0, %s35
      %s24 = sphi 0, %s31
      %s25 = sphi 0, %s23
      %s26 = sphi 0, %s24
      %s27 = sphi 0, %s25
      %s28 = sphi 0, %s26
      %s40 = sphi 0, %s42
      %s43 = sphi 0, %s40
      %s44 = sphi 0, %s43
      %s60 = sphi 0, %s44
      %s64 = sphi 0, %s64
      %s66 = sphi 0, %s64
      %s67 = sphi 0, %s66
      %s81 = sphi 0, %s67
      %s85 = sphi 0, %s85
      %s87 = sphi 0, %s85
      %s88 = sphi 0, %s87
      %s102 = sphi 0, %s88
      %s106 = sphi 0, %s106
      %s108 = sphi 0, %s106
      %s109 = sphi 0, %s108
      %s123 = sphi 0, %s109
      %s127 = sphi 0, %s127
      %s129 = sphi 0, %s127
      %s130 = sphi 0, %s129
      %s144 = sphi 0, %s130
      %s148 = sphi 0, %s148
      %s150 = sphi 0, %s148
      %s151 = sphi 0, %s150
      %s165 = sphi 0, %s151
      %s169 = sphi 0, %s169
      %s171 = sphi 0, %s169
      %s172 = sphi 0, %s171
      %s186 = sphi 0, %s172
      %s194 = sphi 0, %s196
      %s197 = sphi 0, %s194
      %s198 = sphi 0, %s197
      %s214 = sphi 0, %s198
    $region4: #{tpu_custom_call.1} parent=1 // loop_header_branch
      %19 = sbr.rel (%p17) target = $region8
    $region5: #{tpu_custom_call.1} parent=1 // loop_body
      %s21 = ssub.s32 %s16, 1
      %s22 = ssub.s32 %s16, 2
      %s29 = sadd.s32 1, %s24
      %p30 = scmp.ge.s32.totalorder %s29, 2
      %s31 = scalar_select %p30, 0, %s29
      %s32 = sadd.s32 1, %s23
      %s33 = scalar_select %p30, %s32, %s23
      %p34 = scmp.ge.s32.totalorder %s33, 2
      %s35 = scalar_select %p34, 0, %s33
      %s36 = ssub.s32 %s23, %s35
      %s37 = ssub.s32 %s24, %s31
      %s38 = sor.u32 %s36, %s37
      %p39 = scmp.eq.s32.totalorder %s38, 0
      %s41 = sadd.s32 %s40, 1
      %s42 = scalar_select %p39, %s40, %s41
      %p45 = pneg %p39
      %p46 = scmp.eq.s32.totalorder %s16, 3
      %p47 = por %p45, %p46
      %p48 = scmp.ne.s32.totalorder %s40, %s43
      %p49 = scmp.eq.s32.totalorder %s16, 0
      %p50 = por %p48, %p49
      %p51 = scmp.ne.s32.totalorder %s40, %s43
      %p52 = scmp.eq.s32.totalorder %s21, 3
      %p53 = por %p51, %p52
      %p54 = scmp.ne.s32.totalorder %s43, %s44
      %p55 = scmp.eq.s32.totalorder %s21, 0
      %p56 = por %p54, %p55
      %p57 = scmp.ne.s32.totalorder %s43, %s44
      %p58 = scmp.eq.s32.totalorder %s22, 3
      %p59 = por %p57, %p58
      %p61 = scmp.ne.s32.totalorder %s44, %s60
      %p62 = scmp.eq.s32.totalorder %s22, 0
      %p63 = por %p61, %p62
      %s65 = sadd.s32 %s64, 1
      %p68 = scmp.eq.s32.totalorder %s16, 3
      %p69 = scmp.ne.s32.totalorder %s64, %s66
      %p70 = scmp.eq.s32.totalorder %s16, 0
      %p71 = por %p69, %p70
      %p72 = scmp.ne.s32.totalorder %s64, %s66
      %p73 = scmp.eq.s32.totalorder %s21, 3
      %p74 = por %p72, %p73
      %p75 = scmp.ne.s32.totalorder %s66, %s67
      %p76 = scmp.eq.s32.totalorder %s21, 0
      %p77 = por %p75, %p76
      %p78 = scmp.ne.s32.totalorder %s66, %s67
      %p79 = scmp.eq.s32.totalorder %s22, 3
      %p80 = por %p78, %p79
      %p82 = scmp.ne.s32.totalorder %s67, %s81
      %p83 = scmp.eq.s32.totalorder %s22, 0
      %p84 = por %p82, %p83
      %s86 = sadd.s32 %s85, 1
      %p89 = scmp.eq.s32.totalorder %s16, 3
      %p90 = scmp.ne.s32.totalorder %s85, %s87
      %p91 = scmp.eq.s32.totalorder %s16, 0
      %p92 = por %p90, %p91
      %p93 = scmp.ne.s32.totalorder %s85, %s87
      %p94 = scmp.eq.s32.totalorder %s21, 3
      %p95 = por %p93, %p94
      %p96 = scmp.ne.s32.totalorder %s87, %s88
      %p97 = scmp.eq.s32.totalorder %s21, 0
      %p98 = por %p96, %p97
      %p99 = scmp.ne.s32.totalorder %s87, %s88
      %p100 = scmp.eq.s32.totalorder %s22, 3
      %p101 = por %p99, %p100
      %p103 = scmp.ne.s32.totalorder %s88, %s102
      %p104 = scmp.eq.s32.totalorder %s22, 0
      %p105 = por %p103, %p104
      %s107 = sadd.s32 %s106, 1
      %p110 = scmp.eq.s32.totalorder %s16, 3
      %p111 = scmp.ne.s32.totalorder %s106, %s108
      %p112 = scmp.eq.s32.totalorder %s16, 0
      %p113 = por %p111, %p112
      %p114 = scmp.ne.s32.totalorder %s106, %s108
      %p115 = scmp.eq.s32.totalorder %s21, 3
      %p116 = por %p114, %p115
      %p117 = scmp.ne.s32.totalorder %s108, %s109
      %p118 = scmp.eq.s32.totalorder %s21, 0
      %p119 = por %p117, %p118
      %p120 = scmp.ne.s32.totalorder %s108, %s109
      %p121 = scmp.eq.s32.totalorder %s22, 3
      %p122 = por %p120, %p121
      %p124 = scmp.ne.s32.totalorder %s109, %s123
      %p125 = scmp.eq.s32.totalorder %s22, 0
      %p126 = por %p124, %p125
      %s128 = sadd.s32 %s127, 1
      %p131 = scmp.eq.s32.totalorder %s16, 3
      %p132 = scmp.ne.s32.totalorder %s127, %s129
      %p133 = scmp.eq.s32.totalorder %s16, 0
      %p134 = por %p132, %p133
      %p135 = scmp.ne.s32.totalorder %s127, %s129
      %p136 = scmp.eq.s32.totalorder %s21, 3
      %p137 = por %p135, %p136
      %p138 = scmp.ne.s32.totalorder %s129, %s130
      %p139 = scmp.eq.s32.totalorder %s21, 0
      %p140 = por %p138, %p139
      %p141 = scmp.ne.s32.totalorder %s129, %s130
      %p142 = scmp.eq.s32.totalorder %s22, 3
      %p143 = por %p141, %p142
      %p145 = scmp.ne.s32.totalorder %s130, %s144
      %p146 = scmp.eq.s32.totalorder %s22, 0
      %p147 = por %p145, %p146
      %s149 = sadd.s32 %s148, 1
      %p152 = scmp.eq.s32.totalorder %s16, 3
      %p153 = scmp.ne.s32.totalorder %s148, %s150
      %p154 = scmp.eq.s32.totalorder %s16, 0
      %p155 = por %p153, %p154
      %p156 = scmp.ne.s32.totalorder %s148, %s150
      %p157 = scmp.eq.s32.totalorder %s21, 3
      %p158 = por %p156, %p157
      %p159 = scmp.ne.s32.totalorder %s150, %s151
      %p160 = scmp.eq.s32.totalorder %s21, 0
      %p161 = por %p159, %p160
      %p162 = scmp.ne.s32.totalorder %s150, %s151
      %p163 = scmp.eq.s32.totalorder %s22, 3
      %p164 = por %p162, %p163
      %p166 = scmp.ne.s32.totalorder %s151, %s165
      %p167 = scmp.eq.s32.totalorder %s22, 0
      %p168 = por %p166, %p167
      %s170 = sadd.s32 %s169, 1
      %p173 = scmp.eq.s32.totalorder %s16, 3
      %p174 = scmp.ne.s32.totalorder %s169, %s171
      %p175 = scmp.eq.s32.totalorder %s16, 0
      %p176 = por %p174, %p175
      %p177 = scmp.ne.s32.totalorder %s169, %s171
      %p178 = scmp.eq.s32.totalorder %s21, 3
      %p179 = por %p177, %p178
      %p180 = scmp.ne.s32.totalorder %s171, %s172
      %p181 = scmp.eq.s32.totalorder %s21, 0
      %p182 = por %p180, %p181
      %p183 = scmp.ne.s32.totalorder %s171, %s172
      %p184 = scmp.eq.s32.totalorder %s22, 3
      %p185 = por %p183, %p184
      %p187 = scmp.ne.s32.totalorder %s172, %s186
      %p188 = scmp.eq.s32.totalorder %s22, 0
      %p189 = por %p187, %p188
      %s190 = ssub.s32 %s23, %s35
      %s191 = ssub.s32 %s24, %s31
      %s192 = sor.u32 %s190, %s191
      %p193 = scmp.eq.s32.totalorder %s192, 0
      %s195 = sadd.s32 %s194, 1
      %s196 = scalar_select %p193, %s194, %s195
      %p199 = pneg %p193
      %p200 = scmp.eq.s32.totalorder %s16, 3
      %p201 = por %p199, %p200
      %p202 = scmp.ne.s32.totalorder %s194, %s197
      %p203 = scmp.eq.s32.totalorder %s16, 0
      %p204 = por %p202, %p203
      %p205 = scmp.ne.s32.totalorder %s194, %s197
      %p206 = scmp.eq.s32.totalorder %s21, 3
      %p207 = por %p205, %p206
      %p208 = scmp.ne.s32.totalorder %s197, %s198
      %p209 = scmp.eq.s32.totalorder %s21, 0
      %p210 = por %p208, %p209
      %p211 = scmp.ne.s32.totalorder %s197, %s198
      %p212 = scmp.eq.s32.totalorder %s22, 3
      %p213 = por %p211, %p212
      %p215 = scmp.ne.s32.totalorder %s198, %s214
      %p216 = scmp.eq.s32.totalorder %s22, 0
      %p217 = por %p215, %p216
      %p218 = scmp.le.s32.totalorder 1, %s16
      %p219 = scmp.lt.s32.totalorder %s16, 5
      %p220 = pnand %p218, %p219
      %p221 = pneg %p220
      // Predicated region
      $region9: #{tpu_custom_call.1} parent=5 // pred_check
        _
      $region10: #{tpu_custom_call.1} parent=5 // pred_check_branch
        %223 = sbr.rel (%p220) target = $region12
      $region11: #{tpu_custom_call.1} parent=5 // pred_region
        %s224 = ssub.s32 %s16, 1
        // Predicated region
        $region13: #{tpu_custom_call.1} parent=11 // pred_check
          %p225 = pneg %p77
        $region14: #{tpu_custom_call.1} parent=11 // pred_check_branch
          %227 = sbr.rel (%p225) target = $region16
        $region15: #{tpu_custom_call.1} parent=11 // pred_region
          _
        $region16: #{tpu_custom_call.1} parent=11 // pred_fallthru
          _
        // Predicated region
        $region17: #{tpu_custom_call.1} parent=11 // pred_check
          %p228 = pneg %p98
        $region18: #{tpu_custom_call.1} parent=11 // pred_check_branch
          %230 = sbr.rel (%p228) target = $region20
        $region19: #{tpu_custom_call.1} parent=11 // pred_region
          _
        $region20: #{tpu_custom_call.1} parent=11 // pred_fallthru
          _
        // Predicated region
        $region21: #{tpu_custom_call.1} parent=11 // pred_check
          %p231 = pneg %p119
        $region22: #{tpu_custom_call.1} parent=11 // pred_check_branch
          %233 = sbr.rel (%p231) target = $region24
        $region23: #{tpu_custom_call.1} parent=11 // pred_region
          _
        $region24: #{tpu_custom_call.1} parent=11 // pred_fallthru
          _
        // Predicated region
        $region25: #{tpu_custom_call.1} parent=11 // pred_check
          %p234 = pneg %p140
        $region26: #{tpu_custom_call.1} parent=11 // pred_check_branch
          %236 = sbr.rel (%p234) target = $region28
        $region27: #{tpu_custom_call.1} parent=11 // pred_region
          _
        $region28: #{tpu_custom_call.1} parent=11 // pred_fallthru
          _
        // Predicated region
        $region29: #{tpu_custom_call.1} parent=11 // pred_check
          %p237 = pneg %p161
        $region30: #{tpu_custom_call.1} parent=11 // pred_check_branch
          %239 = sbr.rel (%p237) target = $region32
        $region31: #{tpu_custom_call.1} parent=11 // pred_region
          _
        $region32: #{tpu_custom_call.1} parent=11 // pred_fallthru
          _
        // Predicated region
        $region33: #{tpu_custom_call.1} parent=11 // pred_check
          %p240 = pneg %p182
        $region34: #{tpu_custom_call.1} parent=11 // pred_check_branch
          %242 = sbr.rel (%p240) target = $region36
        $region35: #{tpu_custom_call.1} parent=11 // pred_region
          _
        $region36: #{tpu_custom_call.1} parent=11 // pred_fallthru
          _
      $region12: #{tpu_custom_call.1} parent=5 // pred_fallthru
        _
      %p243 = scmp.lt.s32.totalorder %s16, 4
      // Predicated region
      $region37: #{tpu_custom_call.1} parent=5 // pred_check
        %p244 = pneg %p243
      $region38: #{tpu_custom_call.1} parent=5 // pred_check_branch
        %246 = sbr.rel (%p244) target = $region40
      $region39: #{tpu_custom_call.1} parent=5 // pred_region
        // Predicated region
        $region41: #{tpu_custom_call.1} parent=39 // pred_check
          %p247 = pneg %p50
        $region42: #{tpu_custom_call.1} parent=39 // pred_check_branch
          %249 = sbr.rel (%p247) target = $region44
        $region43: #{tpu_custom_call.1} parent=39 // pred_region
          %p250 = scmp.lt.s32.totalorder %s23, 1
          %s251 = scalar_select %p250, %s23, 1
          %p252 = scmp.lt.s32.totalorder %s24, 1
          %s253 = scalar_select %p252, %s24, 1
          %s254 = smul.addr %s253, 30
          %s255 = smul.addr %s251, 60
          %s256 = sadd.s32 %s254, %s255
          %s257 = smul.addr %s256, 8
          %s258 = scalar_lea.vmem %s0, %s257
        $region44: #{tpu_custom_call.1} parent=39 // pred_fallthru
          _
      $region40: #{tpu_custom_call.1} parent=5 // pred_fallthru
        _
      %p259 = scmp.le.s32.totalorder 1, %s16
      %p260 = scmp.lt.s32.totalorder %s16, 5
      %p261 = pnand %p259, %p260
      %p262 = pneg %p261
      // Predicated region
      $region45: #{tpu_custom_call.1} parent=5 // pred_check
        _
      $region46: #{tpu_custom_call.1} parent=5 // pred_check_branch
        %264 = sbr.rel (%p261) target = $region48
      $region47: #{tpu_custom_call.1} parent=5 // pred_region
        %s265 = ssub.s32 %s16, 1
        %p266 = scmp.lt.s32.totalorder %s25, 1
        %s267 = scalar_select %p266, %s25, 1
        %p268 = scmp.lt.s32.totalorder %s26, 1
        %s269 = scalar_select %p268, %s26, 1
        %s270 = smul.addr %s269, 30
        %s271 = smul.addr %s267, 60
        %s272 = sadd.s32 %s270, %s271
        %s273 = smul.addr %s272, 8
        %s274 = scalar_lea.vmem %s0, %s273
        %p275 = pneg %p56
        %p276 = pneg %p53
        %p277 = pneg %p77
        %p278 = pneg %p74
        %p279 = pneg %p98
        %p280 = pneg %p95
        %p281 = pneg %p119
        %p282 = pneg %p116
        %p283 = pneg %p140
        %p284 = pneg %p137
        %p285 = pneg %p161
        %p286 = pneg %p158
        %p287 = pneg %p182
        %p288 = pneg %p179
        %p289 = pneg %p210
        %p290 = pneg %p207
        %s291 = sand.u32 %s197, 1
        %s292 = scalar_lea.sflag [#allocation3], %s291
        %s293 = sand.u32 %s197, 1
        %s294 = smul.addr %s293, 128
        %s295 = scalar_lea.vmem [#allocation2], %s294
        %p296 = scmp.lt.s32.totalorder %s25, 1
        %s297 = scalar_select %p296, %s25, 1
        %p298 = scmp.lt.s32.totalorder %s26, 1
        %s299 = scalar_select %p298, %s26, 1
        %s300 = smul.addr %s299, 30
        %s301 = smul.addr %s297, 60
        %s302 = sadd.s32 %s300, %s301
        %s303 = smul.addr %s302, 8
        %s304 = scalar_lea.vmem %s0, %s303
        %s305 = smul.u32 8, %s26
        %v307 = vld [vmem:[%s304] sm:$0xff]
        %v308 = vld [vmem:[%s304 + $0x8] sm:$0xff]
        %v309 = vld [vmem:[%s304 + $0x10] sm:$0x3]
        %v310 = vld [vmem:[%s304 + $0x18] sm:$0xff]
        %v311 = vld [vmem:[%s304 + $0x20] sm:$0xff]
        %v312 = vld [vmem:[%s304 + $0x28] sm:$0x3]
        %v313 = vld [vmem:[%s304 + $0x30] sm:$0xff]
        %v314 = vld [vmem:[%s304 + $0x38] sm:$0xff]
        %v315 = vld [vmem:[%s304 + $0x40] sm:$0x3]
        %v316 = vld [vmem:[%s304 + $0x48] sm:$0xff]
        %v317 = vld [vmem:[%s304 + $0x50] sm:$0xff]
        %v318 = vld [vmem:[%s304 + $0x58] sm:$0x3]
        %v319 = vld [vmem:[%s304 + $0x60] sm:$0xff]
        %v320 = vld [vmem:[%s304 + $0x68] sm:$0xff]
        %v321 = vld [vmem:[%s304 + $0x70] sm:$0x3]
        %v322 = vld [vmem:[%s304 + $0x78] sm:$0xff]
        %v323 = vld [vmem:[%s304 + $0x80] sm:$0xff]
        %v324 = vld [vmem:[%s304 + $0x88] sm:$0x3]
        %v325 = vld [vmem:[%s304 + $0x90] sm:$0xff]
        %v326 = vld [vmem:[%s304 + $0x98] sm:$0xff]
        %v327 = vld [vmem:[%s304 + $0xa0] sm:$0x3]
        %v328 = vld [vmem:[%s304 + $0xa8] sm:$0xff]
        %v329 = vld [vmem:[%s304 + $0xb0] sm:$0xff]
        %v330 = vld [vmem:[%s304 + $0xb8] sm:$0x3]
        %v331 = vld [vmem:[%s304 + $0xc0] sm:$0xff]
        %v332 = vld [vmem:[%s304 + $0xc8] sm:$0xff]
        %v333 = vld [vmem:[%s304 + $0xd0] sm:$0x3]
        %v334 = vld [vmem:[%s304 + $0xd8] sm:$0xff]
        %v335 = vld [vmem:[%s304 + $0xe0] sm:$0xff]
        %v336 = vld [vmem:[%s304 + $0xe8] sm:$0x3]
        %v367 = vcombine.high %v307, %v307
        %v369 = vunpack.c.l.s4 1983009808
        %v370 = vunpack.c.0.s8 %v369
        %v371 = vlaneseq
        %v372 = vshrl.u32 %v371, 7
        %v373 = vsub.s32 %v370, %v372
        %v374 = vrot.slane %v307, %v373
        %v376 = vunpack.c.l.s4 1983009808
        %v377 = vunpack.c.0.s8 %v376
        %v378 = vlaneseq
        %v379 = vshrl.u32 %v378, 7
        %v380 = vsub.s32 %v377, %v379
        %v381 = vrot.slane %v367, %v380
        %v382 = vcombine.high %v374, %v374
        %v383 = vcombine.high %v381, %v381
        %v384 = vcombine.high %v308, %v308
        %v386 = vunpack.c.l.s4 1983009808
        %v387 = vunpack.c.0.s8 %v386
        %v388 = vlaneseq
        %v389 = vshrl.u32 %v388, 7
        %v390 = vsub.s32 %v387, %v389
        %v391 = vrot.slane %v308, %v390
        %v393 = vunpack.c.l.s4 1983009808
        %v394 = vunpack.c.0.s8 %v393
        %v395 = vlaneseq
        %v396 = vshrl.u32 %v395, 7
        %v397 = vsub.s32 %v394, %v396
        %v398 = vrot.slane %v384, %v397
        %v399 = vcombine.high %v391, %v391
        %v400 = vcombine.high %v398, %v398
        %v402 = vunpack.c.l.s4 1983009808
        %v403 = vunpack.c.0.s8 %v402
        %v404 = vlaneseq
        %v405 = vshrl.u32 %v404, 7
        %v406 = vsub.s32 %v403, %v405
        %v407 = vrot.slane %v309, %v406
        %v408 = vcombine.high %v310, %v310
        %v410 = vunpack.c.l.s4 1983009808
        %v411 = vunpack.c.0.s8 %v410
        %v412 = vlaneseq
        %v413 = vshrl.u32 %v412, 7
        %v414 = vsub.s32 %v411, %v413
        %v415 = vrot.slane %v310, %v414
        %v417 = vunpack.c.l.s4 1983009808
        %v418 = vunpack.c.0.s8 %v417
        %v419 = vlaneseq
        %v420 = vshrl.u32 %v419, 7
        %v421 = vsub.s32 %v418, %v420
        %v422 = vrot.slane %v408, %v421
        %v423 = vcombine.high %v415, %v415
        %v424 = vcombine.high %v422, %v422
        %v425 = vcombine.high %v311, %v311
        %v427 = vunpack.c.l.s4 1983009808
        %v428 = vunpack.c.0.s8 %v427
        %v429 = vlaneseq
        %v430 = vshrl.u32 %v429, 7
        %v431 = vsub.s32 %v428, %v430
        %v432 = vrot.slane %v311, %v431
        %v434 = vunpack.c.l.s4 1983009808
        %v435 = vunpack.c.0.s8 %v434
        %v436 = vlaneseq
        %v437 = vshrl.u32 %v436, 7
        %v438 = vsub.s32 %v435, %v437
        %v439 = vrot.slane %v425, %v438
        %v440 = vcombine.high %v432, %v432
        %v441 = vcombine.high %v439, %v439
        %v443 = vunpack.c.l.s4 1983009808
        %v444 = vunpack.c.0.s8 %v443
        %v445 = vlaneseq
        %v446 = vshrl.u32 %v445, 7
        %v447 = vsub.s32 %v444, %v446
        %v448 = vrot.slane %v312, %v447
        %v449 = vcombine.high %v313, %v313
        %v451 = vunpack.c.l.s4 1983009808
        %v452 = vunpack.c.0.s8 %v451
        %v453 = vlaneseq
        %v454 = vshrl.u32 %v453, 7
        %v455 = vsub.s32 %v452, %v454
        %v456 = vrot.slane %v313, %v455
        %v458 = vunpack.c.l.s4 1983009808
        %v459 = vunpack.c.0.s8 %v458
        %v460 = vlaneseq
        %v461 = vshrl.u32 %v460, 7
        %v462 = vsub.s32 %v459, %v461
        %v463 = vrot.slane %v449, %v462
        %v464 = vcombine.high %v456, %v456
        %v465 = vcombine.high %v463, %v463
        %v466 = vcombine.high %v314, %v314
        %v468 = vunpack.c.l.s4 1983009808
        %v469 = vunpack.c.0.s8 %v468
        %v470 = vlaneseq
        %v471 = vshrl.u32 %v470, 7
        %v472 = vsub.s32 %v469, %v471
        %v473 = vrot.slane %v314, %v472
        %v475 = vunpack.c.l.s4 1983009808
        %v476 = vunpack.c.0.s8 %v475
        %v477 = vlaneseq
        %v478 = vshrl.u32 %v477, 7
        %v479 = vsub.s32 %v476, %v478
        %v480 = vrot.slane %v466, %v479
        %v481 = vcombine.high %v473, %v473
        %v482 = vcombine.high %v480, %v480
        %v484 = vunpack.c.l.s4 1983009808
        %v485 = vunpack.c.0.s8 %v484
        %v486 = vlaneseq
        %v487 = vshrl.u32 %v486, 7
        %v488 = vsub.s32 %v485, %v487
        %v489 = vrot.slane %v315, %v488
        %v490 = vcombine.high %v316, %v316
        %v492 = vunpack.c.l.s4 1983009808
        %v493 = vunpack.c.0.s8 %v492
        %v494 = vlaneseq
        %v495 = vshrl.u32 %v494, 7
        %v496 = vsub.s32 %v493, %v495
        %v497 = vrot.slane %v316, %v496
        %v499 = vunpack.c.l.s4 1983009808
        %v500 = vunpack.c.0.s8 %v499
        %v501 = vlaneseq
        %v502 = vshrl.u32 %v501, 7
        %v503 = vsub.s32 %v500, %v502
        %v504 = vrot.slane %v490, %v503
        %v505 = vcombine.high %v497, %v497
        %v506 = vcombine.high %v504, %v504
        %v507 = vcombine.high %v317, %v317
        %v509 = vunpack.c.l.s4 1983009808
        %v510 = vunpack.c.0.s8 %v509
        %v511 = vlaneseq
        %v512 = vshrl.u32 %v511, 7
        %v513 = vsub.s32 %v510, %v512
        %v514 = vrot.slane %v317, %v513
        %v516 = vunpack.c.l.s4 1983009808
        %v517 = vunpack.c.0.s8 %v516
        %v518 = vlaneseq
        %v519 = vshrl.u32 %v518, 7
        %v520 = vsub.s32 %v517, %v519
        %v521 = vrot.slane %v507, %v520
        %v522 = vcombine.high %v514, %v514
        %v523 = vcombine.high %v521, %v521
        %v525 = vunpack.c.l.s4 1983009808
        %v526 = vunpack.c.0.s8 %v525
        %v527 = vlaneseq
        %v528 = vshrl.u32 %v527, 7
        %v529 = vsub.s32 %v526, %v528
        %v530 = vrot.slane %v318, %v529
        %v531 = vcombine.high %v319, %v319
        %v533 = vunpack.c.l.s4 1983009808
        %v534 = vunpack.c.0.s8 %v533
        %v535 = vlaneseq
        %v536 = vshrl.u32 %v535, 7
        %v537 = vsub.s32 %v534, %v536
        %v538 = vrot.slane %v319, %v537
        %v540 = vunpack.c.l.s4 1983009808
        %v541 = vunpack.c.0.s8 %v540
        %v542 = vlaneseq
        %v543 = vshrl.u32 %v542, 7
        %v544 = vsub.s32 %v541, %v543
        %v545 = vrot.slane %v531, %v544
        %v546 = vcombine.high %v538, %v538
        %v547 = vcombine.high %v545, %v545
        %v548 = vcombine.high %v320, %v320
        %v550 = vunpack.c.l.s4 1983009808
        %v551 = vunpack.c.0.s8 %v550
        %v552 = vlaneseq
        %v553 = vshrl.u32 %v552, 7
        %v554 = vsub.s32 %v551, %v553
        %v555 = vrot.slane %v320, %v554
        %v557 = vunpack.c.l.s4 1983009808
        %v558 = vunpack.c.0.s8 %v557
        %v559 = vlaneseq
        %v560 = vshrl.u32 %v559, 7
        %v561 = vsub.s32 %v558, %v560
        %v562 = vrot.slane %v548, %v561
        %v563 = vcombine.high %v555, %v555
        %v564 = vcombine.high %v562, %v562
        %v566 = vunpack.c.l.s4 1983009808
        %v567 = vunpack.c.0.s8 %v566
        %v568 = vlaneseq
        %v569 = vshrl.u32 %v568, 7
        %v570 = vsub.s32 %v567, %v569
        %v571 = vrot.slane %v321, %v570
        %v572 = vcombine.high %v322, %v322
        %v574 = vunpack.c.l.s4 1983009808
        %v575 = vunpack.c.0.s8 %v574
        %v576 = vlaneseq
        %v577 = vshrl.u32 %v576, 7
        %v578 = vsub.s32 %v575, %v577
        %v579 = vrot.slane %v322, %v578
        %v581 = vunpack.c.l.s4 1983009808
        %v582 = vunpack.c.0.s8 %v581
        %v583 = vlaneseq
        %v584 = vshrl.u32 %v583, 7
        %v585 = vsub.s32 %v582, %v584
        %v586 = vrot.slane %v572, %v585
        %v587 = vcombine.high %v579, %v579
        %v588 = vcombine.high %v586, %v586
        %v589 = vcombine.high %v323, %v323
        %v591 = vunpack.c.l.s4 1983009808
        %v592 = vunpack.c.0.s8 %v591
        %v593 = vlaneseq
        %v594 = vshrl.u32 %v593, 7
        %v595 = vsub.s32 %v592, %v594
        %v596 = vrot.slane %v323, %v595
        %v598 = vunpack.c.l.s4 1983009808
        %v599 = vunpack.c.0.s8 %v598
        %v600 = vlaneseq
        %v601 = vshrl.u32 %v600, 7
        %v602 = vsub.s32 %v599, %v601
        %v603 = vrot.slane %v589, %v602
        %v604 = vcombine.high %v596, %v596
        %v605 = vcombine.high %v603, %v603
        %v607 = vunpack.c.l.s4 1983009808
        %v608 = vunpack.c.0.s8 %v607
        %v609 = vlaneseq
        %v610 = vshrl.u32 %v609, 7
        %v611 = vsub.s32 %v608, %v610
        %v612 = vrot.slane %v324, %v611
        %v613 = vcombine.high %v325, %v325
        %v615 = vunpack.c.l.s4 1983009808
        %v616 = vunpack.c.0.s8 %v615
        %v617 = vlaneseq
        %v618 = vshrl.u32 %v617, 7
        %v619 = vsub.s32 %v616, %v618
        %v620 = vrot.slane %v325, %v619
        %v622 = vunpack.c.l.s4 1983009808
        %v623 = vunpack.c.0.s8 %v622
        %v624 = vlaneseq
        %v625 = vshrl.u32 %v624, 7
        %v626 = vsub.s32 %v623, %v625
        %v627 = vrot.slane %v613, %v626
        %v628 = vcombine.high %v620, %v620
        %v629 = vcombine.high %v627, %v627
        %v630 = vcombine.high %v326, %v326
        %v632 = vunpack.c.l.s4 1983009808
        %v633 = vunpack.c.0.s8 %v632
        %v634 = vlaneseq
        %v635 = vshrl.u32 %v634, 7
        %v636 = vsub.s32 %v633, %v635
        %v637 = vrot.slane %v326, %v636
        %v639 = vunpack.c.l.s4 1983009808
        %v640 = vunpack.c.0.s8 %v639
        %v641 = vlaneseq
        %v642 = vshrl.u32 %v641, 7
        %v643 = vsub.s32 %v640, %v642
        %v644 = vrot.slane %v630, %v643
        %v645 = vcombine.high %v637, %v637
        %v646 = vcombine.high %v644, %v644
        %v648 = vunpack.c.l.s4 1983009808
        %v649 = vunpack.c.0.s8 %v648
        %v650 = vlaneseq
        %v651 = vshrl.u32 %v650, 7
        %v652 = vsub.s32 %v649, %v651
        %v653 = vrot.slane %v327, %v652
        %v654 = vcombine.high %v328, %v328
        %v656 = vunpack.c.l.s4 1983009808
        %v657 = vunpack.c.0.s8 %v656
        %v658 = vlaneseq
        %v659 = vshrl.u32 %v658, 7
        %v660 = vsub.s32 %v657, %v659
        %v661 = vrot.slane %v328, %v660
        %v663 = vunpack.c.l.s4 1983009808
        %v664 = vunpack.c.0.s8 %v663
        %v665 = vlaneseq
        %v666 = vshrl.u32 %v665, 7
        %v667 = vsub.s32 %v664, %v666
        %v668 = vrot.slane %v654, %v667
        %v669 = vcombine.high %v661, %v661
        %v670 = vcombine.high %v668, %v668
        %v671 = vcombine.high %v329, %v329
        %v673 = vunpack.c.l.s4 1983009808
        %v674 = vunpack.c.0.s8 %v673
        %v675 = vlaneseq
        %v676 = vshrl.u32 %v675, 7
        %v677 = vsub.s32 %v674, %v676
        %v678 = vrot.slane %v329, %v677
        %v680 = vunpack.c.l.s4 1983009808
        %v681 = vunpack.c.0.s8 %v680
        %v682 = vlaneseq
        %v683 = vshrl.u32 %v682, 7
        %v684 = vsub.s32 %v681, %v683
        %v685 = vrot.slane %v671, %v684
        %v686 = vcombine.high %v678, %v678
        %v687 = vcombine.high %v685, %v685
        %v689 = vunpack.c.l.s4 1983009808
        %v690 = vunpack.c.0.s8 %v689
        %v691 = vlaneseq
        %v692 = vshrl.u32 %v691, 7
        %v693 = vsub.s32 %v690, %v692
        %v694 = vrot.slane %v330, %v693
        %v695 = vcombine.high %v331, %v331
        %v697 = vunpack.c.l.s4 1983009808
        %v698 = vunpack.c.0.s8 %v697
        %v699 = vlaneseq
        %v700 = vshrl.u32 %v699, 7
        %v701 = vsub.s32 %v698, %v700
        %v702 = vrot.slane %v331, %v701
        %v704 = vunpack.c.l.s4 1983009808
        %v705 = vunpack.c.0.s8 %v704
        %v706 = vlaneseq
        %v707 = vshrl.u32 %v706, 7
        %v708 = vsub.s32 %v705, %v707
        %v709 = vrot.slane %v695, %v708
        %v710 = vcombine.high %v702, %v702
        %v711 = vcombine.high %v709, %v709
        %v712 = vcombine.high %v332, %v332
        %v714 = vunpack.c.l.s4 1983009808
        %v715 = vunpack.c.0.s8 %v714
        %v716 = vlaneseq
        %v717 = vshrl.u32 %v716, 7
        %v718 = vsub.s32 %v715, %v717
        %v719 = vrot.slane %v332, %v718
        %v721 = vunpack.c.l.s4 1983009808
        %v722 = vunpack.c.0.s8 %v721
        %v723 = vlaneseq
        %v724 = vshrl.u32 %v723, 7
        %v725 = vsub.s32 %v722, %v724
        %v726 = vrot.slane %v712, %v725
        %v727 = vcombine.high %v719, %v719
        %v728 = vcombine.high %v726, %v726
        %v730 = vunpack.c.l.s4 1983009808
        %v731 = vunpack.c.0.s8 %v730
        %v732 = vlaneseq
        %v733 = vshrl.u32 %v732, 7
        %v734 = vsub.s32 %v731, %v733
        %v735 = vrot.slane %v333, %v734
        %v736 = vcombine.high %v334, %v334
        %v738 = vunpack.c.l.s4 1983009808
        %v739 = vunpack.c.0.s8 %v738
        %v740 = vlaneseq
        %v741 = vshrl.u32 %v740, 7
        %v742 = vsub.s32 %v739, %v741
        %v743 = vrot.slane %v334, %v742
        %v745 = vunpack.c.l.s4 1983009808
        %v746 = vunpack.c.0.s8 %v745
        %v747 = vlaneseq
        %v748 = vshrl.u32 %v747, 7
        %v749 = vsub.s32 %v746, %v748
        %v750 = vrot.slane %v736, %v749
        %v751 = vcombine.high %v743, %v743
        %v752 = vcombine.high %v750, %v750
        %v753 = vcombine.high %v335, %v335
        %v755 = vunpack.c.l.s4 1983009808
        %v756 = vunpack.c.0.s8 %v755
        %v757 = vlaneseq
        %v758 = vshrl.u32 %v757, 7
        %v759 = vsub.s32 %v756, %v758
        %v760 = vrot.slane %v335, %v759
        %v762 = vunpack.c.l.s4 1983009808
        %v763 = vunpack.c.0.s8 %v762
        %v764 = vlaneseq
        %v765 = vshrl.u32 %v764, 7
        %v766 = vsub.s32 %v763, %v765
        %v767 = vrot.slane %v753, %v766
        %v768 = vcombine.high %v760, %v760
        %v769 = vcombine.high %v767, %v767
        %v771 = vunpack.c.l.s4 1983009808
        %v772 = vunpack.c.0.s8 %v771
        %v773 = vlaneseq
        %v774 = vshrl.u32 %v773, 7
        %v775 = vsub.s32 %v772, %v774
        %v776 = vrot.slane %v336, %v775
        %v777 = vcombine.low %v374, %v382
        %v778 = vcombine.low %v381, %v383
        %v780 = vunpack.c.l.s4 1983009808
        %v781 = vunpack.c.0.s8 %v780
        %v782 = vlaneseq
        %v783 = vshrl.u32 %v782, 7
        %v784 = vsub.s32 %v781, %v783
        %v785 = vrot.slane %v777, %v784
        %v787 = vunpack.c.l.s4 1983009808
        %v788 = vunpack.c.0.s8 %v787
        %v789 = vlaneseq
        %v790 = vshrl.u32 %v789, 7
        %v791 = vsub.s32 %v788, %v790
        %v792 = vrot.slane %v778, %v791
        %v793 = vcombine.low %v785, %v792
        %v794 = vcombine.low %v391, %v399
        %v795 = vcombine.low %v398, %v400
        %v797 = vunpack.c.l.s4 1983009808
        %v798 = vunpack.c.0.s8 %v797
        %v799 = vlaneseq
        %v800 = vshrl.u32 %v799, 7
        %v801 = vsub.s32 %v798, %v800
        %v802 = vrot.slane %v794, %v801
        %v804 = vunpack.c.l.s4 1983009808
        %v805 = vunpack.c.0.s8 %v804
        %v806 = vlaneseq
        %v807 = vshrl.u32 %v806, 7
        %v808 = vsub.s32 %v805, %v807
        %v809 = vrot.slane %v795, %v808
        %v810 = vcombine.low %v802, %v809
        %v811 = vcombine.low %v407, %v415
        %v812 = vcombine.low %v423, %v422
        %v814 = vunpack.c.l.s4 1983009808
        %v815 = vunpack.c.0.s8 %v814
        %v816 = vlaneseq
        %v817 = vshrl.u32 %v816, 7
        %v818 = vsub.s32 %v815, %v817
        %v819 = vrot.slane %v811, %v818
        %v821 = vunpack.c.l.s4 1983009808
        %v822 = vunpack.c.0.s8 %v821
        %v823 = vlaneseq
        %v824 = vshrl.u32 %v823, 7
        %v825 = vsub.s32 %v822, %v824
        %v826 = vrot.slane %v812, %v825
        %v827 = vcombine.low %v819, %v826
        %v828 = vcombine.low %v424, %v432
        %v829 = vcombine.low %v440, %v439
        %v831 = vunpack.c.l.s4 1983009808
        %v832 = vunpack.c.0.s8 %v831
        %v833 = vlaneseq
        %v834 = vshrl.u32 %v833, 7
        %v835 = vsub.s32 %v832, %v834
        %v836 = vrot.slane %v828, %v835
        %v838 = vunpack.c.l.s4 1983009808
        %v839 = vunpack.c.0.s8 %v838
        %v840 = vlaneseq
        %v841 = vshrl.u32 %v840, 7
        %v842 = vsub.s32 %v839, %v841
        %v843 = vrot.slane %v829, %v842
        %v844 = vcombine.low %v836, %v843
        %v845 = vcombine.low %v441, %v448
        %v846 = vcombine.low %v456, %v464
        %v848 = vunpack.c.l.s4 1983009808
        %v849 = vunpack.c.0.s8 %v848
        %v850 = vlaneseq
        %v851 = vshrl.u32 %v850, 7
        %v852 = vsub.s32 %v849, %v851
        %v853 = vrot.slane %v845, %v852
        %v855 = vunpack.c.l.s4 1983009808
        %v856 = vunpack.c.0.s8 %v855
        %v857 = vlaneseq
        %v858 = vshrl.u32 %v857, 7
        %v859 = vsub.s32 %v856, %v858
        %v860 = vrot.slane %v846, %v859
        %v861 = vcombine.low %v853, %v860
        %v862 = vcombine.low %v463, %v465
        %v863 = vcombine.low %v473, %v481
        %v865 = vunpack.c.l.s4 1983009808
        %v866 = vunpack.c.0.s8 %v865
        %v867 = vlaneseq
        %v868 = vshrl.u32 %v867, 7
        %v869 = vsub.s32 %v866, %v868
        %v870 = vrot.slane %v862, %v869
        %v872 = vunpack.c.l.s4 1983009808
        %v873 = vunpack.c.0.s8 %v872
        %v874 = vlaneseq
        %v875 = vshrl.u32 %v874, 7
        %v876 = vsub.s32 %v873, %v875
        %v877 = vrot.slane %v863, %v876
        %v878 = vcombine.low %v870, %v877
        %v879 = vcombine.low %v480, %v482
        %v880 = vcombine.low %v489, %v497
        %v882 = vunpack.c.l.s4 1983009808
        %v883 = vunpack.c.0.s8 %v882
        %v884 = vlaneseq
        %v885 = vshrl.u32 %v884, 7
        %v886 = vsub.s32 %v883, %v885
        %v887 = vrot.slane %v879, %v886
        %v889 = vunpack.c.l.s4 1983009808
        %v890 = vunpack.c.0.s8 %v889
        %v891 = vlaneseq
        %v892 = vshrl.u32 %v891, 7
        %v893 = vsub.s32 %v890, %v892
        %v894 = vrot.slane %v880, %v893
        %v895 = vcombine.low %v887, %v894
        %v896 = vcombine.low %v505, %v504
        %v897 = vcombine.low %v506, %v514
        %v899 = vunpack.c.l.s4 1983009808
        %v900 = vunpack.c.0.s8 %v899
        %v901 = vlaneseq
        %v902 = vshrl.u32 %v901, 7
        %v903 = vsub.s32 %v900, %v902
        %v904 = vrot.slane %v896, %v903
        %v906 = vunpack.c.l.s4 1983009808
        %v907 = vunpack.c.0.s8 %v906
        %v908 = vlaneseq
        %v909 = vshrl.u32 %v908, 7
        %v910 = vsub.s32 %v907, %v909
        %v911 = vrot.slane %v897, %v910
        %v912 = vcombine.low %v904, %v911
        %v913 = vcombine.low %v522, %v521
        %v914 = vcombine.low %v523, %v530
        %v916 = vunpack.c.l.s4 1983009808
        %v917 = vunpack.c.0.s8 %v916
        %v918 = vlaneseq
        %v919 = vshrl.u32 %v918, 7
        %v920 = vsub.s32 %v917, %v919
        %v921 = vrot.slane %v913, %v920
        %v923 = vunpack.c.l.s4 1983009808
        %v924 = vunpack.c.0.s8 %v923
        %v925 = vlaneseq
        %v926 = vshrl.u32 %v925, 7
        %v927 = vsub.s32 %v924, %v926
        %v928 = vrot.slane %v914, %v927
        %v929 = vcombine.low %v921, %v928
        %v930 = vcombine.low %v538, %v546
        %v931 = vcombine.low %v545, %v547
        %v933 = vunpack.c.l.s4 1983009808
        %v934 = vunpack.c.0.s8 %v933
        %v935 = vlaneseq
        %v936 = vshrl.u32 %v935, 7
        %v937 = vsub.s32 %v934, %v936
        %v938 = vrot.slane %v930, %v937
        %v940 = vunpack.c.l.s4 1983009808
        %v941 = vunpack.c.0.s8 %v940
        %v942 = vlaneseq
        %v943 = vshrl.u32 %v942, 7
        %v944 = vsub.s32 %v941, %v943
        %v945 = vrot.slane %v931, %v944
        %v946 = vcombine.low %v938, %v945
        %v947 = vcombine.low %v555, %v563
        %v948 = vcombine.low %v562, %v564
        %v950 = vunpack.c.l.s4 1983009808
        %v951 = vunpack.c.0.s8 %v950
        %v952 = vlaneseq
        %v953 = vshrl.u32 %v952, 7
        %v954 = vsub.s32 %v951, %v953
        %v955 = vrot.slane %v947, %v954
        %v957 = vunpack.c.l.s4 1983009808
        %v958 = vunpack.c.0.s8 %v957
        %v959 = vlaneseq
        %v960 = vshrl.u32 %v959, 7
        %v961 = vsub.s32 %v958, %v960
        %v962 = vrot.slane %v948, %v961
        %v963 = vcombine.low %v955, %v962
        %v964 = vcombine.low %v571, %v579
        %v965 = vcombine.low %v587, %v586
        %v967 = vunpack.c.l.s4 1983009808
        %v968 = vunpack.c.0.s8 %v967
        %v969 = vlaneseq
        %v970 = vshrl.u32 %v969, 7
        %v971 = vsub.s32 %v968, %v970
        %v972 = vrot.slane %v964, %v971
        %v974 = vunpack.c.l.s4 1983009808
        %v975 = vunpack.c.0.s8 %v974
        %v976 = vlaneseq
        %v977 = vshrl.u32 %v976, 7
        %v978 = vsub.s32 %v975, %v977
        %v979 = vrot.slane %v965, %v978
        %v980 = vcombine.low %v972, %v979
        %v981 = vcombine.low %v588, %v596
        %v982 = vcombine.low %v604, %v603
        %v984 = vunpack.c.l.s4 1983009808
        %v985 = vunpack.c.0.s8 %v984
        %v986 = vlaneseq
        %v987 = vshrl.u32 %v986, 7
        %v988 = vsub.s32 %v985, %v987
        %v989 = vrot.slane %v981, %v988
        %v991 = vunpack.c.l.s4 1983009808
        %v992 = vunpack.c.0.s8 %v991
        %v993 = vlaneseq
        %v994 = vshrl.u32 %v993, 7
        %v995 = vsub.s32 %v992, %v994
        %v996 = vrot.slane %v982, %v995
        %v997 = vcombine.low %v989, %v996
        %v998 = vcombine.low %v605, %v612
        %v999 = vcombine.low %v620, %v628
        %v1001 = vunpack.c.l.s4 1983009808
        %v1002 = vunpack.c.0.s8 %v1001
        %v1003 = vlaneseq
        %v1004 = vshrl.u32 %v1003, 7
        %v1005 = vsub.s32 %v1002, %v1004
        %v1006 = vrot.slane %v998, %v1005
        %v1008 = vunpack.c.l.s4 1983009808
        %v1009 = vunpack.c.0.s8 %v1008
        %v1010 = vlaneseq
        %v1011 = vshrl.u32 %v1010, 7
        %v1012 = vsub.s32 %v1009, %v1011
        %v1013 = vrot.slane %v999, %v1012
        %v1014 = vcombine.low %v1006, %v1013
        %v1015 = vcombine.low %v627, %v629
        %v1016 = vcombine.low %v637, %v645
        %v1018 = vunpack.c.l.s4 1983009808
        %v1019 = vunpack.c.0.s8 %v1018
        %v1020 = vlaneseq
        %v1021 = vshrl.u32 %v1020, 7
        %v1022 = vsub.s32 %v1019, %v1021
        %v1023 = vrot.slane %v1015, %v1022
        %v1025 = vunpack.c.l.s4 1983009808
        %v1026 = vunpack.c.0.s8 %v1025
        %v1027 = vlaneseq
        %v1028 = vshrl.u32 %v1027, 7
        %v1029 = vsub.s32 %v1026, %v1028
        %v1030 = vrot.slane %v1016, %v1029
        %v1031 = vcombine.low %v1023, %v1030
        %v1032 = vcombine.low %v644, %v646
        %v1033 = vcombine.low %v653, %v661
        %v1035 = vunpack.c.l.s4 1983009808
        %v1036 = vunpack.c.0.s8 %v1035
        %v1037 = vlaneseq
        %v1038 = vshrl.u32 %v1037, 7
        %v1039 = vsub.s32 %v1036, %v1038
        %v1040 = vrot.slane %v1032, %v1039
        %v1042 = vunpack.c.l.s4 1983009808
        %v1043 = vunpack.c.0.s8 %v1042
        %v1044 = vlaneseq
        %v1045 = vshrl.u32 %v1044, 7
        %v1046 = vsub.s32 %v1043, %v1045
        %v1047 = vrot.slane %v1033, %v1046
        %v1048 = vcombine.low %v1040, %v1047
        %v1049 = vcombine.low %v669, %v668
        %v1050 = vcombine.low %v670, %v678
        %v1052 = vunpack.c.l.s4 1983009808
        %v1053 = vunpack.c.0.s8 %v1052
        %v1054 = vlaneseq
        %v1055 = vshrl.u32 %v1054, 7
        %v1056 = vsub.s32 %v1053, %v1055
        %v1057 = vrot.slane %v1049, %v1056
        %v1059 = vunpack.c.l.s4 1983009808
        %v1060 = vunpack.c.0.s8 %v1059
        %v1061 = vlaneseq
        %v1062 = vshrl.u32 %v1061, 7
        %v1063 = vsub.s32 %v1060, %v1062
        %v1064 = vrot.slane %v1050, %v1063
        %v1065 = vcombine.low %v1057, %v1064
        %v1066 = vcombine.low %v686, %v685
        %v1067 = vcombine.low %v687, %v694
        %v1069 = vunpack.c.l.s4 1983009808
        %v1070 = vunpack.c.0.s8 %v1069
        %v1071 = vlaneseq
        %v1072 = vshrl.u32 %v1071, 7
        %v1073 = vsub.s32 %v1070, %v1072
        %v1074 = vrot.slane %v1066, %v1073
        %v1076 = vunpack.c.l.s4 1983009808
        %v1077 = vunpack.c.0.s8 %v1076
        %v1078 = vlaneseq
        %v1079 = vshrl.u32 %v1078, 7
        %v1080 = vsub.s32 %v1077, %v1079
        %v1081 = vrot.slane %v1067, %v1080
        %v1082 = vcombine.low %v1074, %v1081
        %v1083 = vcombine.low %v702, %v710
        %v1084 = vcombine.low %v709, %v711
        %v1086 = vunpack.c.l.s4 1983009808
        %v1087 = vunpack.c.0.s8 %v1086
        %v1088 = vlaneseq
        %v1089 = vshrl.u32 %v1088, 7
        %v1090 = vsub.s32 %v1087, %v1089
        %v1091 = vrot.slane %v1083, %v1090
        %v1093 = vunpack.c.l.s4 1983009808
        %v1094 = vunpack.c.0.s8 %v1093
        %v1095 = vlaneseq
        %v1096 = vshrl.u32 %v1095, 7
        %v1097 = vsub.s32 %v1094, %v1096
        %v1098 = vrot.slane %v1084, %v1097
        %v1099 = vcombine.low %v1091, %v1098
        %v1100 = vcombine.low %v719, %v727
        %v1101 = vcombine.low %v726, %v728
        %v1103 = vunpack.c.l.s4 1983009808
        %v1104 = vunpack.c.0.s8 %v1103
        %v1105 = vlaneseq
        %v1106 = vshrl.u32 %v1105, 7
        %v1107 = vsub.s32 %v1104, %v1106
        %v1108 = vrot.slane %v1100, %v1107
        %v1110 = vunpack.c.l.s4 1983009808
        %v1111 = vunpack.c.0.s8 %v1110
        %v1112 = vlaneseq
        %v1113 = vshrl.u32 %v1112, 7
        %v1114 = vsub.s32 %v1111, %v1113
        %v1115 = vrot.slane %v1101, %v1114
        %v1116 = vcombine.low %v1108, %v1115
        %v1117 = vcombine.low %v735, %v743
        %v1118 = vcombine.low %v751, %v750
        %v1120 = vunpack.c.l.s4 1983009808
        %v1121 = vunpack.c.0.s8 %v1120
        %v1122 = vlaneseq
        %v1123 = vshrl.u32 %v1122, 7
        %v1124 = vsub.s32 %v1121, %v1123
        %v1125 = vrot.slane %v1117, %v1124
        %v1127 = vunpack.c.l.s4 1983009808
        %v1128 = vunpack.c.0.s8 %v1127
        %v1129 = vlaneseq
        %v1130 = vshrl.u32 %v1129, 7
        %v1131 = vsub.s32 %v1128, %v1130
        %v1132 = vrot.slane %v1118, %v1131
        %v1133 = vcombine.low %v1125, %v1132
        %v1134 = vcombine.low %v752, %v760
        %v1135 = vcombine.low %v768, %v767
        %v1137 = vunpack.c.l.s4 1983009808
        %v1138 = vunpack.c.0.s8 %v1137
        %v1139 = vlaneseq
        %v1140 = vshrl.u32 %v1139, 7
        %v1141 = vsub.s32 %v1138, %v1140
        %v1142 = vrot.slane %v1134, %v1141
        %v1144 = vunpack.c.l.s4 1983009808
        %v1145 = vunpack.c.0.s8 %v1144
        %v1146 = vlaneseq
        %v1147 = vshrl.u32 %v1146, 7
        %v1148 = vsub.s32 %v1145, %v1147
        %v1149 = vrot.slane %v1135, %v1148
        %v1150 = vcombine.low %v1142, %v1149
        %v1151 = vcombine.low %v769, %v776
        %v1153 = vunpack.c.l.s4 1983009808
        %v1154 = vunpack.c.0.s8 %v1153
        %v1155 = vlaneseq
        %v1156 = vshrl.u32 %v1155, 7
        %v1157 = vsub.s32 %v1154, %v1156
        %v1158 = vrot.slane %v1151, %v1157
        %v1182 = vpack.c.bf16 %v810, %v793
        %v1183 = vpack.c.bf16 %v844, %v827
        %v1184 = vpack.c.bf16 %v878, %v861
        %v1185 = vpack.c.bf16 %v912, %v895
        %v1186 = vpack.c.bf16 %v946, %v929
        %v1187 = vpack.c.bf16 %v980, %v963
        %v1188 = vpack.c.bf16 %v1014, %v997
        %v1189 = vpack.c.bf16 %v1048, %v1031
        %v1190 = vpack.c.bf16 %v1082, %v1065
        %v1191 = vpack.c.bf16 %v1116, %v1099
        %v1192 = vpack.c.bf16 %v1150, %v1133
        %v1193 = vpack.c.bf16 %v1158, %v1158
        %v1194 = vld [vmem:[%s1] sm:$0xf]
        %v1195 = vld [vmem:[%s1 + $0x4] sm:$0xf]
        %v1196 = vld [vmem:[%s1 + $0x8] sm:$0xf]
        %v1197 = vld [vmem:[%s1 + $0xc] sm:$0xf]
        %v1198 = vld [vmem:[%s1 + $0x10] sm:$0xf]
        %v1199 = vld [vmem:[%s1 + $0x14] sm:$0xf]
        %v1200 = vld [vmem:[%s1 + $0x18] sm:$0xf]
        %v1201 = vld [vmem:[%s1 + $0x1c] sm:$0xf]
        %v1202 = vld [vmem:[%s1 + $0x20] sm:$0xf]
        %v1203 = vld [vmem:[%s1 + $0x24] sm:$0xf]
        %v1204 = vld [vmem:[%s1 + $0x28] sm:$0xf]
        %v1205 = vld [vmem:[%s1 + $0x2c] sm:$0xf]
        %v1206 = vld [vmem:[%s1 + $0x30] sm:$0xf]
        %v1207 = vld [vmem:[%s1 + $0x34] sm:$0xf]
        %v1208 = vld [vmem:[%s1 + $0x38] sm:$0xf]
        %v1209 = vld [vmem:[%s1 + $0x3c] sm:$0xf]
        %v1210 = vld [vmem:[%s2] sm:$0x1]
        %v1212 = vlaneseq
        %v1213 = vshrl.u32 %v1212, 7
        %v1214 = vsub.s32 0, %v1213
        %v1215 = vrot.slane %v1210, %v1214
        %v1233 = vunpack.c.l.b16 %v1194
        %v1234 = vunpack.c.l.b16 %v1195
        %v1235 = vunpack.c.l.b16 %v1196
        %v1236 = vunpack.c.l.b16 %v1197
        %v1237 = vunpack.c.l.b16 %v1198
        %v1238 = vunpack.c.l.b16 %v1199
        %v1239 = vunpack.c.l.b16 %v1200
        %v1240 = vunpack.c.l.b16 %v1201
        %v1241 = vunpack.c.l.b16 %v1202
        %v1242 = vunpack.c.l.b16 %v1203
        %v1243 = vunpack.c.l.b16 %v1204
        %v1244 = vunpack.c.l.b16 %v1205
        %v1245 = vunpack.c.l.b16 %v1206
        %v1246 = vunpack.c.l.b16 %v1207
        %v1247 = vunpack.c.l.b16 %v1208
        %v1248 = vunpack.c.l.b16 %v1209
        %v1249 = vpack.c.b16 %v1234, %v1233
        %v1250 = vpack.c.b16 %v1236, %v1235
        %v1251 = vpack.c.b16 %v1238, %v1237
        %v1252 = vpack.c.b16 %v1240, %v1239
        %v1253 = vpack.c.b16 %v1242, %v1241
        %v1254 = vpack.c.b16 %v1244, %v1243
        %v1255 = vpack.c.b16 %v1246, %v1245
        %v1256 = vpack.c.b16 %v1248, %v1247
        %1265 = vmatprep.subr.bf16.mxu0 0
        %1266 = vmatpush1.bf16.msra.mxu0 %v1249
        %1267 = vmatprep.subr.bf16.mxu0 0
        %1268 = vmatpush1.bf16.msra.mxu0 %v1250
        %1269 = vmatprep.subr.bf16.mxu0 0
        %1270 = vmatpush1.bf16.msra.mxu0 %v1251
        %1271 = vmatprep.subr.bf16.mxu0 0
        %1272 = vmatpush1.bf16.msra.mxu0 %v1252
        %1273 = vmatprep.subr.bf16.mxu0 0
        %1274 = vmatpush1.bf16.msra.mxu0 %v1253
        %1275 = vmatprep.subr.bf16.mxu0 0
        %1276 = vmatpush1.bf16.msra.mxu0 %v1254
        %1277 = vmatprep.subr.bf16.mxu0 0
        %1278 = vmatpush1.bf16.msra.mxu0 %v1255
        %1279 = vmatprep.subr.bf16.mxu0 0
        %1280 = vmatpush1.bf16.msra.mxu0 %v1256
        %1281 = vmatprep.subr.bf16.mxu0 0
        %1282 = vmatpush1.bf16.msra.mxu0 0
        %1283 = vmatprep.subr.bf16.mxu0 0
        %1284 = vmatpush1.bf16.msra.mxu0 0
        %1285 = vmatprep.subr.bf16.mxu0 0
        %1286 = vmatpush1.bf16.msra.mxu0 0
        %1287 = vmatprep.subr.bf16.mxu0 0
        %1288 = vmatpush1.bf16.msra.mxu0 0
        %1289 = vmatprep.subr.bf16.mxu0 0
        %1290 = vmatpush1.bf16.msra.mxu0 0
        %1291 = vmatprep.subr.bf16.mxu0 0
        %1292 = vmatpush1.bf16.msra.mxu0 0
        %1293 = vmatprep.subr.bf16.mxu0 0
        %1294 = vmatpush1.bf16.msra.mxu0 0
        %1295 = vmatprep.subr.bf16.mxu0 0
        %1296 = vmatpush1.bf16.msra.mxu0 0
        %1297 = vmatprep.mubr.bf16.mxu0 0
        %1298 = vmatmul.mubr.bf16.gmra.mrb[0].mxu0 %v1182
        %v1299 = vpop.f32.mrb[0].mxu0
        %v1300 = vadd.f32 %v1215, %v1299
        %v1301 = vpop.f32.mrb[0].mxu0
        %v1302 = vpop.f32.mrb[0].mxu0
        %v1303 = vadd.f32 %v1215, %v1302
        %v1304 = vpop.f32.mrb[0].mxu0
        %1305 = vmatprep.mubr.bf16.mxu0 0
        %1306 = vmatmul.mubr.bf16.gmra.mrb[0].mxu0 %v1183
        %v1307 = vpop.f32.mrb[0].mxu0
        %v1308 = vadd.f32 %v1215, %v1307
        %v1309 = vpop.f32.mrb[0].mxu0
        %v1310 = vpop.f32.mrb[0].mxu0
        %v1311 = vadd.f32 %v1215, %v1310
        %v1312 = vpop.f32.mrb[0].mxu0
        %1313 = vmatprep.mubr.bf16.mxu0 0
        %1314 = vmatmul.mubr.bf16.gmra.mrb[0].mxu0 %v1184
        %v1315 = vpop.f32.mrb[0].mxu0
        %v1316 = vadd.f32 %v1215, %v1315
        %v1317 = vpop.f32.mrb[0].mxu0
        %v1318 = vpop.f32.mrb[0].mxu0
        %v1319 = vadd.f32 %v1215, %v1318
        %v1320 = vpop.f32.mrb[0].mxu0
        %1321 = vmatprep.mubr.bf16.mxu0 0
        %1322 = vmatmul.mubr.bf16.gmra.mrb[0].mxu0 %v1185
        %v1323 = vpop.f32.mrb[0].mxu0
        %v1324 = vadd.f32 %v1215, %v1323
        %v1325 = vpop.f32.mrb[0].mxu0
        %v1326 = vpop.f32.mrb[0].mxu0
        %v1327 = vadd.f32 %v1215, %v1326
        %v1328 = vpop.f32.mrb[0].mxu0
        %1329 = vmatprep.mubr.bf16.mxu0 0
        %1330 = vmatmul.mubr.bf16.gmra.mrb[0].mxu0 %v1186
        %v1331 = vpop.f32.mrb[0].mxu0
        %v1332 = vadd.f32 %v1215, %v1331
        %v1333 = vpop.f32.mrb[0].mxu0
        %v1334 = vpop.f32.mrb[0].mxu0
        %v1335 = vadd.f32 %v1215, %v1334
        %v1336 = vpop.f32.mrb[0].mxu0
        %1337 = vmatprep.mubr.bf16.mxu0 0
        %1338 = vmatmul.mubr.bf16.gmra.mrb[0].mxu0 %v1187
        %v1339 = vpop.f32.mrb[0].mxu0
        %v1340 = vadd.f32 %v1215, %v1339
        %v1341 = vpop.f32.mrb[0].mxu0
        %v1342 = vpop.f32.mrb[0].mxu0
        %v1343 = vadd.f32 %v1215, %v1342
        %v1344 = vpop.f32.mrb[0].mxu0
        %1345 = vmatprep.mubr.bf16.mxu0 0
        %1346 = vmatmul.mubr.bf16.gmra.mrb[0].mxu0 %v1188
        %v1347 = vpop.f32.mrb[0].mxu0
        %v1348 = vadd.f32 %v1215, %v1347
        %v1349 = vpop.f32.mrb[0].mxu0
        %v1350 = vpop.f32.mrb[0].mxu0
        %v1351 = vadd.f32 %v1215, %v1350
        %v1352 = vpop.f32.mrb[0].mxu0
        %1353 = vmatprep.mubr.bf16.mxu0 0
        %1354 = vmatmul.mubr.bf16.gmra.mrb[0].mxu0 %v1189
        %v1355 = vpop.f32.mrb[0].mxu0
        %v1356 = vadd.f32 %v1215, %v1355
        %v1357 = vpop.f32.mrb[0].mxu0
        %v1358 = vpop.f32.mrb[0].mxu0
        %v1359 = vadd.f32 %v1215, %v1358
        %v1360 = vpop.f32.mrb[0].mxu0
        %1361 = vmatprep.mubr.bf16.mxu0 0
        %1362 = vmatmul.mubr.bf16.gmra.mrb[0].mxu0 %v1190
        %v1363 = vpop.f32.mrb[0].mxu0
        %v1364 = vadd.f32 %v1215, %v1363
        %v1365 = vpop.f32.mrb[0].mxu0
        %v1366 = vpop.f32.mrb[0].mxu0
        %v1367 = vadd.f32 %v1215, %v1366
        %v1368 = vpop.f32.mrb[0].mxu0
        %1369 = vmatprep.mubr.bf16.mxu0 0
        %1370 = vmatmul.mubr.bf16.gmra.mrb[0].mxu0 %v1191
        %v1371 = vpop.f32.mrb[0].mxu0
        %v1372 = vadd.f32 %v1215, %v1371
        %v1373 = vpop.f32.mrb[0].mxu0
        %v1374 = vpop.f32.mrb[0].mxu0
        %v1375 = vadd.f32 %v1215, %v1374
        %v1376 = vpop.f32.mrb[0].mxu0
        %1377 = vmatprep.mubr.bf16.mxu0 0
        %1378 = vmatmul.mubr.bf16.gmra.mrb[0].mxu0 %v1192
        %v1379 = vpop.f32.mrb[0].mxu0
        %v1380 = vadd.f32 %v1215, %v1379
        %v1381 = vpop.f32.mrb[0].mxu0
        %v1382 = vpop.f32.mrb[0].mxu0
        %v1383 = vadd.f32 %v1215, %v1382
        %v1384 = vpop.f32.mrb[0].mxu0
        %1385 = vmatprep.mubr.bf16.mxu0 0
        %1386 = vmatmul.mubr.bf16.gmra.mrb[0].mxu0 %v1193
        %v1387 = vpop.f32.mrb[0].mxu0
        %v1388 = vadd.f32 %v1215, %v1387
        %v1389 = vpop.f32.mrb[0].mxu0
        %v1390 = vpop.f32.mrb[0].mxu0
        %v1391 = vpop.f32.mrb[0].mxu0
        %1392 = vdwg.mxu0
        %v1393 = vmax.f32 %v1300, 0.0
        %v1394 = vmax.f32 %v1303, 0.0
        %v1395 = vmax.f32 %v1308, 0.0
        %v1396 = vmax.f32 %v1311, 0.0
        %v1397 = vmax.f32 %v1316, 0.0
        %v1398 = vmax.f32 %v1319, 0.0
        %v1399 = vmax.f32 %v1324, 0.0
        %v1400 = vmax.f32 %v1327, 0.0
        %v1401 = vmax.f32 %v1332, 0.0
        %v1402 = vmax.f32 %v1335, 0.0
        %v1403 = vmax.f32 %v1340, 0.0
        %v1404 = vmax.f32 %v1343, 0.0
        %v1405 = vmax.f32 %v1348, 0.0
        %v1406 = vmax.f32 %v1351, 0.0
        %v1407 = vmax.f32 %v1356, 0.0
        %v1408 = vmax.f32 %v1359, 0.0
        %v1409 = vmax.f32 %v1364, 0.0
        %v1410 = vmax.f32 %v1367, 0.0
        %v1411 = vmax.f32 %v1372, 0.0
        %v1412 = vmax.f32 %v1375, 0.0
        %v1413 = vmax.f32 %v1380, 0.0
        %v1414 = vmax.f32 %v1383, 0.0
        %v1415 = vmax.f32 %v1388, 0.0
        %v1439 = vcombine.high %v1393, %v1393
        %v1441 = vunpack.c.l.s4 1983009808
        %v1442 = vunpack.c.0.s8 %v1441
        %v1443 = vlaneseq
        %v1444 = vshrl.u32 %v1443, 7
        %v1445 = vsub.s32 %v1442, %v1444
        %v1446 = vrot.slane %v1393, %v1445
        %v1448 = vunpack.c.l.s4 1983009808
        %v1449 = vunpack.c.0.s8 %v1448
        %v1450 = vlaneseq
        %v1451 = vshrl.u32 %v1450, 7
        %v1452 = vsub.s32 %v1449, %v1451
        %v1453 = vrot.slane %v1439, %v1452
        %v1454 = vcombine.high %v1446, %v1446
        %v1455 = vcombine.high %v1453, %v1453
        %v1456 = vcombine.high %v1394, %v1394
        %v1458 = vunpack.c.l.s4 1983009808
        %v1459 = vunpack.c.0.s8 %v1458
        %v1460 = vlaneseq
        %v1461 = vshrl.u32 %v1460, 7
        %v1462 = vsub.s32 %v1459, %v1461
        %v1463 = vrot.slane %v1394, %v1462
        %v1465 = vunpack.c.l.s4 1983009808
        %v1466 = vunpack.c.0.s8 %v1465
        %v1467 = vlaneseq
        %v1468 = vshrl.u32 %v1467, 7
        %v1469 = vsub.s32 %v1466, %v1468
        %v1470 = vrot.slane %v1456, %v1469
        %v1471 = vcombine.high %v1463, %v1463
        %v1472 = vcombine.high %v1470, %v1470
        %v1473 = vcombine.high %v1395, %v1395
        %v1475 = vunpack.c.l.s4 1983009808
        %v1476 = vunpack.c.0.s8 %v1475
        %v1477 = vlaneseq
        %v1478 = vshrl.u32 %v1477, 7
        %v1479 = vsub.s32 %v1476, %v1478
        %v1480 = vrot.slane %v1395, %v1479
        %v1482 = vunpack.c.l.s4 1983009808
        %v1483 = vunpack.c.0.s8 %v1482
        %v1484 = vlaneseq
        %v1485 = vshrl.u32 %v1484, 7
        %v1486 = vsub.s32 %v1483, %v1485
        %v1487 = vrot.slane %v1473, %v1486
        %v1488 = vcombine.high %v1480, %v1480
        %v1489 = vcombine.high %v1487, %v1487
        %v1490 = vcombine.high %v1396, %v1396
        %v1492 = vunpack.c.l.s4 1983009808
        %v1493 = vunpack.c.0.s8 %v1492
        %v1494 = vlaneseq
        %v1495 = vshrl.u32 %v1494, 7
        %v1496 = vsub.s32 %v1493, %v1495
        %v1497 = vrot.slane %v1396, %v1496
        %v1499 = vunpack.c.l.s4 1983009808
        %v1500 = vunpack.c.0.s8 %v1499
        %v1501 = vlaneseq
        %v1502 = vshrl.u32 %v1501, 7
        %v1503 = vsub.s32 %v1500, %v1502
        %v1504 = vrot.slane %v1490, %v1503
        %v1505 = vcombine.high %v1497, %v1497
        %v1506 = vcombine.high %v1504, %v1504
        %v1507 = vcombine.high %v1397, %v1397
        %v1509 = vunpack.c.l.s4 1983009808
        %v1510 = vunpack.c.0.s8 %v1509
        %v1511 = vlaneseq
        %v1512 = vshrl.u32 %v1511, 7
        %v1513 = vsub.s32 %v1510, %v1512
        %v1514 = vrot.slane %v1397, %v1513
        %v1516 = vunpack.c.l.s4 1983009808
        %v1517 = vunpack.c.0.s8 %v1516
        %v1518 = vlaneseq
        %v1519 = vshrl.u32 %v1518, 7
        %v1520 = vsub.s32 %v1517, %v1519
        %v1521 = vrot.slane %v1507, %v1520
        %v1522 = vcombine.high %v1514, %v1514
        %v1523 = vcombine.high %v1521, %v1521
        %v1524 = vcombine.high %v1398, %v1398
        %v1526 = vunpack.c.l.s4 1983009808
        %v1527 = vunpack.c.0.s8 %v1526
        %v1528 = vlaneseq
        %v1529 = vshrl.u32 %v1528, 7
        %v1530 = vsub.s32 %v1527, %v1529
        %v1531 = vrot.slane %v1398, %v1530
        %v1533 = vunpack.c.l.s4 1983009808
        %v1534 = vunpack.c.0.s8 %v1533
        %v1535 = vlaneseq
        %v1536 = vshrl.u32 %v1535, 7
        %v1537 = vsub.s32 %v1534, %v1536
        %v1538 = vrot.slane %v1524, %v1537
        %v1539 = vcombine.high %v1531, %v1531
        %v1540 = vcombine.high %v1538, %v1538
        %v1541 = vcombine.high %v1399, %v1399
        %v1543 = vunpack.c.l.s4 1983009808
        %v1544 = vunpack.c.0.s8 %v1543
        %v1545 = vlaneseq
        %v1546 = vshrl.u32 %v1545, 7
        %v1547 = vsub.s32 %v1544, %v1546
        %v1548 = vrot.slane %v1399, %v1547
        %v1550 = vunpack.c.l.s4 1983009808
        %v1551 = vunpack.c.0.s8 %v1550
        %v1552 = vlaneseq
        %v1553 = vshrl.u32 %v1552, 7
        %v1554 = vsub.s32 %v1551, %v1553
        %v1555 = vrot.slane %v1541, %v1554
        %v1556 = vcombine.high %v1548, %v1548
        %v1557 = vcombine.high %v1555, %v1555
        %v1558 = vcombine.high %v1400, %v1400
        %v1560 = vunpack.c.l.s4 1983009808
        %v1561 = vunpack.c.0.s8 %v1560
        %v1562 = vlaneseq
        %v1563 = vshrl.u32 %v1562, 7
        %v1564 = vsub.s32 %v1561, %v1563
        %v1565 = vrot.slane %v1400, %v1564
        %v1567 = vunpack.c.l.s4 1983009808
        %v1568 = vunpack.c.0.s8 %v1567
        %v1569 = vlaneseq
        %v1570 = vshrl.u32 %v1569, 7
        %v1571 = vsub.s32 %v1568, %v1570
        %v1572 = vrot.slane %v1558, %v1571
        %v1573 = vcombine.high %v1565, %v1565
        %v1574 = vcombine.high %v1572, %v1572
        %v1575 = vcombine.high %v1401, %v1401
        %v1577 = vunpack.c.l.s4 1983009808
        %v1578 = vunpack.c.0.s8 %v1577
        %v1579 = vlaneseq
        %v1580 = vshrl.u32 %v1579, 7
        %v1581 = vsub.s32 %v1578, %v1580
        %v1582 = vrot.slane %v1401, %v1581
        %v1584 = vunpack.c.l.s4 1983009808
        %v1585 = vunpack.c.0.s8 %v1584
        %v1586 = vlaneseq
        %v1587 = vshrl.u32 %v1586, 7
        %v1588 = vsub.s32 %v1585, %v1587
        %v1589 = vrot.slane %v1575, %v1588
        %v1590 = vcombine.high %v1582, %v1582
        %v1591 = vcombine.high %v1589, %v1589
        %v1592 = vcombine.high %v1402, %v1402
        %v1594 = vunpack.c.l.s4 1983009808
        %v1595 = vunpack.c.0.s8 %v1594
        %v1596 = vlaneseq
        %v1597 = vshrl.u32 %v1596, 7
        %v1598 = vsub.s32 %v1595, %v1597
        %v1599 = vrot.slane %v1402, %v1598
        %v1601 = vunpack.c.l.s4 1983009808
        %v1602 = vunpack.c.0.s8 %v1601
        %v1603 = vlaneseq
        %v1604 = vshrl.u32 %v1603, 7
        %v1605 = vsub.s32 %v1602, %v1604
        %v1606 = vrot.slane %v1592, %v1605
        %v1607 = vcombine.high %v1599, %v1599
        %v1608 = vcombine.high %v1606, %v1606
        %v1609 = vcombine.high %v1403, %v1403
        %v1611 = vunpack.c.l.s4 1983009808
        %v1612 = vunpack.c.0.s8 %v1611
        %v1613 = vlaneseq
        %v1614 = vshrl.u32 %v1613, 7
        %v1615 = vsub.s32 %v1612, %v1614
        %v1616 = vrot.slane %v1403, %v1615
        %v1618 = vunpack.c.l.s4 1983009808
        %v1619 = vunpack.c.0.s8 %v1618
        %v1620 = vlaneseq
        %v1621 = vshrl.u32 %v1620, 7
        %v1622 = vsub.s32 %v1619, %v1621
        %v1623 = vrot.slane %v1609, %v1622
        %v1624 = vcombine.high %v1616, %v1616
        %v1625 = vcombine.high %v1623, %v1623
        %v1626 = vcombine.high %v1404, %v1404
        %v1628 = vunpack.c.l.s4 1983009808
        %v1629 = vunpack.c.0.s8 %v1628
        %v1630 = vlaneseq
        %v1631 = vshrl.u32 %v1630, 7
        %v1632 = vsub.s32 %v1629, %v1631
        %v1633 = vrot.slane %v1404, %v1632
        %v1635 = vunpack.c.l.s4 1983009808
        %v1636 = vunpack.c.0.s8 %v1635
        %v1637 = vlaneseq
        %v1638 = vshrl.u32 %v1637, 7
        %v1639 = vsub.s32 %v1636, %v1638
        %v1640 = vrot.slane %v1626, %v1639
        %v1641 = vcombine.high %v1633, %v1633
        %v1642 = vcombine.high %v1640, %v1640
        %v1643 = vcombine.high %v1405, %v1405
        %v1645 = vunpack.c.l.s4 1983009808
        %v1646 = vunpack.c.0.s8 %v1645
        %v1647 = vlaneseq
        %v1648 = vshrl.u32 %v1647, 7
        %v1649 = vsub.s32 %v1646, %v1648
        %v1650 = vrot.slane %v1405, %v1649
        %v1652 = vunpack.c.l.s4 1983009808
        %v1653 = vunpack.c.0.s8 %v1652
        %v1654 = vlaneseq
        %v1655 = vshrl.u32 %v1654, 7
        %v1656 = vsub.s32 %v1653, %v1655
        %v1657 = vrot.slane %v1643, %v1656
        %v1658 = vcombine.high %v1650, %v1650
        %v1659 = vcombine.high %v1657, %v1657
        %v1660 = vcombine.high %v1406, %v1406
        %v1662 = vunpack.c.l.s4 1983009808
        %v1663 = vunpack.c.0.s8 %v1662
        %v1664 = vlaneseq
        %v1665 = vshrl.u32 %v1664, 7
        %v1666 = vsub.s32 %v1663, %v1665
        %v1667 = vrot.slane %v1406, %v1666
        %v1669 = vunpack.c.l.s4 1983009808
        %v1670 = vunpack.c.0.s8 %v1669
        %v1671 = vlaneseq
        %v1672 = vshrl.u32 %v1671, 7
        %v1673 = vsub.s32 %v1670, %v1672
        %v1674 = vrot.slane %v1660, %v1673
        %v1675 = vcombine.high %v1667, %v1667
        %v1676 = vcombine.high %v1674, %v1674
        %v1677 = vcombine.high %v1407, %v1407
        %v1679 = vunpack.c.l.s4 1983009808
        %v1680 = vunpack.c.0.s8 %v1679
        %v1681 = vlaneseq
        %v1682 = vshrl.u32 %v1681, 7
        %v1683 = vsub.s32 %v1680, %v1682
        %v1684 = vrot.slane %v1407, %v1683
        %v1686 = vunpack.c.l.s4 1983009808
        %v1687 = vunpack.c.0.s8 %v1686
        %v1688 = vlaneseq
        %v1689 = vshrl.u32 %v1688, 7
        %v1690 = vsub.s32 %v1687, %v1689
        %v1691 = vrot.slane %v1677, %v1690
        %v1692 = vcombine.high %v1684, %v1684
        %v1693 = vcombine.high %v1691, %v1691
        %v1694 = vcombine.high %v1408, %v1408
        %v1696 = vunpack.c.l.s4 1983009808
        %v1697 = vunpack.c.0.s8 %v1696
        %v1698 = vlaneseq
        %v1699 = vshrl.u32 %v1698, 7
        %v1700 = vsub.s32 %v1697, %v1699
        %v1701 = vrot.slane %v1408, %v1700
        %v1703 = vunpack.c.l.s4 1983009808
        %v1704 = vunpack.c.0.s8 %v1703
        %v1705 = vlaneseq
        %v1706 = vshrl.u32 %v1705, 7
        %v1707 = vsub.s32 %v1704, %v1706
        %v1708 = vrot.slane %v1694, %v1707
        %v1709 = vcombine.high %v1701, %v1701
        %v1710 = vcombine.high %v1708, %v1708
        %v1711 = vcombine.high %v1409, %v1409
        %v1713 = vunpack.c.l.s4 1983009808
        %v1714 = vunpack.c.0.s8 %v1713
        %v1715 = vlaneseq
        %v1716 = vshrl.u32 %v1715, 7
        %v1717 = vsub.s32 %v1714, %v1716
        %v1718 = vrot.slane %v1409, %v1717
        %v1720 = vunpack.c.l.s4 1983009808
        %v1721 = vunpack.c.0.s8 %v1720
        %v1722 = vlaneseq
        %v1723 = vshrl.u32 %v1722, 7
        %v1724 = vsub.s32 %v1721, %v1723
        %v1725 = vrot.slane %v1711, %v1724
        %v1726 = vcombine.high %v1718, %v1718
        %v1727 = vcombine.high %v1725, %v1725
        %v1728 = vcombine.high %v1410, %v1410
        %v1730 = vunpack.c.l.s4 1983009808
        %v1731 = vunpack.c.0.s8 %v1730
        %v1732 = vlaneseq
        %v1733 = vshrl.u32 %v1732, 7
        %v1734 = vsub.s32 %v1731, %v1733
        %v1735 = vrot.slane %v1410, %v1734
        %v1737 = vunpack.c.l.s4 1983009808
        %v1738 = vunpack.c.0.s8 %v1737
        %v1739 = vlaneseq
        %v1740 = vshrl.u32 %v1739, 7
        %v1741 = vsub.s32 %v1738, %v1740
        %v1742 = vrot.slane %v1728, %v1741
        %v1743 = vcombine.high %v1735, %v1735
        %v1744 = vcombine.high %v1742, %v1742
        %v1745 = vcombine.high %v1411, %v1411
        %v1747 = vunpack.c.l.s4 1983009808
        %v1748 = vunpack.c.0.s8 %v1747
        %v1749 = vlaneseq
        %v1750 = vshrl.u32 %v1749, 7
        %v1751 = vsub.s32 %v1748, %v1750
        %v1752 = vrot.slane %v1411, %v1751
        %v1754 = vunpack.c.l.s4 1983009808
        %v1755 = vunpack.c.0.s8 %v1754
        %v1756 = vlaneseq
        %v1757 = vshrl.u32 %v1756, 7
        %v1758 = vsub.s32 %v1755, %v1757
        %v1759 = vrot.slane %v1745, %v1758
        %v1760 = vcombine.high %v1752, %v1752
        %v1761 = vcombine.high %v1759, %v1759
        %v1762 = vcombine.high %v1412, %v1412
        %v1764 = vunpack.c.l.s4 1983009808
        %v1765 = vunpack.c.0.s8 %v1764
        %v1766 = vlaneseq
        %v1767 = vshrl.u32 %v1766, 7
        %v1768 = vsub.s32 %v1765, %v1767
        %v1769 = vrot.slane %v1412, %v1768
        %v1771 = vunpack.c.l.s4 1983009808
        %v1772 = vunpack.c.0.s8 %v1771
        %v1773 = vlaneseq
        %v1774 = vshrl.u32 %v1773, 7
        %v1775 = vsub.s32 %v1772, %v1774
        %v1776 = vrot.slane %v1762, %v1775
        %v1777 = vcombine.high %v1769, %v1769
        %v1778 = vcombine.high %v1776, %v1776
        %v1779 = vcombine.high %v1413, %v1413
        %v1781 = vunpack.c.l.s4 1983009808
        %v1782 = vunpack.c.0.s8 %v1781
        %v1783 = vlaneseq
        %v1784 = vshrl.u32 %v1783, 7
        %v1785 = vsub.s32 %v1782, %v1784
        %v1786 = vrot.slane %v1413, %v1785
        %v1788 = vunpack.c.l.s4 1983009808
        %v1789 = vunpack.c.0.s8 %v1788
        %v1790 = vlaneseq
        %v1791 = vshrl.u32 %v1790, 7
        %v1792 = vsub.s32 %v1789, %v1791
        %v1793 = vrot.slane %v1779, %v1792
        %v1794 = vcombine.high %v1786, %v1786
        %v1795 = vcombine.high %v1793, %v1793
        %v1796 = vcombine.high %v1414, %v1414
        %v1798 = vunpack.c.l.s4 1983009808
        %v1799 = vunpack.c.0.s8 %v1798
        %v1800 = vlaneseq
        %v1801 = vshrl.u32 %v1800, 7
        %v1802 = vsub.s32 %v1799, %v1801
        %v1803 = vrot.slane %v1414, %v1802
        %v1805 = vunpack.c.l.s4 1983009808
        %v1806 = vunpack.c.0.s8 %v1805
        %v1807 = vlaneseq
        %v1808 = vshrl.u32 %v1807, 7
        %v1809 = vsub.s32 %v1806, %v1808
        %v1810 = vrot.slane %v1796, %v1809
        %v1811 = vcombine.high %v1803, %v1803
        %v1812 = vcombine.high %v1810, %v1810
        %v1814 = vunpack.c.l.s4 1983009808
        %v1815 = vunpack.c.0.s8 %v1814
        %v1816 = vlaneseq
        %v1817 = vshrl.u32 %v1816, 7
        %v1818 = vsub.s32 %v1815, %v1817
        %v1819 = vrot.slane %v1415, %v1818
        %v1820 = vcombine.high %v1819, %v1819
        %s1821 = smul.u32 %s26, 8
        %v1822 = vstv %s1821
        %v1823 = vadd.s32 %v1822, 1
        %v1824 = vadd.s32 %v1822, 2
        %v1825 = vadd.s32 %v1822, 3
        %v1826 = vadd.s32 %v1822, 4
        %v1827 = vadd.s32 %v1822, 5
        %v1828 = vadd.s32 %v1822, 6
        %v1829 = vadd.s32 %v1822, 7
        %v1830 = vadd.s32 %v1822, 8
        %v1831 = vadd.s32 %v1822, 9
        %v1832 = vlaneseq
        %v1833 = vshrl.u32 %v1832, 7
        %v1834 = vadd.s32 %v1833, 8
        %v1835 = vadd.s32 %v1833, 16
        %vm1836 = vcmp.eq.s32.totalorder %v1822, 0
        %vm1837 = vcmp.eq.s32.totalorder %v1823, 0
        %vm1838 = vcmp.eq.s32.totalorder %v1824, 0
        %vm1839 = vcmp.eq.s32.totalorder %v1825, 0
        %vm1840 = vcmp.eq.s32.totalorder %v1826, 0
        %vm1841 = vcmp.eq.s32.totalorder %v1827, 0
        %vm1842 = vcmp.eq.s32.totalorder %v1828, 0
        %vm1843 = vcmp.eq.s32.totalorder %v1829, 0
        %vm1844 = vcmp.eq.s32.totalorder %v1830, 0
        %vm1845 = vcmp.eq.s32.totalorder %v1831, 0
        %vm1846 = vcmp.eq.s32.totalorder %v1822, 17
        %vm1847 = vcmp.eq.s32.totalorder %v1823, 17
        %vm1848 = vcmp.eq.s32.totalorder %v1824, 17
        %vm1849 = vcmp.eq.s32.totalorder %v1825, 17
        %vm1850 = vcmp.eq.s32.totalorder %v1826, 17
        %vm1851 = vcmp.eq.s32.totalorder %v1827, 17
        %vm1852 = vcmp.eq.s32.totalorder %v1828, 17
        %vm1853 = vcmp.eq.s32.totalorder %v1829, 17
        %vm1854 = vcmp.eq.s32.totalorder %v1830, 17
        %vm1855 = vcmp.eq.s32.totalorder %v1831, 17
        %vm1856 = vmor %vm1836, %vm1846
        %vm1857 = vmor %vm1837, %vm1847
        %vm1858 = vmor %vm1838, %vm1848
        %vm1859 = vmor %vm1839, %vm1849
        %vm1860 = vmor %vm1840, %vm1850
        %vm1861 = vmor %vm1841, %vm1851
        %vm1862 = vmor %vm1842, %vm1852
        %vm1863 = vmor %vm1843, %vm1853
        %vm1864 = vmor %vm1844, %vm1854
        %vm1865 = vmor %vm1845, %vm1855
        %vm1866 = vcmp.eq.s32.totalorder %v1833, 0
        %vm1867 = vcmp.eq.s32.totalorder %v1834, 0
        %vm1868 = vcmp.eq.s32.totalorder %v1835, 0
        %vm1869 = vmor %vm1856, %vm1866
        %vm1870 = vmor %vm1856, %vm1867
        %vm1871 = vmor %vm1856, %vm1868
        %vm1872 = vmor %vm1857, %vm1866
        %vm1873 = vmor %vm1857, %vm1867
        %vm1874 = vmor %vm1857, %vm1868
        %vm1875 = vmor %vm1858, %vm1866
        %vm1876 = vmor %vm1858, %vm1867
        %vm1877 = vmor %vm1858, %vm1868
        %vm1878 = vmor %vm1859, %vm1866
        %vm1879 = vmor %vm1859, %vm1867
        %vm1880 = vmor %vm1859, %vm1868
        %vm1881 = vmor %vm1860, %vm1866
        %vm1882 = vmor %vm1860, %vm1867
        %vm1883 = vmor %vm1860, %vm1868
        %vm1884 = vmor %vm1861, %vm1866
        %vm1885 = vmor %vm1861, %vm1867
        %vm1886 = vmor %vm1861, %vm1868
        %vm1887 = vmor %vm1862, %vm1866
        %vm1888 = vmor %vm1862, %vm1867
        %vm1889 = vmor %vm1862, %vm1868
        %vm1890 = vmor %vm1863, %vm1866
        %vm1891 = vmor %vm1863, %vm1867
        %vm1892 = vmor %vm1863, %vm1868
        %vm1893 = vmor %vm1864, %vm1866
        %vm1894 = vmor %vm1864, %vm1867
        %vm1895 = vmor %vm1864, %vm1868
        %vm1896 = vmor %vm1865, %vm1866
        %vm1897 = vmor %vm1865, %vm1867
        %vm1898 = vmor %vm1865, %vm1868
        %vm1899 = vcmp.eq.s32.totalorder %v1833, 17
        %vm1900 = vcmp.eq.s32.totalorder %v1834, 17
        %vm1901 = vcmp.eq.s32.totalorder %v1835, 17
        %vm1902 = vmor %vm1869, %vm1899
        %vm1903 = vmor %vm1870, %vm1900
        %vm1904 = vmor %vm1871, %vm1901
        %vm1905 = vmor %vm1872, %vm1899
        %vm1906 = vmor %vm1873, %vm1900
        %vm1907 = vmor %vm1874, %vm1901
        %vm1908 = vmor %vm1875, %vm1899
        %vm1909 = vmor %vm1876, %vm1900
        %vm1910 = vmor %vm1877, %vm1901
        %vm1911 = vmor %vm1878, %vm1899
        %vm1912 = vmor %vm1879, %vm1900
        %vm1913 = vmor %vm1880, %vm1901
        %vm1914 = vmor %vm1881, %vm1899
        %vm1915 = vmor %vm1882, %vm1900
        %vm1916 = vmor %vm1883, %vm1901
        %vm1917 = vmor %vm1884, %vm1899
        %vm1918 = vmor %vm1885, %vm1900
        %vm1919 = vmor %vm1886, %vm1901
        %vm1920 = vmor %vm1887, %vm1899
        %vm1921 = vmor %vm1888, %vm1900
        %vm1922 = vmor %vm1889, %vm1901
        %vm1923 = vmor %vm1890, %vm1899
        %vm1924 = vmor %vm1891, %vm1900
        %vm1925 = vmor %vm1892, %vm1901
        %vm1926 = vmor %vm1893, %vm1899
        %vm1927 = vmor %vm1894, %vm1900
        %vm1928 = vmor %vm1895, %vm1901
        %vm1929 = vmor %vm1896, %vm1899
        %vm1930 = vmor %vm1897, %vm1900
        %vm1931 = vmor %vm1898, %vm1901
        %v1932 = vsel %vm1902, 1, 0
        %v1933 = vsel %vm1903, 1, 0
        %v1934 = vsel %vm1904, 1, 0
        %v1935 = vsel %vm1905, 1, 0
        %v1936 = vsel %vm1906, 1, 0
        %v1937 = vsel %vm1907, 1, 0
        %v1938 = vsel %vm1908, 1, 0
        %v1939 = vsel %vm1909, 1, 0
        %v1940 = vsel %vm1910, 1, 0
        %v1941 = vsel %vm1911, 1, 0
        %v1942 = vsel %vm1912, 1, 0
        %v1943 = vsel %vm1913, 1, 0
        %v1944 = vsel %vm1914, 1, 0
        %v1945 = vsel %vm1915, 1, 0
        %v1946 = vsel %vm1916, 1, 0
        %v1947 = vsel %vm1917, 1, 0
        %v1948 = vsel %vm1918, 1, 0
        %v1949 = vsel %vm1919, 1, 0
        %v1950 = vsel %vm1920, 1, 0
        %v1951 = vsel %vm1921, 1, 0
        %v1952 = vsel %vm1922, 1, 0
        %v1953 = vsel %vm1923, 1, 0
        %v1954 = vsel %vm1924, 1, 0
        %v1955 = vsel %vm1925, 1, 0
        %v1956 = vsel %vm1926, 1, 0
        %v1957 = vsel %vm1927, 1, 0
        %v1958 = vsel %vm1928, 1, 0
        %v1959 = vsel %vm1929, 1, 0
        %v1960 = vsel %vm1930, 1, 0
        %v1961 = vsel %vm1931, 1, 0
        %vm1962 = vcmp.eq.s32.totalorder %v1932, 1
        %vm1963 = vcmp.eq.s32.totalorder %v1933, 1
        %vm1964 = vcmp.eq.s32.totalorder %v1934, 1
        %vm1965 = vcmp.eq.s32.totalorder %v1935, 1
        %vm1966 = vcmp.eq.s32.totalorder %v1936, 1
        %vm1967 = vcmp.eq.s32.totalorder %v1937, 1
        %vm1968 = vcmp.eq.s32.totalorder %v1938, 1
        %vm1969 = vcmp.eq.s32.totalorder %v1939, 1
        %vm1970 = vcmp.eq.s32.totalorder %v1940, 1
        %vm1971 = vcmp.eq.s32.totalorder %v1941, 1
        %vm1972 = vcmp.eq.s32.totalorder %v1942, 1
        %vm1973 = vcmp.eq.s32.totalorder %v1943, 1
        %vm1974 = vcmp.eq.s32.totalorder %v1944, 1
        %vm1975 = vcmp.eq.s32.totalorder %v1945, 1
        %vm1976 = vcmp.eq.s32.totalorder %v1946, 1
        %vm1977 = vcmp.eq.s32.totalorder %v1947, 1
        %vm1978 = vcmp.eq.s32.totalorder %v1948, 1
        %vm1979 = vcmp.eq.s32.totalorder %v1949, 1
        %vm1980 = vcmp.eq.s32.totalorder %v1950, 1
        %vm1981 = vcmp.eq.s32.totalorder %v1951, 1
        %vm1982 = vcmp.eq.s32.totalorder %v1952, 1
        %vm1983 = vcmp.eq.s32.totalorder %v1953, 1
        %vm1984 = vcmp.eq.s32.totalorder %v1954, 1
        %vm1985 = vcmp.eq.s32.totalorder %v1955, 1
        %vm1986 = vcmp.eq.s32.totalorder %v1956, 1
        %vm1987 = vcmp.eq.s32.totalorder %v1957, 1
        %vm1988 = vcmp.eq.s32.totalorder %v1958, 1
        %vm1989 = vcmp.eq.s32.totalorder %v1959, 1
        %vm1990 = vcmp.eq.s32.totalorder %v1960, 1
        %vm1991 = vcmp.eq.s32.totalorder %v1961, 1
        %v1992 = vcombine.low %v1446, %v1454
        %v1993 = vcombine.low %v1453, %v1455
        %v1995 = vunpack.c.l.s4 1983009808
        %v1996 = vunpack.c.0.s8 %v1995
        %v1997 = vlaneseq
        %v1998 = vshrl.u32 %v1997, 7
        %v1999 = vsub.s32 %v1996, %v1998
        %v2000 = vrot.slane %v1992, %v1999
        %v2002 = vunpack.c.l.s4 1983009808
        %v2003 = vunpack.c.0.s8 %v2002
        %v2004 = vlaneseq
        %v2005 = vshrl.u32 %v2004, 7
        %v2006 = vsub.s32 %v2003, %v2005
        %v2007 = vrot.slane %v1993, %v2006
        %v2008 = vcombine.low %v2000, %v2007
        %v2009 = vcombine.low %v1463, %v1471
        %v2010 = vcombine.low %v1470, %v1472
        %v2012 = vunpack.c.l.s4 1983009808
        %v2013 = vunpack.c.0.s8 %v2012
        %v2014 = vlaneseq
        %v2015 = vshrl.u32 %v2014, 7
        %v2016 = vsub.s32 %v2013, %v2015
        %v2017 = vrot.slane %v2009, %v2016
        %v2019 = vunpack.c.l.s4 1983009808
        %v2020 = vunpack.c.0.s8 %v2019
        %v2021 = vlaneseq
        %v2022 = vshrl.u32 %v2021, 7
        %v2023 = vsub.s32 %v2020, %v2022
        %v2024 = vrot.slane %v2010, %v2023
        %v2025 = vcombine.low %v2017, %v2024
        %v2027 = vunpack.c.l.s4 1983009808
        %v2028 = vunpack.c.0.s8 %v2027
        %v2029 = vlaneseq
        %v2030 = vshrl.u32 %v2029, 7
        %v2031 = vsub.s32 %v2028, %v2030
        %v2032 = vrot.slane %v1480, %v2031
        %v2033 = vcombine.low %v1488, %v1487
        %v2034 = vcombine.low %v1489, %v1497
        %v2036 = vunpack.c.l.s4 1983009808
        %v2037 = vunpack.c.0.s8 %v2036
        %v2038 = vlaneseq
        %v2039 = vshrl.u32 %v2038, 7
        %v2040 = vsub.s32 %v2037, %v2039
        %v2041 = vrot.slane %v2033, %v2040
        %v2043 = vunpack.c.l.s4 1983009808
        %v2044 = vunpack.c.0.s8 %v2043
        %v2045 = vlaneseq
        %v2046 = vshrl.u32 %v2045, 7
        %v2047 = vsub.s32 %v2044, %v2046
        %v2048 = vrot.slane %v2034, %v2047
        %v2049 = vcombine.low %v2041, %v2048
        %v2050 = vcombine.low %v1505, %v1504
        %v2051 = vcombine.low %v1506, %v1514
        %v2053 = vunpack.c.l.s4 1983009808
        %v2054 = vunpack.c.0.s8 %v2053
        %v2055 = vlaneseq
        %v2056 = vshrl.u32 %v2055, 7
        %v2057 = vsub.s32 %v2054, %v2056
        %v2058 = vrot.slane %v2050, %v2057
        %v2060 = vunpack.c.l.s4 1983009808
        %v2061 = vunpack.c.0.s8 %v2060
        %v2062 = vlaneseq
        %v2063 = vshrl.u32 %v2062, 7
        %v2064 = vsub.s32 %v2061, %v2063
        %v2065 = vrot.slane %v2051, %v2064
        %v2066 = vcombine.low %v2058, %v2065
        %v2068 = vunpack.c.l.s4 1983009808
        %v2069 = vunpack.c.0.s8 %v2068
        %v2070 = vlaneseq
        %v2071 = vshrl.u32 %v2070, 7
        %v2072 = vsub.s32 %v2069, %v2071
        %v2073 = vrot.slane %v1522, %v2072
        %v2074 = vcombine.low %v1521, %v1523
        %v2075 = vcombine.low %v1531, %v1539
        %v2077 = vunpack.c.l.s4 1983009808
        %v2078 = vunpack.c.0.s8 %v2077
        %v2079 = vlaneseq
        %v2080 = vshrl.u32 %v2079, 7
        %v2081 = vsub.s32 %v2078, %v2080
        %v2082 = vrot.slane %v2074, %v2081
        %v2084 = vunpack.c.l.s4 1983009808
        %v2085 = vunpack.c.0.s8 %v2084
        %v2086 = vlaneseq
        %v2087 = vshrl.u32 %v2086, 7
        %v2088 = vsub.s32 %v2085, %v2087
        %v2089 = vrot.slane %v2075, %v2088
        %v2090 = vcombine.low %v2082, %v2089
        %v2091 = vcombine.low %v1538, %v1540
        %v2092 = vcombine.low %v1548, %v1556
        %v2094 = vunpack.c.l.s4 1983009808
        %v2095 = vunpack.c.0.s8 %v2094
        %v2096 = vlaneseq
        %v2097 = vshrl.u32 %v2096, 7
        %v2098 = vsub.s32 %v2095, %v2097
        %v2099 = vrot.slane %v2091, %v2098
        %v2101 = vunpack.c.l.s4 1983009808
        %v2102 = vunpack.c.0.s8 %v2101
        %v2103 = vlaneseq
        %v2104 = vshrl.u32 %v2103, 7
        %v2105 = vsub.s32 %v2102, %v2104
        %v2106 = vrot.slane %v2092, %v2105
        %v2107 = vcombine.low %v2099, %v2106
        %v2109 = vunpack.c.l.s4 1983009808
        %v2110 = vunpack.c.0.s8 %v2109
        %v2111 = vlaneseq
        %v2112 = vshrl.u32 %v2111, 7
        %v2113 = vsub.s32 %v2110, %v2112
        %v2114 = vrot.slane %v1555, %v2113
        %v2115 = vcombine.low %v1557, %v1565
        %v2116 = vcombine.low %v1573, %v1572
        %v2118 = vunpack.c.l.s4 1983009808
        %v2119 = vunpack.c.0.s8 %v2118
        %v2120 = vlaneseq
        %v2121 = vshrl.u32 %v2120, 7
        %v2122 = vsub.s32 %v2119, %v2121
        %v2123 = vrot.slane %v2115, %v2122
        %v2125 = vunpack.c.l.s4 1983009808
        %v2126 = vunpack.c.0.s8 %v2125
        %v2127 = vlaneseq
        %v2128 = vshrl.u32 %v2127, 7
        %v2129 = vsub.s32 %v2126, %v2128
        %v2130 = vrot.slane %v2116, %v2129
        %v2131 = vcombine.low %v2123, %v2130
        %v2132 = vcombine.low %v1574, %v1582
        %v2133 = vcombine.low %v1590, %v1589
        %v2135 = vunpack.c.l.s4 1983009808
        %v2136 = vunpack.c.0.s8 %v2135
        %v2137 = vlaneseq
        %v2138 = vshrl.u32 %v2137, 7
        %v2139 = vsub.s32 %v2136, %v2138
        %v2140 = vrot.slane %v2132, %v2139
        %v2142 = vunpack.c.l.s4 1983009808
        %v2143 = vunpack.c.0.s8 %v2142
        %v2144 = vlaneseq
        %v2145 = vshrl.u32 %v2144, 7
        %v2146 = vsub.s32 %v2143, %v2145
        %v2147 = vrot.slane %v2133, %v2146
        %v2148 = vcombine.low %v2140, %v2147
        %v2150 = vunpack.c.l.s4 1983009808
        %v2151 = vunpack.c.0.s8 %v2150
        %v2152 = vlaneseq
        %v2153 = vshrl.u32 %v2152, 7
        %v2154 = vsub.s32 %v2151, %v2153
        %v2155 = vrot.slane %v1591, %v2154
        %v2156 = vcombine.low %v1599, %v1607
        %v2157 = vcombine.low %v1606, %v1608
        %v2159 = vunpack.c.l.s4 1983009808
        %v2160 = vunpack.c.0.s8 %v2159
        %v2161 = vlaneseq
        %v2162 = vshrl.u32 %v2161, 7
        %v2163 = vsub.s32 %v2160, %v2162
        %v2164 = vrot.slane %v2156, %v2163
        %v2166 = vunpack.c.l.s4 1983009808
        %v2167 = vunpack.c.0.s8 %v2166
        %v2168 = vlaneseq
        %v2169 = vshrl.u32 %v2168, 7
        %v2170 = vsub.s32 %v2167, %v2169
        %v2171 = vrot.slane %v2157, %v2170
        %v2172 = vcombine.low %v2164, %v2171
        %v2173 = vcombine.low %v1616, %v1624
        %v2174 = vcombine.low %v1623, %v1625
        %v2176 = vunpack.c.l.s4 1983009808
        %v2177 = vunpack.c.0.s8 %v2176
        %v2178 = vlaneseq
        %v2179 = vshrl.u32 %v2178, 7
        %v2180 = vsub.s32 %v2177, %v2179
        %v2181 = vrot.slane %v2173, %v2180
        %v2183 = vunpack.c.l.s4 1983009808
        %v2184 = vunpack.c.0.s8 %v2183
        %v2185 = vlaneseq
        %v2186 = vshrl.u32 %v2185, 7
        %v2187 = vsub.s32 %v2184, %v2186
        %v2188 = vrot.slane %v2174, %v2187
        %v2189 = vcombine.low %v2181, %v2188
        %v2191 = vunpack.c.l.s4 1983009808
        %v2192 = vunpack.c.0.s8 %v2191
        %v2193 = vlaneseq
        %v2194 = vshrl.u32 %v2193, 7
        %v2195 = vsub.s32 %v2192, %v2194
        %v2196 = vrot.slane %v1633, %v2195
        %v2197 = vcombine.low %v1641, %v1640
        %v2198 = vcombine.low %v1642, %v1650
        %v2200 = vunpack.c.l.s4 1983009808
        %v2201 = vunpack.c.0.s8 %v2200
        %v2202 = vlaneseq
        %v2203 = vshrl.u32 %v2202, 7
        %v2204 = vsub.s32 %v2201, %v2203
        %v2205 = vrot.slane %v2197, %v2204
        %v2207 = vunpack.c.l.s4 1983009808
        %v2208 = vunpack.c.0.s8 %v2207
        %v2209 = vlaneseq
        %v2210 = vshrl.u32 %v2209, 7
        %v2211 = vsub.s32 %v2208, %v2210
        %v2212 = vrot.slane %v2198, %v2211
        %v2213 = vcombine.low %v2205, %v2212
        %v2214 = vcombine.low %v1658, %v1657
        %v2215 = vcombine.low %v1659, %v1667
        %v2217 = vunpack.c.l.s4 1983009808
        %v2218 = vunpack.c.0.s8 %v2217
        %v2219 = vlaneseq
        %v2220 = vshrl.u32 %v2219, 7
        %v2221 = vsub.s32 %v2218, %v2220
        %v2222 = vrot.slane %v2214, %v2221
        %v2224 = vunpack.c.l.s4 1983009808
        %v2225 = vunpack.c.0.s8 %v2224
        %v2226 = vlaneseq
        %v2227 = vshrl.u32 %v2226, 7
        %v2228 = vsub.s32 %v2225, %v2227
        %v2229 = vrot.slane %v2215, %v2228
        %v2230 = vcombine.low %v2222, %v2229
        %v2232 = vunpack.c.l.s4 1983009808
        %v2233 = vunpack.c.0.s8 %v2232
        %v2234 = vlaneseq
        %v2235 = vshrl.u32 %v2234, 7
        %v2236 = vsub.s32 %v2233, %v2235
        %v2237 = vrot.slane %v1675, %v2236
        %v2238 = vcombine.low %v1674, %v1676
        %v2239 = vcombine.low %v1684, %v1692
        %v2241 = vunpack.c.l.s4 1983009808
        %v2242 = vunpack.c.0.s8 %v2241
        %v2243 = vlaneseq
        %v2244 = vshrl.u32 %v2243, 7
        %v2245 = vsub.s32 %v2242, %v2244
        %v2246 = vrot.slane %v2238, %v2245
        %v2248 = vunpack.c.l.s4 1983009808
        %v2249 = vunpack.c.0.s8 %v2248
        %v2250 = vlaneseq
        %v2251 = vshrl.u32 %v2250, 7
        %v2252 = vsub.s32 %v2249, %v2251
        %v2253 = vrot.slane %v2239, %v2252
        %v2254 = vcombine.low %v2246, %v2253
        %v2255 = vcombine.low %v1691, %v1693
        %v2256 = vcombine.low %v1701, %v1709
        %v2258 = vunpack.c.l.s4 1983009808
        %v2259 = vunpack.c.0.s8 %v2258
        %v2260 = vlaneseq
        %v2261 = vshrl.u32 %v2260, 7
        %v2262 = vsub.s32 %v2259, %v2261
        %v2263 = vrot.slane %v2255, %v2262
        %v2265 = vunpack.c.l.s4 1983009808
        %v2266 = vunpack.c.0.s8 %v2265
        %v2267 = vlaneseq
        %v2268 = vshrl.u32 %v2267, 7
        %v2269 = vsub.s32 %v2266, %v2268
        %v2270 = vrot.slane %v2256, %v2269
        %v2271 = vcombine.low %v2263, %v2270
        %v2273 = vunpack.c.l.s4 1983009808
        %v2274 = vunpack.c.0.s8 %v2273
        %v2275 = vlaneseq
        %v2276 = vshrl.u32 %v2275, 7
        %v2277 = vsub.s32 %v2274, %v2276
        %v2278 = vrot.slane %v1708, %v2277
        %v2279 = vcombine.low %v1710, %v1718
        %v2280 = vcombine.low %v1726, %v1725
        %v2282 = vunpack.c.l.s4 1983009808
        %v2283 = vunpack.c.0.s8 %v2282
        %v2284 = vlaneseq
        %v2285 = vshrl.u32 %v2284, 7
        %v2286 = vsub.s32 %v2283, %v2285
        %v2287 = vrot.slane %v2279, %v2286
        %v2289 = vunpack.c.l.s4 1983009808
        %v2290 = vunpack.c.0.s8 %v2289
        %v2291 = vlaneseq
        %v2292 = vshrl.u32 %v2291, 7
        %v2293 = vsub.s32 %v2290, %v2292
        %v2294 = vrot.slane %v2280, %v2293
        %v2295 = vcombine.low %v2287, %v2294
        %v2296 = vcombine.low %v1727, %v1735
        %v2297 = vcombine.low %v1743, %v1742
        %v2299 = vunpack.c.l.s4 1983009808
        %v2300 = vunpack.c.0.s8 %v2299
        %v2301 = vlaneseq
        %v2302 = vshrl.u32 %v2301, 7
        %v2303 = vsub.s32 %v2300, %v2302
        %v2304 = vrot.slane %v2296, %v2303
        %v2306 = vunpack.c.l.s4 1983009808
        %v2307 = vunpack.c.0.s8 %v2306
        %v2308 = vlaneseq
        %v2309 = vshrl.u32 %v2308, 7
        %v2310 = vsub.s32 %v2307, %v2309
        %v2311 = vrot.slane %v2297, %v2310
        %v2312 = vcombine.low %v2304, %v2311
        %v2314 = vunpack.c.l.s4 1983009808
        %v2315 = vunpack.c.0.s8 %v2314
        %v2316 = vlaneseq
        %v2317 = vshrl.u32 %v2316, 7
        %v2318 = vsub.s32 %v2315, %v2317
        %v2319 = vrot.slane %v1744, %v2318
        %v2320 = vcombine.low %v1752, %v1760
        %v2321 = vcombine.low %v1759, %v1761
        %v2323 = vunpack.c.l.s4 1983009808
        %v2324 = vunpack.c.0.s8 %v2323
        %v2325 = vlaneseq
        %v2326 = vshrl.u32 %v2325, 7
        %v2327 = vsub.s32 %v2324, %v2326
        %v2328 = vrot.slane %v2320, %v2327
        %v2330 = vunpack.c.l.s4 1983009808
        %v2331 = vunpack.c.0.s8 %v2330
        %v2332 = vlaneseq
        %v2333 = vshrl.u32 %v2332, 7
        %v2334 = vsub.s32 %v2331, %v2333
        %v2335 = vrot.slane %v2321, %v2334
        %v2336 = vcombine.low %v2328, %v2335
        %v2337 = vcombine.low %v1769, %v1777
        %v2338 = vcombine.low %v1776, %v1778
        %v2340 = vunpack.c.l.s4 1983009808
        %v2341 = vunpack.c.0.s8 %v2340
        %v2342 = vlaneseq
        %v2343 = vshrl.u32 %v2342, 7
        %v2344 = vsub.s32 %v2341, %v2343
        %v2345 = vrot.slane %v2337, %v2344
        %v2347 = vunpack.c.l.s4 1983009808
        %v2348 = vunpack.c.0.s8 %v2347
        %v2349 = vlaneseq
        %v2350 = vshrl.u32 %v2349, 7
        %v2351 = vsub.s32 %v2348, %v2350
        %v2352 = vrot.slane %v2338, %v2351
        %v2353 = vcombine.low %v2345, %v2352
        %v2355 = vunpack.c.l.s4 1983009808
        %v2356 = vunpack.c.0.s8 %v2355
        %v2357 = vlaneseq
        %v2358 = vshrl.u32 %v2357, 7
        %v2359 = vsub.s32 %v2356, %v2358
        %v2360 = vrot.slane %v1786, %v2359
        %v2361 = vcombine.low %v1794, %v1793
        %v2362 = vcombine.low %v1795, %v1803
        %v2364 = vunpack.c.l.s4 1983009808
        %v2365 = vunpack.c.0.s8 %v2364
        %v2366 = vlaneseq
        %v2367 = vshrl.u32 %v2366, 7
        %v2368 = vsub.s32 %v2365, %v2367
        %v2369 = vrot.slane %v2361, %v2368
        %v2371 = vunpack.c.l.s4 1983009808
        %v2372 = vunpack.c.0.s8 %v2371
        %v2373 = vlaneseq
        %v2374 = vshrl.u32 %v2373, 7
        %v2375 = vsub.s32 %v2372, %v2374
        %v2376 = vrot.slane %v2362, %v2375
        %v2377 = vcombine.low %v2369, %v2376
        %v2378 = vcombine.low %v1811, %v1810
        %v2379 = vcombine.low %v1812, %v1819
        %v2381 = vunpack.c.l.s4 1983009808
        %v2382 = vunpack.c.0.s8 %v2381
        %v2383 = vlaneseq
        %v2384 = vshrl.u32 %v2383, 7
        %v2385 = vsub.s32 %v2382, %v2384
        %v2386 = vrot.slane %v2378, %v2385
        %v2388 = vunpack.c.l.s4 1983009808
        %v2389 = vunpack.c.0.s8 %v2388
        %v2390 = vlaneseq
        %v2391 = vshrl.u32 %v2390, 7
        %v2392 = vsub.s32 %v2389, %v2391
        %v2393 = vrot.slane %v2379, %v2392
        %v2394 = vcombine.low %v2386, %v2393
        %v2396 = vunpack.c.l.s4 1983009808
        %v2397 = vunpack.c.0.s8 %v2396
        %v2398 = vlaneseq
        %v2399 = vshrl.u32 %v2398, 7
        %v2400 = vsub.s32 %v2397, %v2399
        %v2401 = vrot.slane %v1820, %v2400
        %v2432 = vsel %vm1962, 0.0, %v2008
        %v2433 = vsel %vm1963, 0.0, %v2025
        %v2434 = vsel %vm1964, 0.0, %v2032
        %v2435 = vsel %vm1965, 0.0, %v2049
        %v2436 = vsel %vm1966, 0.0, %v2066
        %v2437 = vsel %vm1967, 0.0, %v2073
        %v2438 = vsel %vm1968, 0.0, %v2090
        %v2439 = vsel %vm1969, 0.0, %v2107
        %v2440 = vsel %vm1970, 0.0, %v2114
        %v2441 = vsel %vm1971, 0.0, %v2131
        %v2442 = vsel %vm1972, 0.0, %v2148
        %v2443 = vsel %vm1973, 0.0, %v2155
        %v2444 = vsel %vm1974, 0.0, %v2172
        %v2445 = vsel %vm1975, 0.0, %v2189
        %v2446 = vsel %vm1976, 0.0, %v2196
        %v2447 = vsel %vm1977, 0.0, %v2213
        %v2448 = vsel %vm1978, 0.0, %v2230
        %v2449 = vsel %vm1979, 0.0, %v2237
        %v2450 = vsel %vm1980, 0.0, %v2254
        %v2451 = vsel %vm1981, 0.0, %v2271
        %v2452 = vsel %vm1982, 0.0, %v2278
        %v2453 = vsel %vm1983, 0.0, %v2295
        %v2454 = vsel %vm1984, 0.0, %v2312
        %v2455 = vsel %vm1985, 0.0, %v2319
        %v2456 = vsel %vm1986, 0.0, %v2336
        %v2457 = vsel %vm1987, 0.0, %v2353
        %v2458 = vsel %vm1988, 0.0, %v2360
        %v2459 = vsel %vm1989, 0.0, %v2377
        %v2460 = vsel %vm1990, 0.0, %v2394
        %v2461 = vsel %vm1991, 0.0, %v2401
        %v2462 = vpack.c.bf16 %v2433, %v2432
        %v2463 = vpack.c.bf16 %v2434, %v2434
        %v2464 = vpack.c.bf16 %v2436, %v2435
        %v2465 = vpack.c.bf16 %v2437, %v2437
        %v2466 = vpack.c.bf16 %v2439, %v2438
        %v2467 = vpack.c.bf16 %v2440, %v2440
        %v2468 = vpack.c.bf16 %v2442, %v2441
        %v2469 = vpack.c.bf16 %v2443, %v2443
        %v2470 = vpack.c.bf16 %v2445, %v2444
        %v2471 = vpack.c.bf16 %v2446, %v2446
        %v2472 = vpack.c.bf16 %v2448, %v2447
        %v2473 = vpack.c.bf16 %v2449, %v2449
        %v2474 = vpack.c.bf16 %v2451, %v2450
        %v2475 = vpack.c.bf16 %v2452, %v2452
        %v2476 = vpack.c.bf16 %v2454, %v2453
        %v2477 = vpack.c.bf16 %v2455, %v2455
        %v2478 = vpack.c.bf16 %v2457, %v2456
        %v2479 = vpack.c.bf16 %v2458, %v2458
        %v2480 = vpack.c.bf16 %v2460, %v2459
        %v2481 = vpack.c.bf16 %v2461, %v2461
        %v2482 = vld [vmem:[%s3] sm:$0xf]
        %v2483 = vld [vmem:[%s3 + $0x4] sm:$0xf]
        %v2484 = vld [vmem:[%s3 + $0x8] sm:$0xf]
        %v2485 = vld [vmem:[%s3 + $0xc] sm:$0xf]
        %v2486 = vld [vmem:[%s3 + $0x10] sm:$0xf]
        %v2487 = vld [vmem:[%s3 + $0x14] sm:$0xf]
        %v2488 = vld [vmem:[%s3 + $0x18] sm:$0xf]
        %v2489 = vld [vmem:[%s3 + $0x1c] sm:$0xf]
        %v2490 = vld [vmem:[%s3 + $0x20] sm:$0xf]
        %v2491 = vld [vmem:[%s3 + $0x24] sm:$0xf]
        %v2492 = vld [vmem:[%s3 + $0x28] sm:$0xf]
        %v2493 = vld [vmem:[%s3 + $0x2c] sm:$0xf]
        %v2494 = vld [vmem:[%s3 + $0x30] sm:$0xf]
        %v2495 = vld [vmem:[%s3 + $0x34] sm:$0xf]
        %v2496 = vld [vmem:[%s3 + $0x38] sm:$0xf]
        %v2497 = vld [vmem:[%s3 + $0x3c] sm:$0xf]
        %vm2498 = vsmask.f32 7424
        %v2500 = vshrl.u32 %v2462, 16
        %v2502 = vshll.u32 %v2462, 16
        %v2504 = vrot.slane %v2502, 1
        %v2505 = vor.u32 %v2500, %v2504
        %v2507 = vshll.u32 %v2463, 16
        %v2509 = vrot.slane %v2507, 1
        %v2510 = vsel %vm2498, %v2505, %v2509
        %v2512 = vshrl.u32 %v2464, 16
        %v2514 = vshll.u32 %v2464, 16
        %v2516 = vrot.slane %v2514, 1
        %v2517 = vor.u32 %v2512, %v2516
        %v2519 = vshll.u32 %v2465, 16
        %v2521 = vrot.slane %v2519, 1
        %v2522 = vsel %vm2498, %v2517, %v2521
        %v2524 = vshrl.u32 %v2466, 16
        %v2526 = vshll.u32 %v2466, 16
        %v2528 = vrot.slane %v2526, 1
        %v2529 = vor.u32 %v2524, %v2528
        %v2531 = vshll.u32 %v2467, 16
        %v2533 = vrot.slane %v2531, 1
        %v2534 = vsel %vm2498, %v2529, %v2533
        %v2536 = vshrl.u32 %v2468, 16
        %v2538 = vshll.u32 %v2468, 16
        %v2540 = vrot.slane %v2538, 1
        %v2541 = vor.u32 %v2536, %v2540
        %v2543 = vshll.u32 %v2469, 16
        %v2545 = vrot.slane %v2543, 1
        %v2546 = vsel %vm2498, %v2541, %v2545
        %v2548 = vshrl.u32 %v2470, 16
        %v2550 = vshll.u32 %v2470, 16
        %v2552 = vrot.slane %v2550, 1
        %v2553 = vor.u32 %v2548, %v2552
        %v2555 = vshll.u32 %v2471, 16
        %v2557 = vrot.slane %v2555, 1
        %v2558 = vsel %vm2498, %v2553, %v2557
        %v2560 = vshrl.u32 %v2472, 16
        %v2562 = vshll.u32 %v2472, 16
        %v2564 = vrot.slane %v2562, 1
        %v2565 = vor.u32 %v2560, %v2564
        %v2567 = vshll.u32 %v2473, 16
        %v2569 = vrot.slane %v2567, 1
        %v2570 = vsel %vm2498, %v2565, %v2569
        %v2572 = vshrl.u32 %v2474, 16
        %v2574 = vshll.u32 %v2474, 16
        %v2576 = vrot.slane %v2574, 1
        %v2577 = vor.u32 %v2572, %v2576
        %v2579 = vshll.u32 %v2475, 16
        %v2581 = vrot.slane %v2579, 1
        %v2582 = vsel %vm2498, %v2577, %v2581
        %v2584 = vshrl.u32 %v2476, 16
        %v2586 = vshll.u32 %v2476, 16
        %v2588 = vrot.slane %v2586, 1
        %v2589 = vor.u32 %v2584, %v2588
        %v2591 = vshll.u32 %v2477, 16
        %v2593 = vrot.slane %v2591, 1
        %v2594 = vsel %vm2498, %v2589, %v2593
        %s2603 = scalar_lea.vmem %s3, 64
        %v2604 = vld [vmem:[%s2603] sm:$0xf]
        %v2605 = vld [vmem:[%s2603 + $0x4] sm:$0xf]
        %v2606 = vld [vmem:[%s2603 + $0x8] sm:$0xf]
        %v2607 = vld [vmem:[%s2603 + $0xc] sm:$0xf]
        %v2608 = vld [vmem:[%s2603 + $0x10] sm:$0xf]
        %v2609 = vld [vmem:[%s2603 + $0x14] sm:$0xf]
        %v2610 = vld [vmem:[%s2603 + $0x18] sm:$0xf]
        %v2611 = vld [vmem:[%s2603 + $0x1c] sm:$0xf]
        %v2612 = vld [vmem:[%s2603 + $0x20] sm:$0xf]
        %v2613 = vld [vmem:[%s2603 + $0x24] sm:$0xf]
        %v2614 = vld [vmem:[%s2603 + $0x28] sm:$0xf]
        %v2615 = vld [vmem:[%s2603 + $0x2c] sm:$0xf]
        %v2616 = vld [vmem:[%s2603 + $0x30] sm:$0xf]
        %v2617 = vld [vmem:[%s2603 + $0x34] sm:$0xf]
        %v2618 = vld [vmem:[%s2603 + $0x38] sm:$0xf]
        %v2619 = vld [vmem:[%s2603 + $0x3c] sm:$0xf]
        %v2636 = vunpack.c.l.b16 %v2604
        %v2637 = vunpack.c.l.b16 %v2605
        %v2638 = vunpack.c.l.b16 %v2606
        %v2639 = vunpack.c.l.b16 %v2607
        %v2640 = vunpack.c.l.b16 %v2608
        %v2641 = vunpack.c.l.b16 %v2609
        %v2642 = vunpack.c.l.b16 %v2610
        %v2643 = vunpack.c.l.b16 %v2611
        %v2644 = vunpack.c.l.b16 %v2612
        %v2645 = vunpack.c.l.b16 %v2613
        %v2646 = vunpack.c.l.b16 %v2614
        %v2647 = vunpack.c.l.b16 %v2615
        %v2648 = vunpack.c.l.b16 %v2616
        %v2649 = vunpack.c.l.b16 %v2617
        %v2650 = vunpack.c.l.b16 %v2618
        %v2651 = vunpack.c.l.b16 %v2619
        %v2652 = vpack.c.b16 %v2637, %v2636
        %v2653 = vpack.c.b16 %v2639, %v2638
        %v2654 = vpack.c.b16 %v2641, %v2640
        %v2655 = vpack.c.b16 %v2643, %v2642
        %v2656 = vpack.c.b16 %v2645, %v2644
        %v2657 = vpack.c.b16 %v2647, %v2646
        %v2658 = vpack.c.b16 %v2649, %v2648
        %v2659 = vpack.c.b16 %v2651, %v2650
        %2668 = vmatprep.subr.bf16.mxu0 0
        %2669 = vmatpush1.bf16.msra.mxu0 %v2652
        %2670 = vmatprep.subr.bf16.mxu0 0
        %2671 = vmatpush1.bf16.msra.mxu0 %v2653
        %2672 = vmatprep.subr.bf16.mxu0 0
        %2673 = vmatpush1.bf16.msra.mxu0 %v2654
        %2674 = vmatprep.subr.bf16.mxu0 0
        %2675 = vmatpush1.bf16.msra.mxu0 %v2655
        %2676 = vmatprep.subr.bf16.mxu0 0
        %2677 = vmatpush1.bf16.msra.mxu0 %v2656
        %2678 = vmatprep.subr.bf16.mxu0 0
        %2679 = vmatpush1.bf16.msra.mxu0 %v2657
        %2680 = vmatprep.subr.bf16.mxu0 0
        %2681 = vmatpush1.bf16.msra.mxu0 %v2658
        %2682 = vmatprep.subr.bf16.mxu0 0
        %2683 = vmatpush1.bf16.msra.mxu0 %v2659
        %2684 = vmatprep.subr.bf16.mxu0 0
        %2685 = vmatpush1.bf16.msra.mxu0 0
        %2686 = vmatprep.subr.bf16.mxu0 0
        %2687 = vmatpush1.bf16.msra.mxu0 0
        %2688 = vmatprep.subr.bf16.mxu0 0
        %2689 = vmatpush1.bf16.msra.mxu0 0
        %2690 = vmatprep.subr.bf16.mxu0 0
        %2691 = vmatpush1.bf16.msra.mxu0 0
        %2692 = vmatprep.subr.bf16.mxu0 0
        %2693 = vmatpush1.bf16.msra.mxu0 0
        %2694 = vmatprep.subr.bf16.mxu0 0
        %2695 = vmatpush1.bf16.msra.mxu0 0
        %2696 = vmatprep.subr.bf16.mxu0 0
        %2697 = vmatpush1.bf16.msra.mxu0 0
        %2698 = vmatprep.subr.bf16.mxu0 0
        %2699 = vmatpush1.bf16.msra.mxu0 0
        %2700 = vmatprep.mubr.bf16.mxu0 0
        %2701 = vmatmul.mubr.bf16.gmra.mrb[0].mxu0 %v2510
        %v2702 = vpop.f32.mrb[0].mxu0
        %v2703 = vadd.f32 0.0, %v2702
        %v2704 = vpop.f32.mrb[0].mxu0
        %v2705 = vpop.f32.mrb[0].mxu0
        %v2706 = vadd.f32 0.0, %v2705
        %v2707 = vpop.f32.mrb[0].mxu0
        %2708 = vmatprep.mubr.bf16.mxu0 0
        %2709 = vmatmul.mubr.bf16.gmra.mrb[0].mxu0 %v2522
        %v2710 = vpop.f32.mrb[0].mxu0
        %v2711 = vadd.f32 0.0, %v2710
        %v2712 = vpop.f32.mrb[0].mxu0
        %v2713 = vpop.f32.mrb[0].mxu0
        %v2714 = vadd.f32 0.0, %v2713
        %v2715 = vpop.f32.mrb[0].mxu0
        %2716 = vmatprep.mubr.bf16.mxu0 0
        %2717 = vmatmul.mubr.bf16.gmra.mrb[0].mxu0 %v2534
        %v2718 = vpop.f32.mrb[0].mxu0
        %v2719 = vadd.f32 0.0, %v2718
        %v2720 = vpop.f32.mrb[0].mxu0
        %v2721 = vpop.f32.mrb[0].mxu0
        %v2722 = vadd.f32 0.0, %v2721
        %v2723 = vpop.f32.mrb[0].mxu0
        %2724 = vmatprep.mubr.bf16.mxu0 0
        %2725 = vmatmul.mubr.bf16.gmra.mrb[0].mxu0 %v2546
        %v2726 = vpop.f32.mrb[0].mxu0
        %v2727 = vadd.f32 0.0, %v2726
        %v2728 = vpop.f32.mrb[0].mxu0
        %v2729 = vpop.f32.mrb[0].mxu0
        %v2730 = vadd.f32 0.0, %v2729
        %v2731 = vpop.f32.mrb[0].mxu0
        %2732 = vmatprep.mubr.bf16.mxu0 0
        %2733 = vmatmul.mubr.bf16.gmra.mrb[0].mxu0 %v2558
        %v2734 = vpop.f32.mrb[0].mxu0
        %v2735 = vadd.f32 0.0, %v2734
        %v2736 = vpop.f32.mrb[0].mxu0
        %v2737 = vpop.f32.mrb[0].mxu0
        %v2738 = vadd.f32 0.0, %v2737
        %v2739 = vpop.f32.mrb[0].mxu0
        %2740 = vmatprep.mubr.bf16.mxu0 0
        %2741 = vmatmul.mubr.bf16.gmra.mrb[0].mxu0 %v2570
        %v2742 = vpop.f32.mrb[0].mxu0
        %v2743 = vadd.f32 0.0, %v2742
        %v2744 = vpop.f32.mrb[0].mxu0
        %v2745 = vpop.f32.mrb[0].mxu0
        %v2746 = vadd.f32 0.0, %v2745
        %v2747 = vpop.f32.mrb[0].mxu0
        %2748 = vmatprep.mubr.bf16.mxu0 0
        %2749 = vmatmul.mubr.bf16.gmra.mrb[0].mxu0 %v2582
        %v2750 = vpop.f32.mrb[0].mxu0
        %v2751 = vadd.f32 0.0, %v2750
        %v2752 = vpop.f32.mrb[0].mxu0
        %v2753 = vpop.f32.mrb[0].mxu0
        %v2754 = vadd.f32 0.0, %v2753
        %v2755 = vpop.f32.mrb[0].mxu0
        %2756 = vmatprep.mubr.bf16.mxu0 0
        %2757 = vmatmul.mubr.bf16.gmra.mrb[0].mxu0 %v2594
        %v2758 = vpop.f32.mrb[0].mxu0
        %v2759 = vadd.f32 0.0, %v2758
        %v2760 = vpop.f32.mrb[0].mxu0
        %v2761 = vpop.f32.mrb[0].mxu0
        %v2762 = vadd.f32 0.0, %v2761
        %v2763 = vpop.f32.mrb[0].mxu0
        %2764 = vdwg.mxu0
        %v2781 = vunpack.c.l.b16 %v2482
        %v2782 = vunpack.c.l.b16 %v2483
        %v2783 = vunpack.c.l.b16 %v2484
        %v2784 = vunpack.c.l.b16 %v2485
        %v2785 = vunpack.c.l.b16 %v2486
        %v2786 = vunpack.c.l.b16 %v2487
        %v2787 = vunpack.c.l.b16 %v2488
        %v2788 = vunpack.c.l.b16 %v2489
        %v2789 = vunpack.c.l.b16 %v2490
        %v2790 = vunpack.c.l.b16 %v2491
        %v2791 = vunpack.c.l.b16 %v2492
        %v2792 = vunpack.c.l.b16 %v2493
        %v2793 = vunpack.c.l.b16 %v2494
        %v2794 = vunpack.c.l.b16 %v2495
        %v2795 = vunpack.c.l.b16 %v2496
        %v2796 = vunpack.c.l.b16 %v2497
        %v2797 = vpack.c.b16 %v2782, %v2781
        %v2798 = vpack.c.b16 %v2784, %v2783
        %v2799 = vpack.c.b16 %v2786, %v2785
        %v2800 = vpack.c.b16 %v2788, %v2787
        %v2801 = vpack.c.b16 %v2790, %v2789
        %v2802 = vpack.c.b16 %v2792, %v2791
        %v2803 = vpack.c.b16 %v2794, %v2793
        %v2804 = vpack.c.b16 %v2796, %v2795
        %2813 = vmatprep.subr.bf16.mxu0 0
        %2814 = vmatpush1.bf16.msra.mxu0 %v2797
        %2815 = vmatprep.subr.bf16.mxu0 0
        %2816 = vmatpush1.bf16.msra.mxu0 %v2798
        %2817 = vmatprep.subr.bf16.mxu0 0
        %2818 = vmatpush1.bf16.msra.mxu0 %v2799
        %2819 = vmatprep.subr.bf16.mxu0 0
        %2820 = vmatpush1.bf16.msra.mxu0 %v2800
        %2821 = vmatprep.subr.bf16.mxu0 0
        %2822 = vmatpush1.bf16.msra.mxu0 %v2801
        %2823 = vmatprep.subr.bf16.mxu0 0
        %2824 = vmatpush1.bf16.msra.mxu0 %v2802
        %2825 = vmatprep.subr.bf16.mxu0 0
        %2826 = vmatpush1.bf16.msra.mxu0 %v2803
        %2827 = vmatprep.subr.bf16.mxu0 0
        %2828 = vmatpush1.bf16.msra.mxu0 %v2804
        %2829 = vmatprep.subr.bf16.mxu0 0
        %2830 = vmatpush1.bf16.msra.mxu0 0
        %2831 = vmatprep.subr.bf16.mxu0 0
        %2832 = vmatpush1.bf16.msra.mxu0 0
        %2833 = vmatprep.subr.bf16.mxu0 0
        %2834 = vmatpush1.bf16.msra.mxu0 0
        %2835 = vmatprep.subr.bf16.mxu0 0
        %2836 = vmatpush1.bf16.msra.mxu0 0
        %2837 = vmatprep.subr.bf16.mxu0 0
        %2838 = vmatpush1.bf16.msra.mxu0 0
        %2839 = vmatprep.subr.bf16.mxu0 0
        %2840 = vmatpush1.bf16.msra.mxu0 0
        %2841 = vmatprep.subr.bf16.mxu0 0
        %2842 = vmatpush1.bf16.msra.mxu0 0
        %2843 = vmatprep.subr.bf16.mxu0 0
        %2844 = vmatpush1.bf16.msra.mxu0 0
        %2845 = vmatprep.mubr.bf16.mxu0 0
        %2846 = vmatmul.mubr.bf16.gmra.mrb[0].mxu0 %v2462
        %v2847 = vpop.f32.mrb[0].mxu0
        %v2848 = vadd.f32 %v2703, %v2847
        %v2849 = vpop.f32.mrb[0].mxu0
        %v2850 = vpop.f32.mrb[0].mxu0
        %v2851 = vadd.f32 %v2706, %v2850
        %v2852 = vpop.f32.mrb[0].mxu0
        %2853 = vmatprep.mubr.bf16.mxu0 0
        %2854 = vmatmul.mubr.bf16.gmra.mrb[0].mxu0 %v2464
        %v2855 = vpop.f32.mrb[0].mxu0
        %v2856 = vadd.f32 %v2711, %v2855
        %v2857 = vpop.f32.mrb[0].mxu0
        %v2858 = vpop.f32.mrb[0].mxu0
        %v2859 = vadd.f32 %v2714, %v2858
        %v2860 = vpop.f32.mrb[0].mxu0
        %2861 = vmatprep.mubr.bf16.mxu0 0
        %2862 = vmatmul.mubr.bf16.gmra.mrb[0].mxu0 %v2466
        %v2863 = vpop.f32.mrb[0].mxu0
        %v2864 = vadd.f32 %v2719, %v2863
        %v2865 = vpop.f32.mrb[0].mxu0
        %v2866 = vpop.f32.mrb[0].mxu0
        %v2867 = vadd.f32 %v2722, %v2866
        %v2868 = vpop.f32.mrb[0].mxu0
        %2869 = vmatprep.mubr.bf16.mxu0 0
        %2870 = vmatmul.mubr.bf16.gmra.mrb[0].mxu0 %v2468
        %v2871 = vpop.f32.mrb[0].mxu0
        %v2872 = vadd.f32 %v2727, %v2871
        %v2873 = vpop.f32.mrb[0].mxu0
        %v2874 = vpop.f32.mrb[0].mxu0
        %v2875 = vadd.f32 %v2730, %v2874
        %v2876 = vpop.f32.mrb[0].mxu0
        %2877 = vmatprep.mubr.bf16.mxu0 0
        %2878 = vmatmul.mubr.bf16.gmra.mrb[0].mxu0 %v2470
        %v2879 = vpop.f32.mrb[0].mxu0
        %v2880 = vadd.f32 %v2735, %v2879
        %v2881 = vpop.f32.mrb[0].mxu0
        %v2882 = vpop.f32.mrb[0].mxu0
        %v2883 = vadd.f32 %v2738, %v2882
        %v2884 = vpop.f32.mrb[0].mxu0
        %2885 = vmatprep.mubr.bf16.mxu0 0
        %2886 = vmatmul.mubr.bf16.gmra.mrb[0].mxu0 %v2472
        %v2887 = vpop.f32.mrb[0].mxu0
        %v2888 = vadd.f32 %v2743, %v2887
        %v2889 = vpop.f32.mrb[0].mxu0
        %v2890 = vpop.f32.mrb[0].mxu0
        %v2891 = vadd.f32 %v2746, %v2890
        %v2892 = vpop.f32.mrb[0].mxu0
        %2893 = vmatprep.mubr.bf16.mxu0 0
        %2894 = vmatmul.mubr.bf16.gmra.mrb[0].mxu0 %v2474
        %v2895 = vpop.f32.mrb[0].mxu0
        %v2896 = vadd.f32 %v2751, %v2895
        %v2897 = vpop.f32.mrb[0].mxu0
        %v2898 = vpop.f32.mrb[0].mxu0
        %v2899 = vadd.f32 %v2754, %v2898
        %v2900 = vpop.f32.mrb[0].mxu0
        %2901 = vmatprep.mubr.bf16.mxu0 0
        %2902 = vmatmul.mubr.bf16.gmra.mrb[0].mxu0 %v2476
        %v2903 = vpop.f32.mrb[0].mxu0
        %v2904 = vadd.f32 %v2759, %v2903
        %v2905 = vpop.f32.mrb[0].mxu0
        %v2906 = vpop.f32.mrb[0].mxu0
        %v2907 = vadd.f32 %v2762, %v2906
        %v2908 = vpop.f32.mrb[0].mxu0
        %2909 = vdwg.mxu0
        %vm2926 = vcmask 1046528
        %v2927 = vrot.slane %v2462, 1
        %v2928 = vrot.slane %v2463, 1
        %v2929 = vsel %vm2926, %v2927, %v2928
        %v2930 = vrot.slane %v2464, 1
        %v2931 = vrot.slane %v2465, 1
        %v2932 = vsel %vm2926, %v2930, %v2931
        %v2933 = vrot.slane %v2466, 1
        %v2934 = vrot.slane %v2467, 1
        %v2935 = vsel %vm2926, %v2933, %v2934
        %v2936 = vrot.slane %v2468, 1
        %v2937 = vrot.slane %v2469, 1
        %v2938 = vsel %vm2926, %v2936, %v2937
        %v2939 = vrot.slane %v2470, 1
        %v2940 = vrot.slane %v2471, 1
        %v2941 = vsel %vm2926, %v2939, %v2940
        %v2942 = vrot.slane %v2472, 1
        %v2943 = vrot.slane %v2473, 1
        %v2944 = vsel %vm2926, %v2942, %v2943
        %v2945 = vrot.slane %v2474, 1
        %v2946 = vrot.slane %v2475, 1
        %v2947 = vsel %vm2926, %v2945, %v2946
        %v2948 = vrot.slane %v2476, 1
        %v2949 = vrot.slane %v2477, 1
        %v2950 = vsel %vm2926, %v2948, %v2949
        %s2959 = scalar_lea.vmem %s3, 128
        %v2960 = vld [vmem:[%s2959] sm:$0xf]
        %v2961 = vld [vmem:[%s2959 + $0x4] sm:$0xf]
        %v2962 = vld [vmem:[%s2959 + $0x8] sm:$0xf]
        %v2963 = vld [vmem:[%s2959 + $0xc] sm:$0xf]
        %v2964 = vld [vmem:[%s2959 + $0x10] sm:$0xf]
        %v2965 = vld [vmem:[%s2959 + $0x14] sm:$0xf]
        %v2966 = vld [vmem:[%s2959 + $0x18] sm:$0xf]
        %v2967 = vld [vmem:[%s2959 + $0x1c] sm:$0xf]
        %v2968 = vld [vmem:[%s2959 + $0x20] sm:$0xf]
        %v2969 = vld [vmem:[%s2959 + $0x24] sm:$0xf]
        %v2970 = vld [vmem:[%s2959 + $0x28] sm:$0xf]
        %v2971 = vld [vmem:[%s2959 + $0x2c] sm:$0xf]
        %v2972 = vld [vmem:[%s2959 + $0x30] sm:$0xf]
        %v2973 = vld [vmem:[%s2959 + $0x34] sm:$0xf]
        %v2974 = vld [vmem:[%s2959 + $0x38] sm:$0xf]
        %v2975 = vld [vmem:[%s2959 + $0x3c] sm:$0xf]
        %v2992 = vunpack.c.l.b16 %v2960
        %v2993 = vunpack.c.l.b16 %v2961
        %v2994 = vunpack.c.l.b16 %v2962
        %v2995 = vunpack.c.l.b16 %v2963
        %v2996 = vunpack.c.l.b16 %v2964
        %v2997 = vunpack.c.l.b16 %v2965
        %v2998 = vunpack.c.l.b16 %v2966
        %v2999 = vunpack.c.l.b16 %v2967
        %v3000 = vunpack.c.l.b16 %v2968
        %v3001 = vunpack.c.l.b16 %v2969
        %v3002 = vunpack.c.l.b16 %v2970
        %v3003 = vunpack.c.l.b16 %v2971
        %v3004 = vunpack.c.l.b16 %v2972
        %v3005 = vunpack.c.l.b16 %v2973
        %v3006 = vunpack.c.l.b16 %v2974
        %v3007 = vunpack.c.l.b16 %v2975
        %v3008 = vpack.c.b16 %v2993, %v2992
        %v3009 = vpack.c.b16 %v2995, %v2994
        %v3010 = vpack.c.b16 %v2997, %v2996
        %v3011 = vpack.c.b16 %v2999, %v2998
        %v3012 = vpack.c.b16 %v3001, %v3000
        %v3013 = vpack.c.b16 %v3003, %v3002
        %v3014 = vpack.c.b16 %v3005, %v3004
        %v3015 = vpack.c.b16 %v3007, %v3006
        %3024 = vmatprep.subr.bf16.mxu0 0
        %3025 = vmatpush1.bf16.msra.mxu0 %v3008
        %3026 = vmatprep.subr.bf16.mxu0 0
        %3027 = vmatpush1.bf16.msra.mxu0 %v3009
        %3028 = vmatprep.subr.bf16.mxu0 0
        %3029 = vmatpush1.bf16.msra.mxu0 %v3010
        %3030 = vmatprep.subr.bf16.mxu0 0
        %3031 = vmatpush1.bf16.msra.mxu0 %v3011
        %3032 = vmatprep.subr.bf16.mxu0 0
        %3033 = vmatpush1.bf16.msra.mxu0 %v3012
        %3034 = vmatprep.subr.bf16.mxu0 0
        %3035 = vmatpush1.bf16.msra.mxu0 %v3013
        %3036 = vmatprep.subr.bf16.mxu0 0
        %3037 = vmatpush1.bf16.msra.mxu0 %v3014
        %3038 = vmatprep.subr.bf16.mxu0 0
        %3039 = vmatpush1.bf16.msra.mxu0 %v3015
        %3040 = vmatprep.subr.bf16.mxu0 0
        %3041 = vmatpush1.bf16.msra.mxu0 0
        %3042 = vmatprep.subr.bf16.mxu0 0
        %3043 = vmatpush1.bf16.msra.mxu0 0
        %3044 = vmatprep.subr.bf16.mxu0 0
        %3045 = vmatpush1.bf16.msra.mxu0 0
        %3046 = vmatprep.subr.bf16.mxu0 0
        %3047 = vmatpush1.bf16.msra.mxu0 0
        %3048 = vmatprep.subr.bf16.mxu0 0
        %3049 = vmatpush1.bf16.msra.mxu0 0
        %3050 = vmatprep.subr.bf16.mxu0 0
        %3051 = vmatpush1.bf16.msra.mxu0 0
        %3052 = vmatprep.subr.bf16.mxu0 0
        %3053 = vmatpush1.bf16.msra.mxu0 0
        %3054 = vmatprep.subr.bf16.mxu0 0
        %3055 = vmatpush1.bf16.msra.mxu0 0
        %3056 = vmatprep.mubr.bf16.mxu0 0
        %3057 = vmatmul.mubr.bf16.gmra.mrb[0].mxu0 %v2929
        %v3058 = vpop.f32.mrb[0].mxu0
        %v3059 = vadd.f32 0.0, %v3058
        %v3060 = vpop.f32.mrb[0].mxu0
        %v3061 = vpop.f32.mrb[0].mxu0
        %v3062 = vadd.f32 0.0, %v3061
        %v3063 = vpop.f32.mrb[0].mxu0
        %3064 = vmatprep.mubr.bf16.mxu0 0
        %3065 = vmatmul.mubr.bf16.gmra.mrb[0].mxu0 %v2932
        %v3066 = vpop.f32.mrb[0].mxu0
        %v3067 = vadd.f32 0.0, %v3066
        %v3068 = vpop.f32.mrb[0].mxu0
        %v3069 = vpop.f32.mrb[0].mxu0
        %v3070 = vadd.f32 0.0, %v3069
        %v3071 = vpop.f32.mrb[0].mxu0
        %3072 = vmatprep.mubr.bf16.mxu0 0
        %3073 = vmatmul.mubr.bf16.gmra.mrb[0].mxu0 %v2935
        %v3074 = vpop.f32.mrb[0].mxu0
        %v3075 = vadd.f32 0.0, %v3074
        %v3076 = vpop.f32.mrb[0].mxu0
        %v3077 = vpop.f32.mrb[0].mxu0
        %v3078 = vadd.f32 0.0, %v3077
        %v3079 = vpop.f32.mrb[0].mxu0
        %3080 = vmatprep.mubr.bf16.mxu0 0
        %3081 = vmatmul.mubr.bf16.gmra.mrb[0].mxu0 %v2938
        %v3082 = vpop.f32.mrb[0].mxu0
        %v3083 = vadd.f32 0.0, %v3082
        %v3084 = vpop.f32.mrb[0].mxu0
        %v3085 = vpop.f32.mrb[0].mxu0
        %v3086 = vadd.f32 0.0, %v3085
        %v3087 = vpop.f32.mrb[0].mxu0
        %3088 = vmatprep.mubr.bf16.mxu0 0
        %3089 = vmatmul.mubr.bf16.gmra.mrb[0].mxu0 %v2941
        %v3090 = vpop.f32.mrb[0].mxu0
        %v3091 = vadd.f32 0.0, %v3090
        %v3092 = vpop.f32.mrb[0].mxu0
        %v3093 = vpop.f32.mrb[0].mxu0
        %v3094 = vadd.f32 0.0, %v3093
        %v3095 = vpop.f32.mrb[0].mxu0
        %3096 = vmatprep.mubr.bf16.mxu0 0
        %3097 = vmatmul.mubr.bf16.gmra.mrb[0].mxu0 %v2944
        %v3098 = vpop.f32.mrb[0].mxu0
        %v3099 = vadd.f32 0.0, %v3098
        %v3100 = vpop.f32.mrb[0].mxu0
        %v3101 = vpop.f32.mrb[0].mxu0
        %v3102 = vadd.f32 0.0, %v3101
        %v3103 = vpop.f32.mrb[0].mxu0
        %3104 = vmatprep.mubr.bf16.mxu0 0
        %3105 = vmatmul.mubr.bf16.gmra.mrb[0].mxu0 %v2947
        %v3106 = vpop.f32.mrb[0].mxu0
        %v3107 = vadd.f32 0.0, %v3106
        %v3108 = vpop.f32.mrb[0].mxu0
        %v3109 = vpop.f32.mrb[0].mxu0
        %v3110 = vadd.f32 0.0, %v3109
        %v3111 = vpop.f32.mrb[0].mxu0
        %3112 = vmatprep.mubr.bf16.mxu0 0
        %3113 = vmatmul.mubr.bf16.gmra.mrb[0].mxu0 %v2950
        %v3114 = vpop.f32.mrb[0].mxu0
        %v3115 = vadd.f32 0.0, %v3114
        %v3116 = vpop.f32.mrb[0].mxu0
        %v3117 = vpop.f32.mrb[0].mxu0
        %v3118 = vadd.f32 0.0, %v3117
        %v3119 = vpop.f32.mrb[0].mxu0
        %3120 = vdwg.mxu0
        %v3121 = vadd.f32 %v2848, %v3059
        %v3122 = vadd.f32 %v2851, %v3062
        %v3123 = vadd.f32 %v2856, %v3067
        %v3124 = vadd.f32 %v2859, %v3070
        %v3125 = vadd.f32 %v2864, %v3075
        %v3126 = vadd.f32 %v2867, %v3078
        %v3127 = vadd.f32 %v2872, %v3083
        %v3128 = vadd.f32 %v2875, %v3086
        %v3129 = vadd.f32 %v2880, %v3091
        %v3130 = vadd.f32 %v2883, %v3094
        %v3131 = vadd.f32 %v2888, %v3099
        %v3132 = vadd.f32 %v2891, %v3102
        %v3133 = vadd.f32 %v2896, %v3107
        %v3134 = vadd.f32 %v2899, %v3110
        %v3135 = vadd.f32 %v2904, %v3115
        %v3136 = vadd.f32 %v2907, %v3118
        %s3137 = scalar_lea.vmem %s3, 192
        %v3138 = vld [vmem:[%s3137] sm:$0xf]
        %v3139 = vld [vmem:[%s3137 + $0x4] sm:$0xf]
        %v3140 = vld [vmem:[%s3137 + $0x8] sm:$0xf]
        %v3141 = vld [vmem:[%s3137 + $0xc] sm:$0xf]
        %v3142 = vld [vmem:[%s3137 + $0x10] sm:$0xf]
        %v3143 = vld [vmem:[%s3137 + $0x14] sm:$0xf]
        %v3144 = vld [vmem:[%s3137 + $0x18] sm:$0xf]
        %v3145 = vld [vmem:[%s3137 + $0x1c] sm:$0xf]
        %v3146 = vld [vmem:[%s3137 + $0x20] sm:$0xf]
        %v3147 = vld [vmem:[%s3137 + $0x24] sm:$0xf]
        %v3148 = vld [vmem:[%s3137 + $0x28] sm:$0xf]
        %v3149 = vld [vmem:[%s3137 + $0x2c] sm:$0xf]
        %v3150 = vld [vmem:[%s3137 + $0x30] sm:$0xf]
        %v3151 = vld [vmem:[%s3137 + $0x34] sm:$0xf]
        %v3152 = vld [vmem:[%s3137 + $0x38] sm:$0xf]
        %v3153 = vld [vmem:[%s3137 + $0x3c] sm:$0xf]
        %v3170 = vunpack.c.l.b16 %v3138
        %v3171 = vunpack.c.l.b16 %v3139
        %v3172 = vunpack.c.l.b16 %v3140
        %v3173 = vunpack.c.l.b16 %v3141
        %v3174 = vunpack.c.l.b16 %v3142
        %v3175 = vunpack.c.l.b16 %v3143
        %v3176 = vunpack.c.l.b16 %v3144
        %v3177 = vunpack.c.l.b16 %v3145
        %v3178 = vunpack.c.l.b16 %v3146
        %v3179 = vunpack.c.l.b16 %v3147
        %v3180 = vunpack.c.l.b16 %v3148
        %v3181 = vunpack.c.l.b16 %v3149
        %v3182 = vunpack.c.l.b16 %v3150
        %v3183 = vunpack.c.l.b16 %v3151
        %v3184 = vunpack.c.l.b16 %v3152
        %v3185 = vunpack.c.l.b16 %v3153
        %v3186 = vpack.c.b16 %v3171, %v3170
        %v3187 = vpack.c.b16 %v3173, %v3172
        %v3188 = vpack.c.b16 %v3175, %v3174
        %v3189 = vpack.c.b16 %v3177, %v3176
        %v3190 = vpack.c.b16 %v3179, %v3178
        %v3191 = vpack.c.b16 %v3181, %v3180
        %v3192 = vpack.c.b16 %v3183, %v3182
        %v3193 = vpack.c.b16 %v3185, %v3184
        %3202 = vmatprep.subr.bf16.mxu0 0
        %3203 = vmatpush1.bf16.msra.mxu0 %v3186
        %3204 = vmatprep.subr.bf16.mxu0 0
        %3205 = vmatpush1.bf16.msra.mxu0 %v3187
        %3206 = vmatprep.subr.bf16.mxu0 0
        %3207 = vmatpush1.bf16.msra.mxu0 %v3188
        %3208 = vmatprep.subr.bf16.mxu0 0
        %3209 = vmatpush1.bf16.msra.mxu0 %v3189
        %3210 = vmatprep.subr.bf16.mxu0 0
        %3211 = vmatpush1.bf16.msra.mxu0 %v3190
        %3212 = vmatprep.subr.bf16.mxu0 0
        %3213 = vmatpush1.bf16.msra.mxu0 %v3191
        %3214 = vmatprep.subr.bf16.mxu0 0
        %3215 = vmatpush1.bf16.msra.mxu0 %v3192
        %3216 = vmatprep.subr.bf16.mxu0 0
        %3217 = vmatpush1.bf16.msra.mxu0 %v3193
        %3218 = vmatprep.subr.bf16.mxu0 0
        %3219 = vmatpush1.bf16.msra.mxu0 0
        %3220 = vmatprep.subr.bf16.mxu0 0
        %3221 = vmatpush1.bf16.msra.mxu0 0
        %3222 = vmatprep.subr.bf16.mxu0 0
        %3223 = vmatpush1.bf16.msra.mxu0 0
        %3224 = vmatprep.subr.bf16.mxu0 0
        %3225 = vmatpush1.bf16.msra.mxu0 0
        %3226 = vmatprep.subr.bf16.mxu0 0
        %3227 = vmatpush1.bf16.msra.mxu0 0
        %3228 = vmatprep.subr.bf16.mxu0 0
        %3229 = vmatpush1.bf16.msra.mxu0 0
        %3230 = vmatprep.subr.bf16.mxu0 0
        %3231 = vmatpush1.bf16.msra.mxu0 0
        %3232 = vmatprep.subr.bf16.mxu0 0
        %3233 = vmatpush1.bf16.msra.mxu0 0
        %3234 = vmatprep.mubr.bf16.mxu0 0
        %3235 = vmatmul.mubr.bf16.gmra.mrb[0].mxu0 %v2464
        %v3236 = vpop.f32.mrb[0].mxu0
        %v3237 = vadd.f32 0.0, %v3236
        %v3238 = vpop.f32.mrb[0].mxu0
        %v3239 = vpop.f32.mrb[0].mxu0
        %v3240 = vadd.f32 0.0, %v3239
        %v3241 = vpop.f32.mrb[0].mxu0
        %3242 = vmatprep.mubr.bf16.mxu0 0
        %3243 = vmatmul.mubr.bf16.gmra.mrb[0].mxu0 %v2466
        %v3244 = vpop.f32.mrb[0].mxu0
        %v3245 = vadd.f32 0.0, %v3244
        %v3246 = vpop.f32.mrb[0].mxu0
        %v3247 = vpop.f32.mrb[0].mxu0
        %v3248 = vadd.f32 0.0, %v3247
        %v3249 = vpop.f32.mrb[0].mxu0
        %3250 = vmatprep.mubr.bf16.mxu0 0
        %3251 = vmatmul.mubr.bf16.gmra.mrb[0].mxu0 %v2468
        %v3252 = vpop.f32.mrb[0].mxu0
        %v3253 = vadd.f32 0.0, %v3252
        %v3254 = vpop.f32.mrb[0].mxu0
        %v3255 = vpop.f32.mrb[0].mxu0
        %v3256 = vadd.f32 0.0, %v3255
        %v3257 = vpop.f32.mrb[0].mxu0
        %3258 = vmatprep.mubr.bf16.mxu0 0
        %3259 = vmatmul.mubr.bf16.gmra.mrb[0].mxu0 %v2470
        %v3260 = vpop.f32.mrb[0].mxu0
        %v3261 = vadd.f32 0.0, %v3260
        %v3262 = vpop.f32.mrb[0].mxu0
        %v3263 = vpop.f32.mrb[0].mxu0
        %v3264 = vadd.f32 0.0, %v3263
        %v3265 = vpop.f32.mrb[0].mxu0
        %3266 = vmatprep.mubr.bf16.mxu0 0
        %3267 = vmatmul.mubr.bf16.gmra.mrb[0].mxu0 %v2472
        %v3268 = vpop.f32.mrb[0].mxu0
        %v3269 = vadd.f32 0.0, %v3268
        %v3270 = vpop.f32.mrb[0].mxu0
        %v3271 = vpop.f32.mrb[0].mxu0
        %v3272 = vadd.f32 0.0, %v3271
        %v3273 = vpop.f32.mrb[0].mxu0
        %3274 = vmatprep.mubr.bf16.mxu0 0
        %3275 = vmatmul.mubr.bf16.gmra.mrb[0].mxu0 %v2474
        %v3276 = vpop.f32.mrb[0].mxu0
        %v3277 = vadd.f32 0.0, %v3276
        %v3278 = vpop.f32.mrb[0].mxu0
        %v3279 = vpop.f32.mrb[0].mxu0
        %v3280 = vadd.f32 0.0, %v3279
        %v3281 = vpop.f32.mrb[0].mxu0
        %3282 = vmatprep.mubr.bf16.mxu0 0
        %3283 = vmatmul.mubr.bf16.gmra.mrb[0].mxu0 %v2476
        %v3284 = vpop.f32.mrb[0].mxu0
        %v3285 = vadd.f32 0.0, %v3284
        %v3286 = vpop.f32.mrb[0].mxu0
        %v3287 = vpop.f32.mrb[0].mxu0
        %v3288 = vadd.f32 0.0, %v3287
        %v3289 = vpop.f32.mrb[0].mxu0
        %3290 = vmatprep.mubr.bf16.mxu0 0
        %3291 = vmatmul.mubr.bf16.gmra.mrb[0].mxu0 %v2478
        %v3292 = vpop.f32.mrb[0].mxu0
        %v3293 = vadd.f32 0.0, %v3292
        %v3294 = vpop.f32.mrb[0].mxu0
        %v3295 = vpop.f32.mrb[0].mxu0
        %v3296 = vadd.f32 0.0, %v3295
        %v3297 = vpop.f32.mrb[0].mxu0
        %3298 = vdwg.mxu0
        %v3299 = vadd.f32 %v3121, %v3237
        %v3300 = vadd.f32 %v3122, %v3240
        %v3301 = vadd.f32 %v3123, %v3245
        %v3302 = vadd.f32 %v3124, %v3248
        %v3303 = vadd.f32 %v3125, %v3253
        %v3304 = vadd.f32 %v3126, %v3256
        %v3305 = vadd.f32 %v3127, %v3261
        %v3306 = vadd.f32 %v3128, %v3264
        %v3307 = vadd.f32 %v3129, %v3269
        %v3308 = vadd.f32 %v3130, %v3272
        %v3309 = vadd.f32 %v3131, %v3277
        %v3310 = vadd.f32 %v3132, %v3280
        %v3311 = vadd.f32 %v3133, %v3285
        %v3312 = vadd.f32 %v3134, %v3288
        %v3313 = vadd.f32 %v3135, %v3293
        %v3314 = vadd.f32 %v3136, %v3296
        %v3316 = vshrl.u32 %v2478, 16
        %v3318 = vshll.u32 %v2478, 16
        %v3320 = vrot.slane %v3318, 1
        %v3321 = vor.u32 %v3316, %v3320
        %v3323 = vshll.u32 %v2479, 16
        %v3325 = vrot.slane %v3323, 1
        %v3326 = vsel %vm2498, %v3321, %v3325
        %s3328 = scalar_lea.vmem %s3, 256
        %v3329 = vld [vmem:[%s3328] sm:$0xf]
        %v3330 = vld [vmem:[%s3328 + $0x4] sm:$0xf]
        %v3331 = vld [vmem:[%s3328 + $0x8] sm:$0xf]
        %v3332 = vld [vmem:[%s3328 + $0xc] sm:$0xf]
        %v3333 = vld [vmem:[%s3328 + $0x10] sm:$0xf]
        %v3334 = vld [vmem:[%s3328 + $0x14] sm:$0xf]
        %v3335 = vld [vmem:[%s3328 + $0x18] sm:$0xf]
        %v3336 = vld [vmem:[%s3328 + $0x1c] sm:$0xf]
        %v3337 = vld [vmem:[%s3328 + $0x20] sm:$0xf]
        %v3338 = vld [vmem:[%s3328 + $0x24] sm:$0xf]
        %v3339 = vld [vmem:[%s3328 + $0x28] sm:$0xf]
        %v3340 = vld [vmem:[%s3328 + $0x2c] sm:$0xf]
        %v3341 = vld [vmem:[%s3328 + $0x30] sm:$0xf]
        %v3342 = vld [vmem:[%s3328 + $0x34] sm:$0xf]
        %v3343 = vld [vmem:[%s3328 + $0x38] sm:$0xf]
        %v3344 = vld [vmem:[%s3328 + $0x3c] sm:$0xf]
        %v3361 = vunpack.c.l.b16 %v3329
        %v3362 = vunpack.c.l.b16 %v3330
        %v3363 = vunpack.c.l.b16 %v3331
        %v3364 = vunpack.c.l.b16 %v3332
        %v3365 = vunpack.c.l.b16 %v3333
        %v3366 = vunpack.c.l.b16 %v3334
        %v3367 = vunpack.c.l.b16 %v3335
        %v3368 = vunpack.c.l.b16 %v3336
        %v3369 = vunpack.c.l.b16 %v3337
        %v3370 = vunpack.c.l.b16 %v3338
        %v3371 = vunpack.c.l.b16 %v3339
        %v3372 = vunpack.c.l.b16 %v3340
        %v3373 = vunpack.c.l.b16 %v3341
        %v3374 = vunpack.c.l.b16 %v3342
        %v3375 = vunpack.c.l.b16 %v3343
        %v3376 = vunpack.c.l.b16 %v3344
        %v3377 = vpack.c.b16 %v3362, %v3361
        %v3378 = vpack.c.b16 %v3364, %v3363
        %v3379 = vpack.c.b16 %v3366, %v3365
        %v3380 = vpack.c.b16 %v3368, %v3367
        %v3381 = vpack.c.b16 %v3370, %v3369
        %v3382 = vpack.c.b16 %v3372, %v3371
        %v3383 = vpack.c.b16 %v3374, %v3373
        %v3384 = vpack.c.b16 %v3376, %v3375
        %3393 = vmatprep.subr.bf16.mxu0 0
        %3394 = vmatpush1.bf16.msra.mxu0 %v3377
        %3395 = vmatprep.subr.bf16.mxu0 0
        %3396 = vmatpush1.bf16.msra.mxu0 %v3378
        %3397 = vmatprep.subr.bf16.mxu0 0
        %3398 = vmatpush1.bf16.msra.mxu0 %v3379
        %3399 = vmatprep.subr.bf16.mxu0 0
        %3400 = vmatpush1.bf16.msra.mxu0 %v3380
        %3401 = vmatprep.subr.bf16.mxu0 0
        %3402 = vmatpush1.bf16.msra.mxu0 %v3381
        %3403 = vmatprep.subr.bf16.mxu0 0
        %3404 = vmatpush1.bf16.msra.mxu0 %v3382
        %3405 = vmatprep.subr.bf16.mxu0 0
        %3406 = vmatpush1.bf16.msra.mxu0 %v3383
        %3407 = vmatprep.subr.bf16.mxu0 0
        %3408 = vmatpush1.bf16.msra.mxu0 %v3384
        %3409 = vmatprep.subr.bf16.mxu0 0
        %3410 = vmatpush1.bf16.msra.mxu0 0
        %3411 = vmatprep.subr.bf16.mxu0 0
        %3412 = vmatpush1.bf16.msra.mxu0 0
        %3413 = vmatprep.subr.bf16.mxu0 0
        %3414 = vmatpush1.bf16.msra.mxu0 0
        %3415 = vmatprep.subr.bf16.mxu0 0
        %3416 = vmatpush1.bf16.msra.mxu0 0
        %3417 = vmatprep.subr.bf16.mxu0 0
        %3418 = vmatpush1.bf16.msra.mxu0 0
        %3419 = vmatprep.subr.bf16.mxu0 0
        %3420 = vmatpush1.bf16.msra.mxu0 0
        %3421 = vmatprep.subr.bf16.mxu0 0
        %3422 = vmatpush1.bf16.msra.mxu0 0
        %3423 = vmatprep.subr.bf16.mxu0 0
        %3424 = vmatpush1.bf16.msra.mxu0 0
        %3425 = vmatprep.mubr.bf16.mxu0 0
        %3426 = vmatmul.mubr.bf16.gmra.mrb[0].mxu0 %v2522
        %v3427 = vpop.f32.mrb[0].mxu0
        %v3428 = vadd.f32 0.0, %v3427
        %v3429 = vpop.f32.mrb[0].mxu0
        %v3430 = vpop.f32.mrb[0].mxu0
        %v3431 = vadd.f32 0.0, %v3430
        %v3432 = vpop.f32.mrb[0].mxu0
        %3433 = vmatprep.mubr.bf16.mxu0 0
        %3434 = vmatmul.mubr.bf16.gmra.mrb[0].mxu0 %v2534
        %v3435 = vpop.f32.mrb[0].mxu0
        %v3436 = vadd.f32 0.0, %v3435
        %v3437 = vpop.f32.mrb[0].mxu0
        %v3438 = vpop.f32.mrb[0].mxu0
        %v3439 = vadd.f32 0.0, %v3438
        %v3440 = vpop.f32.mrb[0].mxu0
        %3441 = vmatprep.mubr.bf16.mxu0 0
        %3442 = vmatmul.mubr.bf16.gmra.mrb[0].mxu0 %v2546
        %v3443 = vpop.f32.mrb[0].mxu0
        %v3444 = vadd.f32 0.0, %v3443
        %v3445 = vpop.f32.mrb[0].mxu0
        %v3446 = vpop.f32.mrb[0].mxu0
        %v3447 = vadd.f32 0.0, %v3446
        %v3448 = vpop.f32.mrb[0].mxu0
        %3449 = vmatprep.mubr.bf16.mxu0 0
        %3450 = vmatmul.mubr.bf16.gmra.mrb[0].mxu0 %v2558
        %v3451 = vpop.f32.mrb[0].mxu0
        %v3452 = vadd.f32 0.0, %v3451
        %v3453 = vpop.f32.mrb[0].mxu0
        %v3454 = vpop.f32.mrb[0].mxu0
        %v3455 = vadd.f32 0.0, %v3454
        %v3456 = vpop.f32.mrb[0].mxu0
        %3457 = vmatprep.mubr.bf16.mxu0 0
        %3458 = vmatmul.mubr.bf16.gmra.mrb[0].mxu0 %v2570
        %v3459 = vpop.f32.mrb[0].mxu0
        %v3460 = vadd.f32 0.0, %v3459
        %v3461 = vpop.f32.mrb[0].mxu0
        %v3462 = vpop.f32.mrb[0].mxu0
        %v3463 = vadd.f32 0.0, %v3462
        %v3464 = vpop.f32.mrb[0].mxu0
        %3465 = vmatprep.mubr.bf16.mxu0 0
        %3466 = vmatmul.mubr.bf16.gmra.mrb[0].mxu0 %v2582
        %v3467 = vpop.f32.mrb[0].mxu0
        %v3468 = vadd.f32 0.0, %v3467
        %v3469 = vpop.f32.mrb[0].mxu0
        %v3470 = vpop.f32.mrb[0].mxu0
        %v3471 = vadd.f32 0.0, %v3470
        %v3472 = vpop.f32.mrb[0].mxu0
        %3473 = vmatprep.mubr.bf16.mxu0 0
        %3474 = vmatmul.mubr.bf16.gmra.mrb[0].mxu0 %v2594
        %v3475 = vpop.f32.mrb[0].mxu0
        %v3476 = vadd.f32 0.0, %v3475
        %v3477 = vpop.f32.mrb[0].mxu0
        %v3478 = vpop.f32.mrb[0].mxu0
        %v3479 = vadd.f32 0.0, %v3478
        %v3480 = vpop.f32.mrb[0].mxu0
        %3481 = vmatprep.mubr.bf16.mxu0 0
        %3482 = vmatmul.mubr.bf16.gmra.mrb[0].mxu0 %v3326
        %v3483 = vpop.f32.mrb[0].mxu0
        %v3484 = vadd.f32 0.0, %v3483
        %v3485 = vpop.f32.mrb[0].mxu0
        %v3486 = vpop.f32.mrb[0].mxu0
        %v3487 = vadd.f32 0.0, %v3486
        %v3488 = vpop.f32.mrb[0].mxu0
        %3489 = vdwg.mxu0
        %v3490 = vadd.f32 %v3299, %v3428
        %v3491 = vadd.f32 %v3300, %v3431
        %v3492 = vadd.f32 %v3301, %v3436
        %v3493 = vadd.f32 %v3302, %v3439
        %v3494 = vadd.f32 %v3303, %v3444
        %v3495 = vadd.f32 %v3304, %v3447
        %v3496 = vadd.f32 %v3305, %v3452
        %v3497 = vadd.f32 %v3306, %v3455
        %v3498 = vadd.f32 %v3307, %v3460
        %v3499 = vadd.f32 %v3308, %v3463
        %v3500 = vadd.f32 %v3309, %v3468
        %v3501 = vadd.f32 %v3310, %v3471
        %v3502 = vadd.f32 %v3311, %v3476
        %v3503 = vadd.f32 %v3312, %v3479
        %v3504 = vadd.f32 %v3313, %v3484
        %v3505 = vadd.f32 %v3314, %v3487
        %v3508 = vrot.slane %v2478, 1
        %v3509 = vrot.slane %v2479, 1
        %v3510 = vsel %vm2926, %v3508, %v3509
        %s3512 = scalar_lea.vmem %s3, 320
        %v3513 = vld [vmem:[%s3512] sm:$0xf]
        %v3514 = vld [vmem:[%s3512 + $0x4] sm:$0xf]
        %v3515 = vld [vmem:[%s3512 + $0x8] sm:$0xf]
        %v3516 = vld [vmem:[%s3512 + $0xc] sm:$0xf]
        %v3517 = vld [vmem:[%s3512 + $0x10] sm:$0xf]
        %v3518 = vld [vmem:[%s3512 + $0x14] sm:$0xf]
        %v3519 = vld [vmem:[%s3512 + $0x18] sm:$0xf]
        %v3520 = vld [vmem:[%s3512 + $0x1c] sm:$0xf]
        %v3521 = vld [vmem:[%s3512 + $0x20] sm:$0xf]
        %v3522 = vld [vmem:[%s3512 + $0x24] sm:$0xf]
        %v3523 = vld [vmem:[%s3512 + $0x28] sm:$0xf]
        %v3524 = vld [vmem:[%s3512 + $0x2c] sm:$0xf]
        %v3525 = vld [vmem:[%s3512 + $0x30] sm:$0xf]
        %v3526 = vld [vmem:[%s3512 + $0x34] sm:$0xf]
        %v3527 = vld [vmem:[%s3512 + $0x38] sm:$0xf]
        %v3528 = vld [vmem:[%s3512 + $0x3c] sm:$0xf]
        %v3545 = vunpack.c.l.b16 %v3513
        %v3546 = vunpack.c.l.b16 %v3514
        %v3547 = vunpack.c.l.b16 %v3515
        %v3548 = vunpack.c.l.b16 %v3516
        %v3549 = vunpack.c.l.b16 %v3517
        %v3550 = vunpack.c.l.b16 %v3518
        %v3551 = vunpack.c.l.b16 %v3519
        %v3552 = vunpack.c.l.b16 %v3520
        %v3553 = vunpack.c.l.b16 %v3521
        %v3554 = vunpack.c.l.b16 %v3522
        %v3555 = vunpack.c.l.b16 %v3523
        %v3556 = vunpack.c.l.b16 %v3524
        %v3557 = vunpack.c.l.b16 %v3525
        %v3558 = vunpack.c.l.b16 %v3526
        %v3559 = vunpack.c.l.b16 %v3527
        %v3560 = vunpack.c.l.b16 %v3528
        %v3561 = vpack.c.b16 %v3546, %v3545
        %v3562 = vpack.c.b16 %v3548, %v3547
        %v3563 = vpack.c.b16 %v3550, %v3549
        %v3564 = vpack.c.b16 %v3552, %v3551
        %v3565 = vpack.c.b16 %v3554, %v3553
        %v3566 = vpack.c.b16 %v3556, %v3555
        %v3567 = vpack.c.b16 %v3558, %v3557
        %v3568 = vpack.c.b16 %v3560, %v3559
        %3577 = vmatprep.subr.bf16.mxu0 0
        %3578 = vmatpush1.bf16.msra.mxu0 %v3561
        %3579 = vmatprep.subr.bf16.mxu0 0
        %3580 = vmatpush1.bf16.msra.mxu0 %v3562
        %3581 = vmatprep.subr.bf16.mxu0 0
        %3582 = vmatpush1.bf16.msra.mxu0 %v3563
        %3583 = vmatprep.subr.bf16.mxu0 0
        %3584 = vmatpush1.bf16.msra.mxu0 %v3564
        %3585 = vmatprep.subr.bf16.mxu0 0
        %3586 = vmatpush1.bf16.msra.mxu0 %v3565
        %3587 = vmatprep.subr.bf16.mxu0 0
        %3588 = vmatpush1.bf16.msra.mxu0 %v3566
        %3589 = vmatprep.subr.bf16.mxu0 0
        %3590 = vmatpush1.bf16.msra.mxu0 %v3567
        %3591 = vmatprep.subr.bf16.mxu0 0
        %3592 = vmatpush1.bf16.msra.mxu0 %v3568
        %3593 = vmatprep.subr.bf16.mxu0 0
        %3594 = vmatpush1.bf16.msra.mxu0 0
        %3595 = vmatprep.subr.bf16.mxu0 0
        %3596 = vmatpush1.bf16.msra.mxu0 0
        %3597 = vmatprep.subr.bf16.mxu0 0
        %3598 = vmatpush1.bf16.msra.mxu0 0
        %3599 = vmatprep.subr.bf16.mxu0 0
        %3600 = vmatpush1.bf16.msra.mxu0 0
        %3601 = vmatprep.subr.bf16.mxu0 0
        %3602 = vmatpush1.bf16.msra.mxu0 0
        %3603 = vmatprep.subr.bf16.mxu0 0
        %3604 = vmatpush1.bf16.msra.mxu0 0
        %3605 = vmatprep.subr.bf16.mxu0 0
        %3606 = vmatpush1.bf16.msra.mxu0 0
        %3607 = vmatprep.subr.bf16.mxu0 0
        %3608 = vmatpush1.bf16.msra.mxu0 0
        %3609 = vmatprep.mubr.bf16.mxu0 0
        %3610 = vmatmul.mubr.bf16.gmra.mrb[0].mxu0 %v2932
        %v3611 = vpop.f32.mrb[0].mxu0
        %v3612 = vadd.f32 0.0, %v3611
        %v3613 = vpop.f32.mrb[0].mxu0
        %v3614 = vpop.f32.mrb[0].mxu0
        %v3615 = vadd.f32 0.0, %v3614
        %v3616 = vpop.f32.mrb[0].mxu0
        %3617 = vmatprep.mubr.bf16.mxu0 0
        %3618 = vmatmul.mubr.bf16.gmra.mrb[0].mxu0 %v2935
        %v3619 = vpop.f32.mrb[0].mxu0
        %v3620 = vadd.f32 0.0, %v3619
        %v3621 = vpop.f32.mrb[0].mxu0
        %v3622 = vpop.f32.mrb[0].mxu0
        %v3623 = vadd.f32 0.0, %v3622
        %v3624 = vpop.f32.mrb[0].mxu0
        %3625 = vmatprep.mubr.bf16.mxu0 0
        %3626 = vmatmul.mubr.bf16.gmra.mrb[0].mxu0 %v2938
        %v3627 = vpop.f32.mrb[0].mxu0
        %v3628 = vadd.f32 0.0, %v3627
        %v3629 = vpop.f32.mrb[0].mxu0
        %v3630 = vpop.f32.mrb[0].mxu0
        %v3631 = vadd.f32 0.0, %v3630
        %v3632 = vpop.f32.mrb[0].mxu0
        %3633 = vmatprep.mubr.bf16.mxu0 0
        %3634 = vmatmul.mubr.bf16.gmra.mrb[0].mxu0 %v2941
        %v3635 = vpop.f32.mrb[0].mxu0
        %v3636 = vadd.f32 0.0, %v3635
        %v3637 = vpop.f32.mrb[0].mxu0
        %v3638 = vpop.f32.mrb[0].mxu0
        %v3639 = vadd.f32 0.0, %v3638
        %v3640 = vpop.f32.mrb[0].mxu0
        %3641 = vmatprep.mubr.bf16.mxu0 0
        %3642 = vmatmul.mubr.bf16.gmra.mrb[0].mxu0 %v2944
        %v3643 = vpop.f32.mrb[0].mxu0
        %v3644 = vadd.f32 0.0, %v3643
        %v3645 = vpop.f32.mrb[0].mxu0
        %v3646 = vpop.f32.mrb[0].mxu0
        %v3647 = vadd.f32 0.0, %v3646
        %v3648 = vpop.f32.mrb[0].mxu0
        %3649 = vmatprep.mubr.bf16.mxu0 0
        %3650 = vmatmul.mubr.bf16.gmra.mrb[0].mxu0 %v2947
        %v3651 = vpop.f32.mrb[0].mxu0
        %v3652 = vadd.f32 0.0, %v3651
        %v3653 = vpop.f32.mrb[0].mxu0
        %v3654 = vpop.f32.mrb[0].mxu0
        %v3655 = vadd.f32 0.0, %v3654
        %v3656 = vpop.f32.mrb[0].mxu0
        %3657 = vmatprep.mubr.bf16.mxu0 0
        %3658 = vmatmul.mubr.bf16.gmra.mrb[0].mxu0 %v2950
        %v3659 = vpop.f32.mrb[0].mxu0
        %v3660 = vadd.f32 0.0, %v3659
        %v3661 = vpop.f32.mrb[0].mxu0
        %v3662 = vpop.f32.mrb[0].mxu0
        %v3663 = vadd.f32 0.0, %v3662
        %v3664 = vpop.f32.mrb[0].mxu0
        %3665 = vmatprep.mubr.bf16.mxu0 0
        %3666 = vmatmul.mubr.bf16.gmra.mrb[0].mxu0 %v3510
        %v3667 = vpop.f32.mrb[0].mxu0
        %v3668 = vadd.f32 0.0, %v3667
        %v3669 = vpop.f32.mrb[0].mxu0
        %v3670 = vpop.f32.mrb[0].mxu0
        %v3671 = vadd.f32 0.0, %v3670
        %v3672 = vpop.f32.mrb[0].mxu0
        %3673 = vdwg.mxu0
        %v3674 = vadd.f32 %v3490, %v3612
        %v3675 = vadd.f32 %v3491, %v3615
        %v3676 = vadd.f32 %v3492, %v3620
        %v3677 = vadd.f32 %v3493, %v3623
        %v3678 = vadd.f32 %v3494, %v3628
        %v3679 = vadd.f32 %v3495, %v3631
        %v3680 = vadd.f32 %v3496, %v3636
        %v3681 = vadd.f32 %v3497, %v3639
        %v3682 = vadd.f32 %v3498, %v3644
        %v3683 = vadd.f32 %v3499, %v3647
        %v3684 = vadd.f32 %v3500, %v3652
        %v3685 = vadd.f32 %v3501, %v3655
        %v3686 = vadd.f32 %v3502, %v3660
        %v3687 = vadd.f32 %v3503, %v3663
        %v3688 = vadd.f32 %v3504, %v3668
        %v3689 = vadd.f32 %v3505, %v3671
        %s3690 = scalar_lea.vmem %s3, 384
        %v3691 = vld [vmem:[%s3690] sm:$0xf]
        %v3692 = vld [vmem:[%s3690 + $0x4] sm:$0xf]
        %v3693 = vld [vmem:[%s3690 + $0x8] sm:$0xf]
        %v3694 = vld [vmem:[%s3690 + $0xc] sm:$0xf]
        %v3695 = vld [vmem:[%s3690 + $0x10] sm:$0xf]
        %v3696 = vld [vmem:[%s3690 + $0x14] sm:$0xf]
        %v3697 = vld [vmem:[%s3690 + $0x18] sm:$0xf]
        %v3698 = vld [vmem:[%s3690 + $0x1c] sm:$0xf]
        %v3699 = vld [vmem:[%s3690 + $0x20] sm:$0xf]
        %v3700 = vld [vmem:[%s3690 + $0x24] sm:$0xf]
        %v3701 = vld [vmem:[%s3690 + $0x28] sm:$0xf]
        %v3702 = vld [vmem:[%s3690 + $0x2c] sm:$0xf]
        %v3703 = vld [vmem:[%s3690 + $0x30] sm:$0xf]
        %v3704 = vld [vmem:[%s3690 + $0x34] sm:$0xf]
        %v3705 = vld [vmem:[%s3690 + $0x38] sm:$0xf]
        %v3706 = vld [vmem:[%s3690 + $0x3c] sm:$0xf]
        %v3723 = vunpack.c.l.b16 %v3691
        %v3724 = vunpack.c.l.b16 %v3692
        %v3725 = vunpack.c.l.b16 %v3693
        %v3726 = vunpack.c.l.b16 %v3694
        %v3727 = vunpack.c.l.b16 %v3695
        %v3728 = vunpack.c.l.b16 %v3696
        %v3729 = vunpack.c.l.b16 %v3697
        %v3730 = vunpack.c.l.b16 %v3698
        %v3731 = vunpack.c.l.b16 %v3699
        %v3732 = vunpack.c.l.b16 %v3700
        %v3733 = vunpack.c.l.b16 %v3701
        %v3734 = vunpack.c.l.b16 %v3702
        %v3735 = vunpack.c.l.b16 %v3703
        %v3736 = vunpack.c.l.b16 %v3704
        %v3737 = vunpack.c.l.b16 %v3705
        %v3738 = vunpack.c.l.b16 %v3706
        %v3739 = vpack.c.b16 %v3724, %v3723
        %v3740 = vpack.c.b16 %v3726, %v3725
        %v3741 = vpack.c.b16 %v3728, %v3727
        %v3742 = vpack.c.b16 %v3730, %v3729
        %v3743 = vpack.c.b16 %v3732, %v3731
        %v3744 = vpack.c.b16 %v3734, %v3733
        %v3745 = vpack.c.b16 %v3736, %v3735
        %v3746 = vpack.c.b16 %v3738, %v3737
        %3755 = vmatprep.subr.bf16.mxu0 0
        %3756 = vmatpush1.bf16.msra.mxu0 %v3739
        %3757 = vmatprep.subr.bf16.mxu0 0
        %3758 = vmatpush1.bf16.msra.mxu0 %v3740
        %3759 = vmatprep.subr.bf16.mxu0 0
        %3760 = vmatpush1.bf16.msra.mxu0 %v3741
        %3761 = vmatprep.subr.bf16.mxu0 0
        %3762 = vmatpush1.bf16.msra.mxu0 %v3742
        %3763 = vmatprep.subr.bf16.mxu0 0
        %3764 = vmatpush1.bf16.msra.mxu0 %v3743
        %3765 = vmatprep.subr.bf16.mxu0 0
        %3766 = vmatpush1.bf16.msra.mxu0 %v3744
        %3767 = vmatprep.subr.bf16.mxu0 0
        %3768 = vmatpush1.bf16.msra.mxu0 %v3745
        %3769 = vmatprep.subr.bf16.mxu0 0
        %3770 = vmatpush1.bf16.msra.mxu0 %v3746
        %3771 = vmatprep.subr.bf16.mxu0 0
        %3772 = vmatpush1.bf16.msra.mxu0 0
        %3773 = vmatprep.subr.bf16.mxu0 0
        %3774 = vmatpush1.bf16.msra.mxu0 0
        %3775 = vmatprep.subr.bf16.mxu0 0
        %3776 = vmatpush1.bf16.msra.mxu0 0
        %3777 = vmatprep.subr.bf16.mxu0 0
        %3778 = vmatpush1.bf16.msra.mxu0 0
        %3779 = vmatprep.subr.bf16.mxu0 0
        %3780 = vmatpush1.bf16.msra.mxu0 0
        %3781 = vmatprep.subr.bf16.mxu0 0
        %3782 = vmatpush1.bf16.msra.mxu0 0
        %3783 = vmatprep.subr.bf16.mxu0 0
        %3784 = vmatpush1.bf16.msra.mxu0 0
        %3785 = vmatprep.subr.bf16.mxu0 0
        %3786 = vmatpush1.bf16.msra.mxu0 0
        %3787 = vmatprep.mubr.bf16.mxu0 0
        %3788 = vmatmul.mubr.bf16.gmra.mrb[0].mxu0 %v2466
        %v3789 = vpop.f32.mrb[0].mxu0
        %v3790 = vadd.f32 0.0, %v3789
        %v3791 = vpop.f32.mrb[0].mxu0
        %v3792 = vpop.f32.mrb[0].mxu0
        %v3793 = vadd.f32 0.0, %v3792
        %v3794 = vpop.f32.mrb[0].mxu0
        %3795 = vmatprep.mubr.bf16.mxu0 0
        %3796 = vmatmul.mubr.bf16.gmra.mrb[0].mxu0 %v2468
        %v3797 = vpop.f32.mrb[0].mxu0
        %v3798 = vadd.f32 0.0, %v3797
        %v3799 = vpop.f32.mrb[0].mxu0
        %v3800 = vpop.f32.mrb[0].mxu0
        %v3801 = vadd.f32 0.0, %v3800
        %v3802 = vpop.f32.mrb[0].mxu0
        %3803 = vmatprep.mubr.bf16.mxu0 0
        %3804 = vmatmul.mubr.bf16.gmra.mrb[0].mxu0 %v2470
        %v3805 = vpop.f32.mrb[0].mxu0
        %v3806 = vadd.f32 0.0, %v3805
        %v3807 = vpop.f32.mrb[0].mxu0
        %v3808 = vpop.f32.mrb[0].mxu0
        %v3809 = vadd.f32 0.0, %v3808
        %v3810 = vpop.f32.mrb[0].mxu0
        %3811 = vmatprep.mubr.bf16.mxu0 0
        %3812 = vmatmul.mubr.bf16.gmra.mrb[0].mxu0 %v2472
        %v3813 = vpop.f32.mrb[0].mxu0
        %v3814 = vadd.f32 0.0, %v3813
        %v3815 = vpop.f32.mrb[0].mxu0
        %v3816 = vpop.f32.mrb[0].mxu0
        %v3817 = vadd.f32 0.0, %v3816
        %v3818 = vpop.f32.mrb[0].mxu0
        %3819 = vmatprep.mubr.bf16.mxu0 0
        %3820 = vmatmul.mubr.bf16.gmra.mrb[0].mxu0 %v2474
        %v3821 = vpop.f32.mrb[0].mxu0
        %v3822 = vadd.f32 0.0, %v3821
        %v3823 = vpop.f32.mrb[0].mxu0
        %v3824 = vpop.f32.mrb[0].mxu0
        %v3825 = vadd.f32 0.0, %v3824
        %v3826 = vpop.f32.mrb[0].mxu0
        %3827 = vmatprep.mubr.bf16.mxu0 0
        %3828 = vmatmul.mubr.bf16.gmra.mrb[0].mxu0 %v2476
        %v3829 = vpop.f32.mrb[0].mxu0
        %v3830 = vadd.f32 0.0, %v3829
        %v3831 = vpop.f32.mrb[0].mxu0
        %v3832 = vpop.f32.mrb[0].mxu0
        %v3833 = vadd.f32 0.0, %v3832
        %v3834 = vpop.f32.mrb[0].mxu0
        %3835 = vmatprep.mubr.bf16.mxu0 0
        %3836 = vmatmul.mubr.bf16.gmra.mrb[0].mxu0 %v2478
        %v3837 = vpop.f32.mrb[0].mxu0
        %v3838 = vadd.f32 0.0, %v3837
        %v3839 = vpop.f32.mrb[0].mxu0
        %v3840 = vpop.f32.mrb[0].mxu0
        %v3841 = vadd.f32 0.0, %v3840
        %v3842 = vpop.f32.mrb[0].mxu0
        %3843 = vmatprep.mubr.bf16.mxu0 0
        %3844 = vmatmul.mubr.bf16.gmra.mrb[0].mxu0 %v2480
        %v3845 = vpop.f32.mrb[0].mxu0
        %v3846 = vadd.f32 0.0, %v3845
        %v3847 = vpop.f32.mrb[0].mxu0
        %v3848 = vpop.f32.mrb[0].mxu0
        %v3849 = vadd.f32 0.0, %v3848
        %v3850 = vpop.f32.mrb[0].mxu0
        %3851 = vdwg.mxu0
        %v3852 = vadd.f32 %v3674, %v3790
        %v3853 = vadd.f32 %v3675, %v3793
        %v3854 = vadd.f32 %v3676, %v3798
        %v3855 = vadd.f32 %v3677, %v3801
        %v3856 = vadd.f32 %v3678, %v3806
        %v3857 = vadd.f32 %v3679, %v3809
        %v3858 = vadd.f32 %v3680, %v3814
        %v3859 = vadd.f32 %v3681, %v3817
        %v3860 = vadd.f32 %v3682, %v3822
        %v3861 = vadd.f32 %v3683, %v3825
        %v3862 = vadd.f32 %v3684, %v3830
        %v3863 = vadd.f32 %v3685, %v3833
        %v3864 = vadd.f32 %v3686, %v3838
        %v3865 = vadd.f32 %v3687, %v3841
        %v3866 = vadd.f32 %v3688, %v3846
        %v3867 = vadd.f32 %v3689, %v3849
        %v3869 = vshrl.u32 %v2480, 16
        %v3871 = vshll.u32 %v2480, 16
        %v3873 = vrot.slane %v3871, 1
        %v3874 = vor.u32 %v3869, %v3873
        %v3876 = vshll.u32 %v2481, 16
        %v3878 = vrot.slane %v3876, 1
        %v3879 = vsel %vm2498, %v3874, %v3878
        %s3881 = scalar_lea.vmem %s3, 448
        %v3882 = vld [vmem:[%s3881] sm:$0xf]
        %v3883 = vld [vmem:[%s3881 + $0x4] sm:$0xf]
        %v3884 = vld [vmem:[%s3881 + $0x8] sm:$0xf]
        %v3885 = vld [vmem:[%s3881 + $0xc] sm:$0xf]
        %v3886 = vld [vmem:[%s3881 + $0x10] sm:$0xf]
        %v3887 = vld [vmem:[%s3881 + $0x14] sm:$0xf]
        %v3888 = vld [vmem:[%s3881 + $0x18] sm:$0xf]
        %v3889 = vld [vmem:[%s3881 + $0x1c] sm:$0xf]
        %v3890 = vld [vmem:[%s3881 + $0x20] sm:$0xf]
        %v3891 = vld [vmem:[%s3881 + $0x24] sm:$0xf]
        %v3892 = vld [vmem:[%s3881 + $0x28] sm:$0xf]
        %v3893 = vld [vmem:[%s3881 + $0x2c] sm:$0xf]
        %v3894 = vld [vmem:[%s3881 + $0x30] sm:$0xf]
        %v3895 = vld [vmem:[%s3881 + $0x34] sm:$0xf]
        %v3896 = vld [vmem:[%s3881 + $0x38] sm:$0xf]
        %v3897 = vld [vmem:[%s3881 + $0x3c] sm:$0xf]
        %v3914 = vunpack.c.l.b16 %v3882
        %v3915 = vunpack.c.l.b16 %v3883
        %v3916 = vunpack.c.l.b16 %v3884
        %v3917 = vunpack.c.l.b16 %v3885
        %v3918 = vunpack.c.l.b16 %v3886
        %v3919 = vunpack.c.l.b16 %v3887
        %v3920 = vunpack.c.l.b16 %v3888
        %v3921 = vunpack.c.l.b16 %v3889
        %v3922 = vunpack.c.l.b16 %v3890
        %v3923 = vunpack.c.l.b16 %v3891
        %v3924 = vunpack.c.l.b16 %v3892
        %v3925 = vunpack.c.l.b16 %v3893
        %v3926 = vunpack.c.l.b16 %v3894
        %v3927 = vunpack.c.l.b16 %v3895
        %v3928 = vunpack.c.l.b16 %v3896
        %v3929 = vunpack.c.l.b16 %v3897
        %v3930 = vpack.c.b16 %v3915, %v3914
        %v3931 = vpack.c.b16 %v3917, %v3916
        %v3932 = vpack.c.b16 %v3919, %v3918
        %v3933 = vpack.c.b16 %v3921, %v3920
        %v3934 = vpack.c.b16 %v3923, %v3922
        %v3935 = vpack.c.b16 %v3925, %v3924
        %v3936 = vpack.c.b16 %v3927, %v3926
        %v3937 = vpack.c.b16 %v3929, %v3928
        %3946 = vmatprep.subr.bf16.mxu0 0
        %3947 = vmatpush1.bf16.msra.mxu0 %v3930
        %3948 = vmatprep.subr.bf16.mxu0 0
        %3949 = vmatpush1.bf16.msra.mxu0 %v3931
        %3950 = vmatprep.subr.bf16.mxu0 0
        %3951 = vmatpush1.bf16.msra.mxu0 %v3932
        %3952 = vmatprep.subr.bf16.mxu0 0
        %3953 = vmatpush1.bf16.msra.mxu0 %v3933
        %3954 = vmatprep.subr.bf16.mxu0 0
        %3955 = vmatpush1.bf16.msra.mxu0 %v3934
        %3956 = vmatprep.subr.bf16.mxu0 0
        %3957 = vmatpush1.bf16.msra.mxu0 %v3935
        %3958 = vmatprep.subr.bf16.mxu0 0
        %3959 = vmatpush1.bf16.msra.mxu0 %v3936
        %3960 = vmatprep.subr.bf16.mxu0 0
        %3961 = vmatpush1.bf16.msra.mxu0 %v3937
        %3962 = vmatprep.subr.bf16.mxu0 0
        %3963 = vmatpush1.bf16.msra.mxu0 0
        %3964 = vmatprep.subr.bf16.mxu0 0
        %3965 = vmatpush1.bf16.msra.mxu0 0
        %3966 = vmatprep.subr.bf16.mxu0 0
        %3967 = vmatpush1.bf16.msra.mxu0 0
        %3968 = vmatprep.subr.bf16.mxu0 0
        %3969 = vmatpush1.bf16.msra.mxu0 0
        %3970 = vmatprep.subr.bf16.mxu0 0
        %3971 = vmatpush1.bf16.msra.mxu0 0
        %3972 = vmatprep.subr.bf16.mxu0 0
        %3973 = vmatpush1.bf16.msra.mxu0 0
        %3974 = vmatprep.subr.bf16.mxu0 0
        %3975 = vmatpush1.bf16.msra.mxu0 0
        %3976 = vmatprep.subr.bf16.mxu0 0
        %3977 = vmatpush1.bf16.msra.mxu0 0
        %3978 = vmatprep.mubr.bf16.mxu0 0
        %3979 = vmatmul.mubr.bf16.gmra.mrb[0].mxu0 %v2534
        %v3980 = vpop.f32.mrb[0].mxu0
        %v3981 = vadd.f32 0.0, %v3980
        %v3982 = vpop.f32.mrb[0].mxu0
        %v3983 = vpop.f32.mrb[0].mxu0
        %v3984 = vadd.f32 0.0, %v3983
        %v3985 = vpop.f32.mrb[0].mxu0
        %3986 = vmatprep.mubr.bf16.mxu0 0
        %3987 = vmatmul.mubr.bf16.gmra.mrb[0].mxu0 %v2546
        %v3988 = vpop.f32.mrb[0].mxu0
        %v3989 = vadd.f32 0.0, %v3988
        %v3990 = vpop.f32.mrb[0].mxu0
        %v3991 = vpop.f32.mrb[0].mxu0
        %v3992 = vadd.f32 0.0, %v3991
        %v3993 = vpop.f32.mrb[0].mxu0
        %3994 = vmatprep.mubr.bf16.mxu0 0
        %3995 = vmatmul.mubr.bf16.gmra.mrb[0].mxu0 %v2558
        %v3996 = vpop.f32.mrb[0].mxu0
        %v3997 = vadd.f32 0.0, %v3996
        %v3998 = vpop.f32.mrb[0].mxu0
        %v3999 = vpop.f32.mrb[0].mxu0
        %v4000 = vadd.f32 0.0, %v3999
        %v4001 = vpop.f32.mrb[0].mxu0
        %4002 = vmatprep.mubr.bf16.mxu0 0
        %4003 = vmatmul.mubr.bf16.gmra.mrb[0].mxu0 %v2570
        %v4004 = vpop.f32.mrb[0].mxu0
        %v4005 = vadd.f32 0.0, %v4004
        %v4006 = vpop.f32.mrb[0].mxu0
        %v4007 = vpop.f32.mrb[0].mxu0
        %v4008 = vadd.f32 0.0, %v4007
        %v4009 = vpop.f32.mrb[0].mxu0
        %4010 = vmatprep.mubr.bf16.mxu0 0
        %4011 = vmatmul.mubr.bf16.gmra.mrb[0].mxu0 %v2582
        %v4012 = vpop.f32.mrb[0].mxu0
        %v4013 = vadd.f32 0.0, %v4012
        %v4014 = vpop.f32.mrb[0].mxu0
        %v4015 = vpop.f32.mrb[0].mxu0
        %v4016 = vadd.f32 0.0, %v4015
        %v4017 = vpop.f32.mrb[0].mxu0
        %4018 = vmatprep.mubr.bf16.mxu0 0
        %4019 = vmatmul.mubr.bf16.gmra.mrb[0].mxu0 %v2594
        %v4020 = vpop.f32.mrb[0].mxu0
        %v4021 = vadd.f32 0.0, %v4020
        %v4022 = vpop.f32.mrb[0].mxu0
        %v4023 = vpop.f32.mrb[0].mxu0
        %v4024 = vadd.f32 0.0, %v4023
        %v4025 = vpop.f32.mrb[0].mxu0
        %4026 = vmatprep.mubr.bf16.mxu0 0
        %4027 = vmatmul.mubr.bf16.gmra.mrb[0].mxu0 %v3326
        %v4028 = vpop.f32.mrb[0].mxu0
        %v4029 = vadd.f32 0.0, %v4028
        %v4030 = vpop.f32.mrb[0].mxu0
        %v4031 = vpop.f32.mrb[0].mxu0
        %v4032 = vadd.f32 0.0, %v4031
        %v4033 = vpop.f32.mrb[0].mxu0
        %4034 = vmatprep.mubr.bf16.mxu0 0
        %4035 = vmatmul.mubr.bf16.gmra.mrb[0].mxu0 %v3879
        %v4036 = vpop.f32.mrb[0].mxu0
        %v4037 = vadd.f32 0.0, %v4036
        %v4038 = vpop.f32.mrb[0].mxu0
        %v4039 = vpop.f32.mrb[0].mxu0
        %v4040 = vadd.f32 0.0, %v4039
        %v4041 = vpop.f32.mrb[0].mxu0
        %4042 = vdwg.mxu0
        %v4043 = vadd.f32 %v3852, %v3981
        %v4044 = vadd.f32 %v3853, %v3984
        %v4045 = vadd.f32 %v3854, %v3989
        %v4046 = vadd.f32 %v3855, %v3992
        %v4047 = vadd.f32 %v3856, %v3997
        %v4048 = vadd.f32 %v3857, %v4000
        %v4049 = vadd.f32 %v3858, %v4005
        %v4050 = vadd.f32 %v3859, %v4008
        %v4051 = vadd.f32 %v3860, %v4013
        %v4052 = vadd.f32 %v3861, %v4016
        %v4053 = vadd.f32 %v3862, %v4021
        %v4054 = vadd.f32 %v3863, %v4024
        %v4055 = vadd.f32 %v3864, %v4029
        %v4056 = vadd.f32 %v3865, %v4032
        %v4057 = vadd.f32 %v3866, %v4037
        %v4058 = vadd.f32 %v3867, %v4040
        %v4061 = vrot.slane %v2480, 1
        %v4062 = vrot.slane %v2481, 1
        %v4063 = vsel %vm2926, %v4061, %v4062
        %s4065 = scalar_lea.vmem %s3, 512
        %v4066 = vld [vmem:[%s4065] sm:$0xf]
        %v4067 = vld [vmem:[%s4065 + $0x4] sm:$0xf]
        %v4068 = vld [vmem:[%s4065 + $0x8] sm:$0xf]
        %v4069 = vld [vmem:[%s4065 + $0xc] sm:$0xf]
        %v4070 = vld [vmem:[%s4065 + $0x10] sm:$0xf]
        %v4071 = vld [vmem:[%s4065 + $0x14] sm:$0xf]
        %v4072 = vld [vmem:[%s4065 + $0x18] sm:$0xf]
        %v4073 = vld [vmem:[%s4065 + $0x1c] sm:$0xf]
        %v4074 = vld [vmem:[%s4065 + $0x20] sm:$0xf]
        %v4075 = vld [vmem:[%s4065 + $0x24] sm:$0xf]
        %v4076 = vld [vmem:[%s4065 + $0x28] sm:$0xf]
        %v4077 = vld [vmem:[%s4065 + $0x2c] sm:$0xf]
        %v4078 = vld [vmem:[%s4065 + $0x30] sm:$0xf]
        %v4079 = vld [vmem:[%s4065 + $0x34] sm:$0xf]
        %v4080 = vld [vmem:[%s4065 + $0x38] sm:$0xf]
        %v4081 = vld [vmem:[%s4065 + $0x3c] sm:$0xf]
        %v4098 = vunpack.c.l.b16 %v4066
        %v4099 = vunpack.c.l.b16 %v4067
        %v4100 = vunpack.c.l.b16 %v4068
        %v4101 = vunpack.c.l.b16 %v4069
        %v4102 = vunpack.c.l.b16 %v4070
        %v4103 = vunpack.c.l.b16 %v4071
        %v4104 = vunpack.c.l.b16 %v4072
        %v4105 = vunpack.c.l.b16 %v4073
        %v4106 = vunpack.c.l.b16 %v4074
        %v4107 = vunpack.c.l.b16 %v4075
        %v4108 = vunpack.c.l.b16 %v4076
        %v4109 = vunpack.c.l.b16 %v4077
        %v4110 = vunpack.c.l.b16 %v4078
        %v4111 = vunpack.c.l.b16 %v4079
        %v4112 = vunpack.c.l.b16 %v4080
        %v4113 = vunpack.c.l.b16 %v4081
        %v4114 = vpack.c.b16 %v4099, %v4098
        %v4115 = vpack.c.b16 %v4101, %v4100
        %v4116 = vpack.c.b16 %v4103, %v4102
        %v4117 = vpack.c.b16 %v4105, %v4104
        %v4118 = vpack.c.b16 %v4107, %v4106
        %v4119 = vpack.c.b16 %v4109, %v4108
        %v4120 = vpack.c.b16 %v4111, %v4110
        %v4121 = vpack.c.b16 %v4113, %v4112
        %4130 = vmatprep.subr.bf16.mxu0 0
        %4131 = vmatpush1.bf16.msra.mxu0 %v4114
        %4132 = vmatprep.subr.bf16.mxu0 0
        %4133 = vmatpush1.bf16.msra.mxu0 %v4115
        %4134 = vmatprep.subr.bf16.mxu0 0
        %4135 = vmatpush1.bf16.msra.mxu0 %v4116
        %4136 = vmatprep.subr.bf16.mxu0 0
        %4137 = vmatpush1.bf16.msra.mxu0 %v4117
        %4138 = vmatprep.subr.bf16.mxu0 0
        %4139 = vmatpush1.bf16.msra.mxu0 %v4118
        %4140 = vmatprep.subr.bf16.mxu0 0
        %4141 = vmatpush1.bf16.msra.mxu0 %v4119
        %4142 = vmatprep.subr.bf16.mxu0 0
        %4143 = vmatpush1.bf16.msra.mxu0 %v4120
        %4144 = vmatprep.subr.bf16.mxu0 0
        %4145 = vmatpush1.bf16.msra.mxu0 %v4121
        %4146 = vmatprep.subr.bf16.mxu0 0
        %4147 = vmatpush1.bf16.msra.mxu0 0
        %4148 = vmatprep.subr.bf16.mxu0 0
        %4149 = vmatpush1.bf16.msra.mxu0 0
        %4150 = vmatprep.subr.bf16.mxu0 0
        %4151 = vmatpush1.bf16.msra.mxu0 0
        %4152 = vmatprep.subr.bf16.mxu0 0
        %4153 = vmatpush1.bf16.msra.mxu0 0
        %4154 = vmatprep.subr.bf16.mxu0 0
        %4155 = vmatpush1.bf16.msra.mxu0 0
        %4156 = vmatprep.subr.bf16.mxu0 0
        %4157 = vmatpush1.bf16.msra.mxu0 0
        %4158 = vmatprep.subr.bf16.mxu0 0
        %4159 = vmatpush1.bf16.msra.mxu0 0
        %4160 = vmatprep.subr.bf16.mxu0 0
        %4161 = vmatpush1.bf16.msra.mxu0 0
        %4162 = vmatprep.mubr.bf16.mxu0 0
        %4163 = vmatmul.mubr.bf16.gmra.mrb[0].mxu0 %v2935
        %v4164 = vpop.f32.mrb[0].mxu0
        %v4165 = vadd.f32 0.0, %v4164
        %v4166 = vpop.f32.mrb[0].mxu0
        %v4167 = vpop.f32.mrb[0].mxu0
        %v4168 = vadd.f32 0.0, %v4167
        %v4169 = vpop.f32.mrb[0].mxu0
        %4170 = vmatprep.mubr.bf16.mxu0 0
        %4171 = vmatmul.mubr.bf16.gmra.mrb[0].mxu0 %v2938
        %v4172 = vpop.f32.mrb[0].mxu0
        %v4173 = vadd.f32 0.0, %v4172
        %v4174 = vpop.f32.mrb[0].mxu0
        %v4175 = vpop.f32.mrb[0].mxu0
        %v4176 = vadd.f32 0.0, %v4175
        %v4177 = vpop.f32.mrb[0].mxu0
        %4178 = vmatprep.mubr.bf16.mxu0 0
        %4179 = vmatmul.mubr.bf16.gmra.mrb[0].mxu0 %v2941
        %v4180 = vpop.f32.mrb[0].mxu0
        %v4181 = vadd.f32 0.0, %v4180
        %v4182 = vpop.f32.mrb[0].mxu0
        %v4183 = vpop.f32.mrb[0].mxu0
        %v4184 = vadd.f32 0.0, %v4183
        %v4185 = vpop.f32.mrb[0].mxu0
        %4186 = vmatprep.mubr.bf16.mxu0 0
        %4187 = vmatmul.mubr.bf16.gmra.mrb[0].mxu0 %v2944
        %v4188 = vpop.f32.mrb[0].mxu0
        %v4189 = vadd.f32 0.0, %v4188
        %v4190 = vpop.f32.mrb[0].mxu0
        %v4191 = vpop.f32.mrb[0].mxu0
        %v4192 = vadd.f32 0.0, %v4191
        %v4193 = vpop.f32.mrb[0].mxu0
        %4194 = vmatprep.mubr.bf16.mxu0 0
        %4195 = vmatmul.mubr.bf16.gmra.mrb[0].mxu0 %v2947
        %v4196 = vpop.f32.mrb[0].mxu0
        %v4197 = vadd.f32 0.0, %v4196
        %v4198 = vpop.f32.mrb[0].mxu0
        %v4199 = vpop.f32.mrb[0].mxu0
        %v4200 = vadd.f32 0.0, %v4199
        %v4201 = vpop.f32.mrb[0].mxu0
        %4202 = vmatprep.mubr.bf16.mxu0 0
        %4203 = vmatmul.mubr.bf16.gmra.mrb[0].mxu0 %v2950
        %v4204 = vpop.f32.mrb[0].mxu0
        %v4205 = vadd.f32 0.0, %v4204
        %v4206 = vpop.f32.mrb[0].mxu0
        %v4207 = vpop.f32.mrb[0].mxu0
        %v4208 = vadd.f32 0.0, %v4207
        %v4209 = vpop.f32.mrb[0].mxu0
        %4210 = vmatprep.mubr.bf16.mxu0 0
        %4211 = vmatmul.mubr.bf16.gmra.mrb[0].mxu0 %v3510
        %v4212 = vpop.f32.mrb[0].mxu0
        %v4213 = vadd.f32 0.0, %v4212
        %v4214 = vpop.f32.mrb[0].mxu0
        %v4215 = vpop.f32.mrb[0].mxu0
        %v4216 = vadd.f32 0.0, %v4215
        %v4217 = vpop.f32.mrb[0].mxu0
        %4218 = vmatprep.mubr.bf16.mxu0 0
        %4219 = vmatmul.mubr.bf16.gmra.mrb[0].mxu0 %v4063
        %v4220 = vpop.f32.mrb[0].mxu0
        %v4221 = vadd.f32 0.0, %v4220
        %v4222 = vpop.f32.mrb[0].mxu0
        %v4223 = vpop.f32.mrb[0].mxu0
        %v4224 = vadd.f32 0.0, %v4223
        %v4225 = vpop.f32.mrb[0].mxu0
        %4226 = vdwg.mxu0
        %v4227 = vadd.f32 %v4043, %v4165
        %v4228 = vadd.f32 %v4044, %v4168
        %v4229 = vadd.f32 %v4045, %v4173
        %v4230 = vadd.f32 %v4046, %v4176
        %v4231 = vadd.f32 %v4047, %v4181
        %v4232 = vadd.f32 %v4048, %v4184
        %v4233 = vadd.f32 %v4049, %v4189
        %v4234 = vadd.f32 %v4050, %v4192
        %v4235 = vadd.f32 %v4051, %v4197
        %v4236 = vadd.f32 %v4052, %v4200
        %v4237 = vadd.f32 %v4053, %v4205
        %v4238 = vadd.f32 %v4054, %v4208
        %v4239 = vadd.f32 %v4055, %v4213
        %v4240 = vadd.f32 %v4056, %v4216
        %v4241 = vadd.f32 %v4057, %v4221
        %v4242 = vadd.f32 %v4058, %v4224
        %v4243 = vld [vmem:[%s4] sm:$0x1]
        %v4245 = vlaneseq
        %v4246 = vshrl.u32 %v4245, 7
        %v4247 = vsub.s32 0, %v4246
        %v4248 = vrot.slane %v4243, %v4247
        %v4250 = vadd.f32 %v4227, %v4248
        %v4251 = vadd.f32 %v4228, %v4248
        %v4252 = vadd.f32 %v4229, %v4248
        %v4253 = vadd.f32 %v4230, %v4248
        %v4254 = vadd.f32 %v4231, %v4248
        %v4255 = vadd.f32 %v4232, %v4248
        %v4256 = vadd.f32 %v4233, %v4248
        %v4257 = vadd.f32 %v4234, %v4248
        %v4258 = vadd.f32 %v4235, %v4248
        %v4259 = vadd.f32 %v4236, %v4248
        %v4260 = vadd.f32 %v4237, %v4248
        %v4261 = vadd.f32 %v4238, %v4248
        %v4262 = vadd.f32 %v4239, %v4248
        %v4263 = vadd.f32 %v4240, %v4248
        %v4264 = vadd.f32 %v4241, %v4248
        %v4265 = vadd.f32 %v4242, %v4248
        %v4266 = vmax.f32 %v4250, 0.0
        %v4267 = vmax.f32 %v4251, 0.0
        %v4268 = vmax.f32 %v4252, 0.0
        %v4269 = vmax.f32 %v4253, 0.0
        %v4270 = vmax.f32 %v4254, 0.0
        %v4271 = vmax.f32 %v4255, 0.0
        %v4272 = vmax.f32 %v4256, 0.0
        %v4273 = vmax.f32 %v4257, 0.0
        %v4274 = vmax.f32 %v4258, 0.0
        %v4275 = vmax.f32 %v4259, 0.0
        %v4276 = vmax.f32 %v4260, 0.0
        %v4277 = vmax.f32 %v4261, 0.0
        %v4278 = vmax.f32 %v4262, 0.0
        %v4279 = vmax.f32 %v4263, 0.0
        %v4280 = vmax.f32 %v4264, 0.0
        %v4281 = vmax.f32 %v4265, 0.0
        %v4282 = vpack.c.bf16 %v4267, %v4266
        %v4283 = vpack.c.bf16 %v4269, %v4268
        %v4284 = vpack.c.bf16 %v4271, %v4270
        %v4285 = vpack.c.bf16 %v4273, %v4272
        %v4286 = vpack.c.bf16 %v4275, %v4274
        %v4287 = vpack.c.bf16 %v4277, %v4276
        %v4288 = vpack.c.bf16 %v4279, %v4278
        %v4289 = vpack.c.bf16 %v4281, %v4280
        %v4290 = vld [vmem:[%s5] sm:$0xf]
        %v4291 = vld [vmem:[%s5 + $0x4] sm:$0xf]
        %v4292 = vld [vmem:[%s5 + $0x8] sm:$0xf]
        %v4293 = vld [vmem:[%s5 + $0xc] sm:$0xf]
        %v4294 = vld [vmem:[%s5 + $0x10] sm:$0xf]
        %v4295 = vld [vmem:[%s5 + $0x14] sm:$0xf]
        %v4296 = vld [vmem:[%s5 + $0x18] sm:$0xf]
        %v4297 = vld [vmem:[%s5 + $0x1c] sm:$0xf]
        %v4298 = vld [vmem:[%s5 + $0x20] sm:$0xf]
        %v4299 = vld [vmem:[%s5 + $0x24] sm:$0xf]
        %v4300 = vld [vmem:[%s5 + $0x28] sm:$0xf]
        %v4301 = vld [vmem:[%s5 + $0x2c] sm:$0xf]
        %v4302 = vld [vmem:[%s5 + $0x30] sm:$0xf]
        %v4303 = vld [vmem:[%s5 + $0x34] sm:$0xf]
        %v4304 = vld [vmem:[%s5 + $0x38] sm:$0xf]
        %v4305 = vld [vmem:[%s5 + $0x3c] sm:$0xf]
        %vm4306 = vcmask 1046528
        %v4307 = vrot.slane %v310, 1
        %v4308 = vrot.slane %v311, 1
        %v4309 = vsel %vm4306, %v4307, %v4308
        %v4310 = vrot.slane %v312, 1
        %v4311 = vsel %vm4306, %v4308, %v4310
        %v4312 = vrot.slane %v313, 1
        %v4313 = vrot.slane %v314, 1
        %v4314 = vsel %vm4306, %v4312, %v4313
        %v4315 = vrot.slane %v315, 1
        %v4316 = vsel %vm4306, %v4313, %v4315
        %v4317 = vrot.slane %v316, 1
        %v4318 = vrot.slane %v317, 1
        %v4319 = vsel %vm4306, %v4317, %v4318
        %v4320 = vrot.slane %v318, 1
        %v4321 = vsel %vm4306, %v4318, %v4320
        %v4322 = vrot.slane %v319, 1
        %v4323 = vrot.slane %v320, 1
        %v4324 = vsel %vm4306, %v4322, %v4323
        %v4325 = vrot.slane %v321, 1
        %v4326 = vsel %vm4306, %v4323, %v4325
        %v4327 = vrot.slane %v322, 1
        %v4328 = vrot.slane %v323, 1
        %v4329 = vsel %vm4306, %v4327, %v4328
        %v4330 = vrot.slane %v324, 1
        %v4331 = vsel %vm4306, %v4328, %v4330
        %v4332 = vrot.slane %v325, 1
        %v4333 = vrot.slane %v326, 1
        %v4334 = vsel %vm4306, %v4332, %v4333
        %v4335 = vrot.slane %v327, 1
        %v4336 = vsel %vm4306, %v4333, %v4335
        %v4337 = vrot.slane %v328, 1
        %v4338 = vrot.slane %v329, 1
        %v4339 = vsel %vm4306, %v4337, %v4338
        %v4340 = vrot.slane %v330, 1
        %v4341 = vsel %vm4306, %v4338, %v4340
        %v4342 = vrot.slane %v331, 1
        %v4343 = vrot.slane %v332, 1
        %v4344 = vsel %vm4306, %v4342, %v4343
        %v4345 = vrot.slane %v333, 1
        %v4346 = vsel %vm4306, %v4343, %v4345
        %v4363 = vld [vmem:[%s6] sm:$0x1]
        %v4365 = vlaneseq
        %v4366 = vshrl.u32 %v4365, 7
        %v4367 = vsub.s32 0, %v4366
        %v4368 = vrot.slane %v4363, %v4367
        %v4386 = vunpack.c.l.b16 %v4290
        %v4387 = vunpack.c.l.b16 %v4291
        %v4388 = vunpack.c.l.b16 %v4292
        %v4389 = vunpack.c.l.b16 %v4293
        %v4390 = vunpack.c.l.b16 %v4294
        %v4391 = vunpack.c.l.b16 %v4295
        %v4392 = vunpack.c.l.b16 %v4296
        %v4393 = vunpack.c.l.b16 %v4297
        %v4394 = vunpack.c.l.b16 %v4298
        %v4395 = vunpack.c.l.b16 %v4299
        %v4396 = vunpack.c.l.b16 %v4300
        %v4397 = vunpack.c.l.b16 %v4301
        %v4398 = vunpack.c.l.b16 %v4302
        %v4399 = vunpack.c.l.b16 %v4303
        %v4400 = vunpack.c.l.b16 %v4304
        %v4401 = vunpack.c.l.b16 %v4305
        %v4402 = vpack.c.b16 %v4387, %v4386
        %v4403 = vpack.c.b16 %v4389, %v4388
        %v4404 = vpack.c.b16 %v4391, %v4390
        %v4405 = vpack.c.b16 %v4393, %v4392
        %v4406 = vpack.c.b16 %v4395, %v4394
        %v4407 = vpack.c.b16 %v4397, %v4396
        %v4408 = vpack.c.b16 %v4399, %v4398
        %v4409 = vpack.c.b16 %v4401, %v4400
        %4418 = vmatprep.subr.bf16.mxu0 0
        %4419 = vmatpush1.bf16.msra.mxu0 %v4402
        %4420 = vmatprep.subr.bf16.mxu0 0
        %4421 = vmatpush1.bf16.msra.mxu0 %v4403
        %4422 = vmatprep.subr.bf16.mxu0 0
        %4423 = vmatpush1.bf16.msra.mxu0 %v4404
        %4424 = vmatprep.subr.bf16.mxu0 0
        %4425 = vmatpush1.bf16.msra.mxu0 %v4405
        %4426 = vmatprep.subr.bf16.mxu0 0
        %4427 = vmatpush1.bf16.msra.mxu0 %v4406
        %4428 = vmatprep.subr.bf16.mxu0 0
        %4429 = vmatpush1.bf16.msra.mxu0 %v4407
        %4430 = vmatprep.subr.bf16.mxu0 0
        %4431 = vmatpush1.bf16.msra.mxu0 %v4408
        %4432 = vmatprep.subr.bf16.mxu0 0
        %4433 = vmatpush1.bf16.msra.mxu0 %v4409
        %4434 = vmatprep.subr.bf16.mxu0 0
        %4435 = vmatpush1.bf16.msra.mxu0 0
        %4436 = vmatprep.subr.bf16.mxu0 0
        %4437 = vmatpush1.bf16.msra.mxu0 0
        %4438 = vmatprep.subr.bf16.mxu0 0
        %4439 = vmatpush1.bf16.msra.mxu0 0
        %4440 = vmatprep.subr.bf16.mxu0 0
        %4441 = vmatpush1.bf16.msra.mxu0 0
        %4442 = vmatprep.subr.bf16.mxu0 0
        %4443 = vmatpush1.bf16.msra.mxu0 0
        %4444 = vmatprep.subr.bf16.mxu0 0
        %4445 = vmatpush1.bf16.msra.mxu0 0
        %4446 = vmatprep.subr.bf16.mxu0 0
        %4447 = vmatpush1.bf16.msra.mxu0 0
        %4448 = vmatprep.subr.bf16.mxu0 0
        %4449 = vmatpush1.bf16.msra.mxu0 0
        %4450 = vmatprep.mubr.bf16.mxu0 0
        %4451 = vmatmul.mubr.bf16.gmra.mrb[0].mxu0 %v4282
        %v4452 = vpop.f32.mrb[0].mxu0
        %v4453 = vadd.f32 %v4368, %v4452
        %v4454 = vpop.f32.mrb[0].mxu0
        %v4455 = vpop.f32.mrb[0].mxu0
        %v4456 = vadd.f32 %v4368, %v4455
        %v4457 = vpop.f32.mrb[0].mxu0
        %4458 = vmatprep.mubr.bf16.mxu0 0
        %4459 = vmatmul.mubr.bf16.gmra.mrb[0].mxu0 %v4283
        %v4460 = vpop.f32.mrb[0].mxu0
        %v4461 = vadd.f32 %v4368, %v4460
        %v4462 = vpop.f32.mrb[0].mxu0
        %v4463 = vpop.f32.mrb[0].mxu0
        %v4464 = vadd.f32 %v4368, %v4463
        %v4465 = vpop.f32.mrb[0].mxu0
        %4466 = vmatprep.mubr.bf16.mxu0 0
        %4467 = vmatmul.mubr.bf16.gmra.mrb[0].mxu0 %v4284
        %v4468 = vpop.f32.mrb[0].mxu0
        %v4469 = vadd.f32 %v4368, %v4468
        %v4470 = vpop.f32.mrb[0].mxu0
        %v4471 = vpop.f32.mrb[0].mxu0
        %v4472 = vadd.f32 %v4368, %v4471
        %v4473 = vpop.f32.mrb[0].mxu0
        %4474 = vmatprep.mubr.bf16.mxu0 0
        %4475 = vmatmul.mubr.bf16.gmra.mrb[0].mxu0 %v4285
        %v4476 = vpop.f32.mrb[0].mxu0
        %v4477 = vadd.f32 %v4368, %v4476
        %v4478 = vpop.f32.mrb[0].mxu0
        %v4479 = vpop.f32.mrb[0].mxu0
        %v4480 = vadd.f32 %v4368, %v4479
        %v4481 = vpop.f32.mrb[0].mxu0
        %4482 = vmatprep.mubr.bf16.mxu0 0
        %4483 = vmatmul.mubr.bf16.gmra.mrb[0].mxu0 %v4286
        %v4484 = vpop.f32.mrb[0].mxu0
        %v4485 = vadd.f32 %v4368, %v4484
        %v4486 = vpop.f32.mrb[0].mxu0
        %v4487 = vpop.f32.mrb[0].mxu0
        %v4488 = vadd.f32 %v4368, %v4487
        %v4489 = vpop.f32.mrb[0].mxu0
        %4490 = vmatprep.mubr.bf16.mxu0 0
        %4491 = vmatmul.mubr.bf16.gmra.mrb[0].mxu0 %v4287
        %v4492 = vpop.f32.mrb[0].mxu0
        %v4493 = vadd.f32 %v4368, %v4492
        %v4494 = vpop.f32.mrb[0].mxu0
        %v4495 = vpop.f32.mrb[0].mxu0
        %v4496 = vadd.f32 %v4368, %v4495
        %v4497 = vpop.f32.mrb[0].mxu0
        %4498 = vmatprep.mubr.bf16.mxu0 0
        %4499 = vmatmul.mubr.bf16.gmra.mrb[0].mxu0 %v4288
        %v4500 = vpop.f32.mrb[0].mxu0
        %v4501 = vadd.f32 %v4368, %v4500
        %v4502 = vpop.f32.mrb[0].mxu0
        %v4503 = vpop.f32.mrb[0].mxu0
        %v4504 = vadd.f32 %v4368, %v4503
        %v4505 = vpop.f32.mrb[0].mxu0
        %4506 = vmatprep.mubr.bf16.mxu0 0
        %4507 = vmatmul.mubr.bf16.gmra.mrb[0].mxu0 %v4289
        %v4508 = vpop.f32.mrb[0].mxu0
        %v4509 = vadd.f32 %v4368, %v4508
        %v4510 = vpop.f32.mrb[0].mxu0
        %v4511 = vpop.f32.mrb[0].mxu0
        %v4512 = vadd.f32 %v4368, %v4511
        %v4513 = vpop.f32.mrb[0].mxu0
        %4514 = vdwg.mxu0
        %v4515 = vadd.f32 %v4453, %v4309
        %v4516 = vadd.f32 %v4456, %v4311
        %v4517 = vadd.f32 %v4461, %v4314
        %v4518 = vadd.f32 %v4464, %v4316
        %v4519 = vadd.f32 %v4469, %v4319
        %v4520 = vadd.f32 %v4472, %v4321
        %v4521 = vadd.f32 %v4477, %v4324
        %v4522 = vadd.f32 %v4480, %v4326
        %v4523 = vadd.f32 %v4485, %v4329
        %v4524 = vadd.f32 %v4488, %v4331
        %v4525 = vadd.f32 %v4493, %v4334
        %v4526 = vadd.f32 %v4496, %v4336
        %v4527 = vadd.f32 %v4501, %v4339
        %v4528 = vadd.f32 %v4504, %v4341
        %v4529 = vadd.f32 %v4509, %v4344
        %v4530 = vadd.f32 %v4512, %v4346
        %v4531 = vmax.f32 %v4515, 0.0
        %v4532 = vmax.f32 %v4516, 0.0
        %v4533 = vmax.f32 %v4517, 0.0
        %v4534 = vmax.f32 %v4518, 0.0
        %v4535 = vmax.f32 %v4519, 0.0
        %v4536 = vmax.f32 %v4520, 0.0
        %v4537 = vmax.f32 %v4521, 0.0
        %v4538 = vmax.f32 %v4522, 0.0
        %v4539 = vmax.f32 %v4523, 0.0
        %v4540 = vmax.f32 %v4524, 0.0
        %v4541 = vmax.f32 %v4525, 0.0
        %v4542 = vmax.f32 %v4526, 0.0
        %v4543 = vmax.f32 %v4527, 0.0
        %v4544 = vmax.f32 %v4528, 0.0
        %v4545 = vmax.f32 %v4529, 0.0
        %v4546 = vmax.f32 %v4530, 0.0
        %4547 = vst [vmem:[%s295] sm:$0xff] %v4531
        %4548 = vst [vmem:[%s295 + $0x8] sm:$0xff] %v4532
        %4549 = vst [vmem:[%s295 + $0x10] sm:$0xff] %v4533
        %4550 = vst [vmem:[%s295 + $0x18] sm:$0xff] %v4534
        %4551 = vst [vmem:[%s295 + $0x20] sm:$0xff] %v4535
        %4552 = vst [vmem:[%s295 + $0x28] sm:$0xff] %v4536
        %4553 = vst [vmem:[%s295 + $0x30] sm:$0xff] %v4537
        %4554 = vst [vmem:[%s295 + $0x38] sm:$0xff] %v4538
        %4555 = vst [vmem:[%s295 + $0x40] sm:$0xff] %v4539
        %4556 = vst [vmem:[%s295 + $0x48] sm:$0xff] %v4540
        %4557 = vst [vmem:[%s295 + $0x50] sm:$0xff] %v4541
        %4558 = vst [vmem:[%s295 + $0x58] sm:$0xff] %v4542
        %4559 = vst [vmem:[%s295 + $0x60] sm:$0xff] %v4543
        %4560 = vst [vmem:[%s295 + $0x68] sm:$0xff] %v4544
        %4561 = vst [vmem:[%s295 + $0x70] sm:$0xff] %v4545
        %4562 = vst [vmem:[%s295 + $0x78] sm:$0xff] %v4546
        %s4563 = sand.u32 %s197, 1
        %s4564 = scalar_lea.sflag [#allocation3], %s4563
        %s4565 = sand.u32 %s197, 1
        %s4566 = smul.addr %s4565, 128
        %s4567 = scalar_lea.vmem [#allocation2], %s4566
        // Predicated region
        $region49: #{tpu_custom_call.1} parent=47 // pred_check
          %p4568 = pneg %p207
        $region50: #{tpu_custom_call.1} parent=47 // pred_check_branch
          %4570 = sbr.rel (%p4568) target = $region52
        $region51: #{tpu_custom_call.1} parent=47 // pred_region
          %s4571 = smul.u32 8, %s26
          %s4573 = ssub.s32 2048, 2048
          %4574 = vsyncadd %s4564, %s4573
          %s4575 = smul.addr %s4571, 2
          %s4576 = smul.addr %s25, 32
          %s4577 = sadd.s32 %s4575, %s4576
          %s4578 = smul.addr %s4577, 128
          %s4579 = scalar_lea.hbm %s7, %s4578
          %s4580 = sshll.u32 %s4567, 4
          %s4581 = int_to_ptr.vmem [resolvable:$true] %s4580
          %4586 = dma.vmem_to_hbm [thread:$0]  %s4581, 2048, %s4579, %s4564, 128, 128, 8
        $region52: #{tpu_custom_call.1} parent=47 // pred_fallthru
          _
      $region48: #{tpu_custom_call.1} parent=5 // pred_fallthru
        _
      %p4587 = scmp.le.s32.totalorder 2, %s16
      // Predicated region
      $region53: #{tpu_custom_call.1} parent=5 // pred_check
        %p4588 = pneg %p4587
      $region54: #{tpu_custom_call.1} parent=5 // pred_check_branch
        %4590 = sbr.rel (%p4588) target = $region56
      $region55: #{tpu_custom_call.1} parent=5 // pred_region
        %s4591 = ssub.s32 %s16, 2
        // Predicated region
        $region57: #{tpu_custom_call.1} parent=55 // pred_check
          %p4592 = pneg %p213
        $region58: #{tpu_custom_call.1} parent=55 // pred_check_branch
          %4594 = sbr.rel (%p4592) target = $region60
        $region59: #{tpu_custom_call.1} parent=55 // pred_region
          %s4595 = sand.u32 %s198, 1
          %s4596 = scalar_lea.sflag [#allocation3], %s4595
          %s4597 = sand.u32 %s198, 1
          %s4598 = smul.addr %s4597, 128
          %s4599 = scalar_lea.vmem [#allocation2], %s4598
          %4600 = dma.done %s4596, 2048
        $region60: #{tpu_custom_call.1} parent=55 // pred_fallthru
          _
      $region56: #{tpu_custom_call.1} parent=5 // pred_fallthru
        _
    $region6: #{tpu_custom_call.1} parent=1 // loop_footer
      %s20 = sadd.s32 1, %s16
    $region7: #{tpu_custom_call.1} parent=1 // loop_footer_branch
      %15 = sbr.rel target = $region3
    $region8: #{tpu_custom_call.1} parent=1 // loop_exit
      _
    %4601 = vsyncpa [#allocation3], 1
    %s4602 = scalar_lea.sflag [#allocation3], 1
    %4603 = vsyncpa %s4602, 1

</llo_original>
